<compile_context>
chip_gen: v6e
topology: v6e:2x2x1
jax: 0.10.0
libtpu: 0.0.40
codegen_flags: <defaults>
</compile_context>

<pallas_src>
import numpy as np
import jax
import jax.numpy as jnp
from jax.experimental import pallas as pl
from jax.experimental.pallas import tpu as pltpu

HID_PAD = 1024   # feature-MLP hidden width 1000 padded to a lane-dense 1024
FEAT_PAD = 256   # feature width 200 padded to a lane-dense 256
OUT_PAD = 128    # head width 10 padded to a lane-dense 128


def _leaky(x, slope=0.2):
    # LeakyReLU(0.2): max(x, 0.2*x) is exact for 0 < slope < 1.
    return jnp.maximum(x, slope * x)


def _round_up(v, m):
    return ((v + m - 1) // m) * m


def make_kernel(E, A, bounds):
    bf16 = jnp.bfloat16
    f32 = jnp.float32

    def kernel(x_ref, lab_ref,
               w1_ref, b1_ref, w2_ref, b2_ref, w3_ref, b3_ref,
               wl_ref, bl_ref,
               wf1p_ref, wf1l_ref, bf1_ref,
               wf2_ref, bf2_ref, wo_ref, bo_ref,
               feat_ref, out_ref):
        tb = x_ref.shape[0] // A                       # batches in this block (multiple of 8)

        # ---- conv stack == three per-atom linears (bf16 operands, f32 MXU accumulation) ----
        # layers 1-2: bias-add + leaky in bf16 (next matmul consumes bf16 anyway -> fewer vregs)
        h = jnp.dot(x_ref[...].astype(bf16), w1_ref[...], preferred_element_type=f32)
        h = _leaky(h.astype(bf16) + b1_ref[...])                                 # (TB*A, C) bf16
        h = jnp.dot(h, w2_ref[...], preferred_element_type=f32)
        h = _leaky(h.astype(bf16) + b2_ref[...])                                 # (TB*A, C) bf16
        h = jnp.dot(h, w3_ref[...], preferred_element_type=f32)
        h = _leaky(h + b3_ref[...])                                              # (TB*A, 256) f32

        # ---- per-element AvgPool over atoms: static sublane slices + sums (VPU/XLU, not MXU) ----
        # (the 1/n_atoms divide is folded into wf1_pool in prepare_params)
        h3 = h.reshape(tb, A, 256)
        pooled = [jnp.sum(h3[:, bounds[e]:bounds[e + 1], :], axis=1) for e in range(E)]
        pooled_all = jnp.concatenate(pooled, axis=-1).astype(bf16)               # (TB, E*256)

        # ---- label projection (tiny, stays f32) ----
        lab = _leaky(jnp.dot(lab_ref[...], wl_ref[...], preferred_element_type=f32)
                     + bl_ref[...])                                              # (TB, label_dim)

        # ---- feature MLP: one fused K=E*256 matmul + small label branch (hidden padded to 1024) ----
        # torch's "c*E+e" flatten is absorbed into wf1_pool's row layout; no lane concat with label.
        f = jnp.dot(pooled_all, wf1p_ref[...], preferred_element_type=f32)       # (TB, HID_PAD)
        f = f + jnp.dot(lab.astype(bf16), wf1l_ref[...], preferred_element_type=f32)
        f = _leaky(f + bf1_ref[...])
        f = _leaky(jnp.dot(f.astype(bf16), wf2_ref[...], preferred_element_type=f32)
                   + bf2_ref[...])                                               # (TB, FEAT_PAD)

        feat_ref[...] = f
        out_ref[...] = jnp.dot(f.astype(bf16), wo_ref[...],
                               preferred_element_type=f32) + bo_ref[...]         # (TB, OUT_PAD)

    return kernel


def prepare_params(params, n_atoms_elements):
    """One-time layout / dtype preparation of the torch-style parameters."""
    E = len(n_atoms_elements)
    f32, bf16 = jnp.float32, jnp.bfloat16

    wf1 = params["wf1"]                                 # (256*E + label_dim, 1000)
    n_hid = int(wf1.shape[1])                           # 1000
    # torch flatten is output_all[b, c*E + e]; the kernel's pooled_all column is e*256 + c,
    # so regroup wf1's pooled rows to that layout and fold the AvgPool 1/n_atoms divide in.
    wf1_pool = wf1[:256 * E].reshape(256, E, n_hid).transpose(1, 0, 2).reshape(E * 256, n_hid)
    n_per = jnp.repeat(jnp.asarray(list(n_atoms_elements), f32), 256).reshape(E * 256, 1)
    wf1_pool = wf1_pool / n_per
    wf1_lab = wf1[256 * E:]                             # (label_dim, 1000)

    # Lane-dense padding: hidden 1000 -> HID_PAD, feature 200 -> FEAT_PAD, head 10 -> OUT_PAD.
    # Padded hidden columns stay exactly zero (zero weights + zero bias, leaky(0)=0), so the
    # zero-padded wf2 rows contribute nothing.
    wf1_pool_p = jnp.zeros((E * 256, HID_PAD), f32).at[:, :n_hid].set(wf1_pool)
    wf1_lab_p = jnp.zeros((wf1_lab.shape[0], HID_PAD), f32).at[:, :n_hid].set(wf1_lab)
    bf1_p = jnp.zeros((1, HID_PAD), f32).at[:, :n_hid].set(params["bf1"])

    feat_dim = int(params["wf2"].shape[1])
    out_dim = int(params["wo"].shape[1])
    wf2_p = jnp.zeros((HID_PAD, FEAT_PAD), f32).at[:n_hid, :feat_dim].set(params["wf2"])
    bf2_p = jnp.zeros((1, FEAT_PAD), f32).at[:, :feat_dim].set(params["bf2"])
    wo_p = jnp.zeros((FEAT_PAD, OUT_PAD), f32).at[:feat_dim, :out_dim].set(params["wo"])
    bo_p = jnp.zeros((1, OUT_PAD), f32).at[:, :out_dim].set(params["bo"])

    return {
        "w1": params["w1"].astype(bf16), "b1": params["b1"].astype(bf16),
        "w2": params["w2"].astype(bf16), "b2": params["b2"].astype(bf16),
        "w3": params["w3"].astype(bf16), "b3": params["b3"].astype(f32),
        "wl": params["wl"].astype(f32),  "bl": params["bl"].astype(f32),
        "wf1_pool": wf1_pool_p.astype(bf16), "wf1_lab": wf1_lab_p.astype(bf16),
        "bf1": bf1_p,
        "wf2": wf2_p.astype(bf16), "bf2": bf2_p,
        "wo": wo_p.astype(bf16), "bo": bo_p,
        "feat_dim": feat_dim, "out_dim": out_dim,
    }


def distance_discriminator(x, labels, prep, n_atoms_elements, batch_block=256):
    """x: (B, 1, A, N) NCHW float32; labels: (B, n_label_features) float32."""
    B, _, A, N = x.shape
    E = len(n_atoms_elements)
    assert sum(n_atoms_elements) == A
    L = labels.shape[1]
    bounds = tuple(int(v) for v in np.cumsum((0,) + tuple(n_atoms_elements)))

    # ---- batch tiling: multiple of 8 sublanes; force grid >= 2 so both v7x TCs get work ----
    tb = min(batch_block, max(8, _round_up(pl.cdiv(B, 2), 8)))
    Bp = max(_round_up(B, tb), 2 * tb)
    grid = (Bp // tb,)

    x_rows = x[:, 0, :, :].reshape(B * A, N)           # wrapper-side flatten (layout plumbing)
    labels_p = labels
    if Bp != B:
        x_rows = jnp.pad(x_rows, ((0, (Bp - B) * A), (0, 0)))
        labels_p = jnp.pad(labels, ((0, Bp - B), (0, 0)))

    weights = (prep["w1"], prep["b1"], prep["w2"], prep["b2"], prep["w3"], prep["b3"],
               prep["wl"], prep["bl"],
               prep["wf1_pool"], prep["wf1_lab"], prep["bf1"],
               prep["wf2"], prep["bf2"], prep["wo"], prep["bo"])

    def _resident(w):
        # whole-array block with a constant block index -> weight stays resident in VMEM
        return pl.BlockSpec(w.shape, lambda i, nd=w.ndim: (0,) * nd)

    in_specs = [pl.BlockSpec((tb * A, N), lambda i: (i, 0)),
                pl.BlockSpec((tb, L), lambda i: (i, 0))]
    in_specs += [_resident(w) for w in weights]

    # Explicit VMEM budget: resident weights (pipeline double-buffers them) + streamed
    # activation tiles + in-kernel f32/bf16 slabs.  Never below the 32 MiB default scope,
    # capped well under v7x's 64 MiB physical VMEM.
    C = int(prep["w2"].shape[0])
    weight_bytes = sum(int(w.size) * w.dtype.itemsize for w in weights)
    stream_bytes = 4 * (tb * A * N + tb * L + tb * FEAT_PAD + tb * OUT_PAD)
    slab_bytes = 6 * tb * A * max(C, 256) + 6 * tb * (HID_PAD + E * 256)
    vmem_limit = int(min(max(2 * weight_bytes + 2 * stream_bytes + slab_bytes + (4 << 20),
                             32 << 20), 48 << 20))

    feat_p, out_p = pl.pallas_call(
        make_kernel(E, A, bounds),
        grid=grid,
        in_specs=in_specs,
        out_specs=(pl.BlockSpec((tb, FEAT_PAD), lambda i: (i, 0)),
                   pl.BlockSpec((tb, OUT_PAD), lambda i: (i, 0))),
        out_shape=(jax.ShapeDtypeStruct((Bp, FEAT_PAD), jnp.float32),
                   jax.ShapeDtypeStruct((Bp, OUT_PAD), jnp.float32)),
        compiler_params=pltpu.CompilerParams(
            dimension_semantics=("parallel",),
            vmem_limit_bytes=vmem_limit),
    )(x_rows, labels_p, *weights)

    return feat_p[:B, :prep["feat_dim"]], out_p[:B, :prep["out_dim"]]


def init_params(key, N, C, n_label_features, label_dim, E):
    """Deterministic synthetic torch-layout parameters (shapes follow the module's __init__)."""
    ks = jax.random.split(key, 16)
    s = 0.1

    def w(k, shape):
        return (s * jax.random.normal(k, shape)).astype(jnp.float32)

    feat_in = 256 * E + label_dim
    return {
        "w1": w(ks[0], (N, C)),            "b1": w(ks[1], (1, C)),
        "w2": w(ks[2], (C, C)),            "b2": w(ks[3], (1, C)),
        "w3": w(ks[4], (C, 256)),          "b3": w(ks[5], (1, 256)),
        "wl": w(ks[6], (n_label_features, label_dim)), "bl": w(ks[7], (1, label_dim)),
        "wf1": w(ks[8], (feat_in, 1000)),  "bf1": w(ks[9], (1, 1000)),
        "wf2": w(ks[10], (1000, 200)),     "bf2": w(ks[11], (1, 200)),
        "wo": w(ks[12], (200, 10)),        "bo": w(ks[13], (1, 10)),
    }


def reference_forward(x, labels, params, n_atoms_elements):
    """Pure-JAX f32 mirror of the PyTorch forward (uses the raw torch-layout params)."""
    B, _, A, N = x.shape
    E = len(n_atoms_elements)
    h = x[:, 0, :, :].reshape(B * A, N)
    h = _leaky(h @ params["w1"] + params["b1"])
    h = _leaky(h @ params["w2"] + params["b2"])
    h = _leaky(h @ params["w3"] + params["b3"])
    h = h.reshape(B, A, 256)
    pooled, start = [], 0
    for i in range(E):
        stop = start + n_atoms_elements[i]
        pooled.append(jnp.mean(h[:, start:stop, :], axis=1))
        start = stop
    output_all = jnp.stack(pooled, axis=-1).reshape(B, 256 * E)     # torch "c*E+e" flatten
    lab = _leaky(labels @ params["wl"] + params["bl"])
    combined = jnp.concatenate([output_all, lab], axis=1)
    f = _leaky(combined @ params["wf1"] + params["bf1"])
    f = _leaky(f @ params["wf2"] + params["bf2"])
    return f, f @ params["wo"] + params["bo"]


if __name__ == "__main__":
    # Small synthetic configuration consistent with the module:
    #   n_atoms_elements = (3, 5) -> n_elements=2, A=8 atoms; n_neighbors=8
    #   disc_channels = 128 (default 512, shrunk for a small test)
    #   n_label_features = 6, label_dim = 16, batch = 2
    n_atoms_elements = (3, 5)
    A = sum(n_atoms_elements)
    N = 8
    C = 128
    n_label_features = 6
    label_dim = 16
    B = 2

    key = jax.random.PRNGKey(0)
    kx, kl, kp = jax.random.split(key, 3)
    x = jax.random.normal(kx, (B, 1, A, N), dtype=jnp.float32)       # NCHW
    labels = jax.random.normal(kl, (B, n_label_features), dtype=jnp.float32)
    params = init_params(kp, N, C, n_label_features, label_dim, len(n_atoms_elements))
    prep = prepare_params(params, n_atoms_elements)

    feat, out = distance_discriminator(x, labels, prep, n_atoms_elements)
    feat = jax.block_until_ready(feat)
    out = jax.block_until_ready(out)

    # sanity check against the pure-JAX f32 reference (kernel uses bf16 operands / f32 accumulation)
    feat_ref, out_ref = reference_forward(x, labels, params, n_atoms_elements)
    assert feat.shape == (B, 200) and out.shape == (B, 10)
    assert jnp.allclose(feat, feat_ref, rtol=5e-2, atol=5e-2)
    assert jnp.allclose(out, out_ref, rtol=5e-2, atol=5e-2)

    print("KERNEL_OK")
</pallas_src>

<mosaic_0001>
module attributes {stable_mosaic.version = 11 : i64} {
  func.func @kernel(%arg0: i32, %arg1: memref<64x8xf32, #tpu.memory_space<vmem>>, %arg2: memref<8x6xf32, #tpu.memory_space<vmem>>, %arg3: memref<8x128xbf16, #tpu.memory_space<vmem>>, %arg4: memref<1x128xbf16, #tpu.memory_space<vmem>>, %arg5: memref<128x128xbf16, #tpu.memory_space<vmem>>, %arg6: memref<1x128xbf16, #tpu.memory_space<vmem>>, %arg7: memref<128x256xbf16, #tpu.memory_space<vmem>>, %arg8: memref<1x256xf32, #tpu.memory_space<vmem>>, %arg9: memref<6x16xf32, #tpu.memory_space<vmem>>, %arg10: memref<1x16xf32, #tpu.memory_space<vmem>>, %arg11: memref<512x1024xbf16, #tpu.memory_space<vmem>>, %arg12: memref<16x1024xbf16, #tpu.memory_space<vmem>>, %arg13: memref<1x1024xf32, #tpu.memory_space<vmem>>, %arg14: memref<1024x256xbf16, #tpu.memory_space<vmem>>, %arg15: memref<1x256xf32, #tpu.memory_space<vmem>>, %arg16: memref<256x128xbf16, #tpu.memory_space<vmem>>, %arg17: memref<1x128xf32, #tpu.memory_space<vmem>>, %arg18: memref<8x256xf32, #tpu.memory_space<vmem>>, %arg19: memref<8x128xf32, #tpu.memory_space<vmem>>) attributes {dimension_semantics = [#tpu.dimension_semantics<parallel>], iteration_bounds = array<i64: 2>, scalar_prefetch = 0 : i64, scratch_operands = 0 : i64, tpu.core_type = #tpu.core_type<tc>, window_params = [{transform_indices = @transform_0, window_bounds = array<i64: 64, 8>}, {transform_indices = @transform_1, window_bounds = array<i64: 8, 6>}, {pipeline_mode = #tpu.pipeline_mode<synchronous>, transform_indices = @transform_2, window_bounds = array<i64: 8, 128>}, {pipeline_mode = #tpu.pipeline_mode<synchronous>, transform_indices = @transform_3, window_bounds = array<i64: 1, 128>}, {pipeline_mode = #tpu.pipeline_mode<synchronous>, transform_indices = @transform_4, window_bounds = array<i64: 128, 128>}, {pipeline_mode = #tpu.pipeline_mode<synchronous>, transform_indices = @transform_5, window_bounds = array<i64: 1, 128>}, {pipeline_mode = #tpu.pipeline_mode<synchronous>, transform_indices = @transform_6, window_bounds = array<i64: 128, 256>}, {pipeline_mode = #tpu.pipeline_mode<synchronous>, transform_indices = @transform_7, window_bounds = array<i64: 1, 256>}, {pipeline_mode = #tpu.pipeline_mode<synchronous>, transform_indices = @transform_8, window_bounds = array<i64: 6, 16>}, {pipeline_mode = #tpu.pipeline_mode<synchronous>, transform_indices = @transform_9, window_bounds = array<i64: 1, 16>}, {pipeline_mode = #tpu.pipeline_mode<synchronous>, transform_indices = @transform_10, window_bounds = array<i64: 512, 1024>}, {pipeline_mode = #tpu.pipeline_mode<synchronous>, transform_indices = @transform_11, window_bounds = array<i64: 16, 1024>}, {pipeline_mode = #tpu.pipeline_mode<synchronous>, transform_indices = @transform_12, window_bounds = array<i64: 1, 1024>}, {pipeline_mode = #tpu.pipeline_mode<synchronous>, transform_indices = @transform_13, window_bounds = array<i64: 1024, 256>}, {pipeline_mode = #tpu.pipeline_mode<synchronous>, transform_indices = @transform_14, window_bounds = array<i64: 1, 256>}, {pipeline_mode = #tpu.pipeline_mode<synchronous>, transform_indices = @transform_15, window_bounds = array<i64: 256, 128>}, {pipeline_mode = #tpu.pipeline_mode<synchronous>, transform_indices = @transform_16, window_bounds = array<i64: 1, 128>}, {transform_indices = @transform_17, window_bounds = array<i64: 8, 256>}, {transform_indices = @transform_18, window_bounds = array<i64: 8, 128>}]} {
    %c0 = arith.constant 0 : index
    %c0_0 = arith.constant 0 : index
    %0 = vector.load %arg1[%c0, %c0_0] : memref<64x8xf32, #tpu.memory_space<vmem>>, vector<64x8xf32>
    %1 = arith.truncf %0 : vector<64x8xf32> to vector<64x8xbf16>
    %c0_1 = arith.constant 0 : index
    %c0_2 = arith.constant 0 : index
    %2 = vector.load %arg3[%c0_1, %c0_2] : memref<8x128xbf16, #tpu.memory_space<vmem>>, vector<8x128xbf16>
    %cst = arith.constant dense<0.000000e+00> : vector<64x128xf32>
    %3 = tpu.matmul %1, %2, %cst {dimension_numbers = #tpu.dot_dimension_numbers<[1], [0], [0], [1], [0, 0, 1, 1], [], []>} : vector<64x8xbf16>, vector<8x128xbf16>, vector<64x128xf32> -> vector<64x128xf32>
    %4 = arith.truncf %3 : vector<64x128xf32> to vector<64x128xbf16>
    %c0_3 = arith.constant 0 : index
    %c0_4 = arith.constant 0 : index
    %5 = vector.load %arg4[%c0_3, %c0_4] : memref<1x128xbf16, #tpu.memory_space<vmem>>, vector<1x128xbf16>
    %6 = vector.broadcast %5 : vector<1x128xbf16> to vector<64x128xbf16>
    %7 = arith.addf %4, %6 : vector<64x128xbf16>
    %cst_5 = arith.constant 2.001950e-01 : bf16
    %8 = vector.broadcast %cst_5 : bf16 to vector<64x128xbf16>
    %9 = arith.mulf %8, %7 : vector<64x128xbf16>
    %10 = arith.maximumf %7, %9 : vector<64x128xbf16>
    %c0_6 = arith.constant 0 : index
    %c0_7 = arith.constant 0 : index
    %11 = vector.load %arg5[%c0_6, %c0_7] : memref<128x128xbf16, #tpu.memory_space<vmem>>, vector<128x128xbf16>
    %cst_8 = arith.constant dense<0.000000e+00> : vector<64x128xf32>
    %12 = tpu.matmul %10, %11, %cst_8 {dimension_numbers = #tpu.dot_dimension_numbers<[1], [0], [0], [1], [0, 0, 1, 1], [], []>} : vector<64x128xbf16>, vector<128x128xbf16>, vector<64x128xf32> -> vector<64x128xf32>
    %13 = arith.truncf %12 : vector<64x128xf32> to vector<64x128xbf16>
    %c0_9 = arith.constant 0 : index
    %c0_10 = arith.constant 0 : index
    %14 = vector.load %arg6[%c0_9, %c0_10] : memref<1x128xbf16, #tpu.memory_space<vmem>>, vector<1x128xbf16>
    %15 = vector.broadcast %14 : vector<1x128xbf16> to vector<64x128xbf16>
    %16 = arith.addf %13, %15 : vector<64x128xbf16>
    %cst_11 = arith.constant 2.001950e-01 : bf16
    %17 = vector.broadcast %cst_11 : bf16 to vector<64x128xbf16>
    %18 = arith.mulf %17, %16 : vector<64x128xbf16>
    %19 = arith.maximumf %16, %18 : vector<64x128xbf16>
    %c0_12 = arith.constant 0 : index
    %c0_13 = arith.constant 0 : index
    %20 = vector.load %arg7[%c0_12, %c0_13] : memref<128x256xbf16, #tpu.memory_space<vmem>>, vector<128x256xbf16>
    %cst_14 = arith.constant dense<0.000000e+00> : vector<64x256xf32>
    %21 = tpu.matmul %19, %20, %cst_14 {dimension_numbers = #tpu.dot_dimension_numbers<[1], [0], [0], [1], [0, 0, 1, 1], [], []>} : vector<64x128xbf16>, vector<128x256xbf16>, vector<64x256xf32> -> vector<64x256xf32>
    %c0_15 = arith.constant 0 : index
    %c0_16 = arith.constant 0 : index
    %22 = vector.load %arg8[%c0_15, %c0_16] : memref<1x256xf32, #tpu.memory_space<vmem>>, vector<1x256xf32>
    %23 = vector.broadcast %22 : vector<1x256xf32> to vector<64x256xf32>
    %24 = arith.addf %21, %23 : vector<64x256xf32>
    %cst_17 = arith.constant 2.000000e-01 : f32
    %25 = vector.broadcast %cst_17 : f32 to vector<64x256xf32>
    %26 = arith.mulf %25, %24 : vector<64x256xf32>
    %27 = arith.maximumf %24, %26 : vector<64x256xf32>
    %28 = vector.shape_cast %27 : vector<64x256xf32> to vector<8x8x256xf32>
    %29 = vector.extract_strided_slice %28 {offsets = [0, 0, 0], sizes = [8, 3, 256], strides = [1, 1, 1]} : vector<8x8x256xf32> to vector<8x3x256xf32>
    %cst_18 = arith.constant dense<0.000000e+00> : vector<8x256xf32>
    %30 = vector.multi_reduction <add>, %29, %cst_18 [1] : vector<8x3x256xf32> to vector<8x256xf32>
    %31 = vector.extract_strided_slice %28 {offsets = [0, 3, 0], sizes = [8, 5, 256], strides = [1, 1, 1]} : vector<8x8x256xf32> to vector<8x5x256xf32>
    %cst_19 = arith.constant dense<0.000000e+00> : vector<8x256xf32>
    %32 = vector.multi_reduction <add>, %31, %cst_19 [1] : vector<8x5x256xf32> to vector<8x256xf32>
    %33 = tpu.concatenate %30, %32 in 1 : vector<8x256xf32>, vector<8x256xf32> -> vector<8x512xf32>
    %34 = arith.truncf %33 : vector<8x512xf32> to vector<8x512xbf16>
    %c0_20 = arith.constant 0 : index
    %c0_21 = arith.constant 0 : index
    %35 = vector.load %arg2[%c0_20, %c0_21] : memref<8x6xf32, #tpu.memory_space<vmem>>, vector<8x6xf32>
    %c0_22 = arith.constant 0 : index
    %c0_23 = arith.constant 0 : index
    %36 = vector.load %arg9[%c0_22, %c0_23] : memref<6x16xf32, #tpu.memory_space<vmem>>, vector<6x16xf32>
    %cst_24 = arith.constant dense<0.000000e+00> : vector<8x16xf32>
    %37 = tpu.matmul %35, %36, %cst_24 {dimension_numbers = #tpu.dot_dimension_numbers<[1], [0], [0], [1], [0, 0, 1, 1], [], []>} : vector<8x6xf32>, vector<6x16xf32>, vector<8x16xf32> -> vector<8x16xf32>
    %c0_25 = arith.constant 0 : index
    %c0_26 = arith.constant 0 : index
    %38 = vector.load %arg10[%c0_25, %c0_26] : memref<1x16xf32, #tpu.memory_space<vmem>>, vector<1x16xf32>
    %39 = vector.broadcast %38 : vector<1x16xf32> to vector<8x16xf32>
    %40 = arith.addf %37, %39 : vector<8x16xf32>
    %cst_27 = arith.constant 2.000000e-01 : f32
    %41 = vector.broadcast %cst_27 : f32 to vector<8x16xf32>
    %42 = arith.mulf %41, %40 : vector<8x16xf32>
    %43 = arith.maximumf %40, %42 : vector<8x16xf32>
    %c0_28 = arith.constant 0 : index
    %c0_29 = arith.constant 0 : index
    %44 = vector.load %arg11[%c0_28, %c0_29] : memref<512x1024xbf16, #tpu.memory_space<vmem>>, vector<512x1024xbf16>
    %cst_30 = arith.constant dense<0.000000e+00> : vector<8x1024xf32>
    %45 = tpu.matmul %34, %44, %cst_30 {dimension_numbers = #tpu.dot_dimension_numbers<[1], [0], [0], [1], [0, 0, 1, 1], [], []>} : vector<8x512xbf16>, vector<512x1024xbf16>, vector<8x1024xf32> -> vector<8x1024xf32>
    %46 = arith.truncf %43 : vector<8x16xf32> to vector<8x16xbf16>
    %c0_31 = arith.constant 0 : index
    %c0_32 = arith.constant 0 : index
    %47 = vector.load %arg12[%c0_31, %c0_32] : memref<16x1024xbf16, #tpu.memory_space<vmem>>, vector<16x1024xbf16>
    %cst_33 = arith.constant dense<0.000000e+00> : vector<8x1024xf32>
    %48 = tpu.matmul %46, %47, %cst_33 {dimension_numbers = #tpu.dot_dimension_numbers<[1], [0], [0], [1], [0, 0, 1, 1], [], []>} : vector<8x16xbf16>, vector<16x1024xbf16>, vector<8x1024xf32> -> vector<8x1024xf32>
    %49 = arith.addf %45, %48 : vector<8x1024xf32>
    %c0_34 = arith.constant 0 : index
    %c0_35 = arith.constant 0 : index
    %50 = vector.load %arg13[%c0_34, %c0_35] : memref<1x1024xf32, #tpu.memory_space<vmem>>, vector<1x1024xf32>
    %51 = vector.broadcast %50 : vector<1x1024xf32> to vector<8x1024xf32>
    %52 = arith.addf %49, %51 : vector<8x1024xf32>
    %cst_36 = arith.constant 2.000000e-01 : f32
    %53 = vector.broadcast %cst_36 : f32 to vector<8x1024xf32>
    %54 = arith.mulf %53, %52 : vector<8x1024xf32>
    %55 = arith.maximumf %52, %54 : vector<8x1024xf32>
    %56 = arith.truncf %55 : vector<8x1024xf32> to vector<8x1024xbf16>
    %c0_37 = arith.constant 0 : index
    %c0_38 = arith.constant 0 : index
    %57 = vector.load %arg14[%c0_37, %c0_38] : memref<1024x256xbf16, #tpu.memory_space<vmem>>, vector<1024x256xbf16>
    %cst_39 = arith.constant dense<0.000000e+00> : vector<8x256xf32>
    %58 = tpu.matmul %56, %57, %cst_39 {dimension_numbers = #tpu.dot_dimension_numbers<[1], [0], [0], [1], [0, 0, 1, 1], [], []>} : vector<8x1024xbf16>, vector<1024x256xbf16>, vector<8x256xf32> -> vector<8x256xf32>
    %c0_40 = arith.constant 0 : index
    %c0_41 = arith.constant 0 : index
    %59 = vector.load %arg15[%c0_40, %c0_41] : memref<1x256xf32, #tpu.memory_space<vmem>>, vector<1x256xf32>
    %60 = vector.broadcast %59 : vector<1x256xf32> to vector<8x256xf32>
    %61 = arith.addf %58, %60 : vector<8x256xf32>
    %cst_42 = arith.constant 2.000000e-01 : f32
    %62 = vector.broadcast %cst_42 : f32 to vector<8x256xf32>
    %63 = arith.mulf %62, %61 : vector<8x256xf32>
    %64 = arith.maximumf %61, %63 : vector<8x256xf32>
    %c0_43 = arith.constant 0 : index
    %c0_44 = arith.constant 0 : index
    %65 = vector.load %arg18[%c0_43, %c0_44] : memref<8x256xf32, #tpu.memory_space<vmem>>, vector<8x256xf32>
    tpu.vector_store %arg18[%c0_43, %c0_44], %64 {strides = array<i32>} : memref<8x256xf32, #tpu.memory_space<vmem>>, vector<8x256xf32>,
    %66 = arith.truncf %64 : vector<8x256xf32> to vector<8x256xbf16>
    %c0_45 = arith.constant 0 : index
    %c0_46 = arith.constant 0 : index
    %67 = vector.load %arg16[%c0_45, %c0_46] : memref<256x128xbf16, #tpu.memory_space<vmem>>, vector<256x128xbf16>
    %cst_47 = arith.constant dense<0.000000e+00> : vector<8x128xf32>
    %68 = tpu.matmul %66, %67, %cst_47 {dimension_numbers = #tpu.dot_dimension_numbers<[1], [0], [0], [1], [0, 0, 1, 1], [], []>} : vector<8x256xbf16>, vector<256x128xbf16>, vector<8x128xf32> -> vector<8x128xf32>
    %c0_48 = arith.constant 0 : index
    %c0_49 = arith.constant 0 : index
    %69 = vector.load %arg17[%c0_48, %c0_49] : memref<1x128xf32, #tpu.memory_space<vmem>>, vector<1x128xf32>
    %70 = vector.broadcast %69 : vector<1x128xf32> to vector<8x128xf32>
    %71 = arith.addf %68, %70 : vector<8x128xf32>
    %c0_50 = arith.constant 0 : index
    %c0_51 = arith.constant 0 : index
    %72 = vector.load %arg19[%c0_50, %c0_51] : memref<8x128xf32, #tpu.memory_space<vmem>>, vector<8x128xf32>
    tpu.vector_store %arg19[%c0_50, %c0_51], %71 {strides = array<i32>} : memref<8x128xf32, #tpu.memory_space<vmem>>, vector<8x128xf32>,
    return
  }
  func.func @transform_0(%arg0: i32) -> (i32, i32) {
    %c0_i32 = arith.constant 0 : i32
    %c0_i32_0 = arith.constant 0 : i32
    return %arg0, %c0_i32 : i32, i32
  }
  func.func @transform_1(%arg0: i32) -> (i32, i32) {
    %c0_i32 = arith.constant 0 : i32
    %c0_i32_0 = arith.constant 0 : i32
    return %arg0, %c0_i32 : i32, i32
  }
  func.func @transform_2(%arg0: i32) -> (i32, i32) {
    %c0_i32 = arith.constant 0 : i32
    %c0_i32_0 = arith.constant 0 : i32
    %c0_i32_1 = arith.constant 0 : i32
    return %c0_i32, %c0_i32_0 : i32, i32
  }
  func.func @transform_3(%arg0: i32) -> (i32, i32) {
    %c0_i32 = arith.constant 0 : i32
    %c0_i32_0 = arith.constant 0 : i32
    %c0_i32_1 = arith.constant 0 : i32
    return %c0_i32, %c0_i32_0 : i32, i32
  }
  func.func @transform_4(%arg0: i32) -> (i32, i32) {
    %c0_i32 = arith.constant 0 : i32
    %c0_i32_0 = arith.constant 0 : i32
    %c0_i32_1 = arith.constant 0 : i32
    return %c0_i32, %c0_i32_0 : i32, i32
  }
  func.func @transform_5(%arg0: i32) -> (i32, i32) {
    %c0_i32 = arith.constant 0 : i32
    %c0_i32_0 = arith.constant 0 : i32
    %c0_i32_1 = arith.constant 0 : i32
    return %c0_i32, %c0_i32_0 : i32, i32
  }
  func.func @transform_6(%arg0: i32) -> (i32, i32) {
    %c0_i32 = arith.constant 0 : i32
    %c0_i32_0 = arith.constant 0 : i32
    %c0_i32_1 = arith.constant 0 : i32
    return %c0_i32, %c0_i32_0 : i32, i32
  }
  func.func @transform_7(%arg0: i32) -> (i32, i32) {
    %c0_i32 = arith.constant 0 : i32
    %c0_i32_0 = arith.constant 0 : i32
    %c0_i32_1 = arith.constant 0 : i32
    return %c0_i32, %c0_i32_0 : i32, i32
  }
  func.func @transform_8(%arg0: i32) -> (i32, i32) {
    %c0_i32 = arith.constant 0 : i32
    %c0_i32_0 = arith.constant 0 : i32
    %c0_i32_1 = arith.constant 0 : i32
    return %c0_i32, %c0_i32_0 : i32, i32
  }
  func.func @transform_9(%arg0: i32) -> (i32, i32) {
    %c0_i32 = arith.constant 0 : i32
    %c0_i32_0 = arith.constant 0 : i32
    %c0_i32_1 = arith.constant 0 : i32
    return %c0_i32, %c0_i32_0 : i32, i32
  }
  func.func @transform_10(%arg0: i32) -> (i32, i32) {
    %c0_i32 = arith.constant 0 : i32
    %c0_i32_0 = arith.constant 0 : i32
    %c0_i32_1 = arith.constant 0 : i32
    return %c0_i32, %c0_i32_0 : i32, i32
  }
  func.func @transform_11(%arg0: i32) -> (i32, i32) {
    %c0_i32 = arith.constant 0 : i32
    %c0_i32_0 = arith.constant 0 : i32
    %c0_i32_1 = arith.constant 0 : i32
    return %c0_i32, %c0_i32_0 : i32, i32
  }
  func.func @transform_12(%arg0: i32) -> (i32, i32) {
    %c0_i32 = arith.constant 0 : i32
    %c0_i32_0 = arith.constant 0 : i32
    %c0_i32_1 = arith.constant 0 : i32
    return %c0_i32, %c0_i32_0 : i32, i32
  }
  func.func @transform_13(%arg0: i32) -> (i32, i32) {
    %c0_i32 = arith.constant 0 : i32
    %c0_i32_0 = arith.constant 0 : i32
    %c0_i32_1 = arith.constant 0 : i32
    return %c0_i32, %c0_i32_0 : i32, i32
  }
  func.func @transform_14(%arg0: i32) -> (i32, i32) {
    %c0_i32 = arith.constant 0 : i32
    %c0_i32_0 = arith.constant 0 : i32
    %c0_i32_1 = arith.constant 0 : i32
    return %c0_i32, %c0_i32_0 : i32, i32
  }
  func.func @transform_15(%arg0: i32) -> (i32, i32) {
    %c0_i32 = arith.constant 0 : i32
    %c0_i32_0 = arith.constant 0 : i32
    %c0_i32_1 = arith.constant 0 : i32
    return %c0_i32, %c0_i32_0 : i32, i32
  }
  func.func @transform_16(%arg0: i32) -> (i32, i32) {
    %c0_i32 = arith.constant 0 : i32
    %c0_i32_0 = arith.constant 0 : i32
    %c0_i32_1 = arith.constant 0 : i32
    return %c0_i32, %c0_i32_0 : i32, i32
  }
  func.func @transform_17(%arg0: i32) -> (i32, i32) {
    %c0_i32 = arith.constant 0 : i32
    %c0_i32_0 = arith.constant 0 : i32
    return %arg0, %c0_i32 : i32, i32
  }
  func.func @transform_18(%arg0: i32) -> (i32, i32) {
    %c0_i32 = arith.constant 0 : i32
    %c0_i32_0 = arith.constant 0 : i32
    return %arg0, %c0_i32 : i32, i32
  }
}

</mosaic_0001>

<llo_original>
// kernel: tpu_custom_call.1
$region0: #{tpu_custom_call.1}
  #allocation0 [shape = 'u32[]', space=smem, size = 0x4, offset = 0x4, fixed_abs, tag = 'smem constant byte address 0x4 - core index']
  #allocation1 [shape = 'u32[144,128]{1,0:T(1,128)}', space=vmem, size = 0x12000, scoped, tag = 'internal scratch']
  %s0 = inlined_call_operand.vmem [shape: f32[128,8], index: 0, kind: input, shape index: {}]
  %s1 = inlined_call_operand.vmem [shape: f32[16,6], index: 1, kind: input, shape index: {}]
  %s2 = inlined_call_operand.vmem [shape: bf16[8,128], index: 2, kind: input, shape index: {}]
  %s3 = inlined_call_operand.vmem [shape: bf16[1,128], index: 3, kind: input, shape index: {}]
  %s4 = inlined_call_operand.hbm [shape: bf16[128,128], index: 4, kind: input, shape index: {}]
  %s5 = inlined_call_operand.vmem [shape: bf16[1,128], index: 5, kind: input, shape index: {}]
  %s6 = inlined_call_operand.vmem [shape: bf16[128,256], index: 6, kind: input, shape index: {}]
  %s7 = inlined_call_operand.vmem [shape: f32[1,256], index: 7, kind: input, shape index: {}]
  %s8 = inlined_call_operand.vmem [shape: f32[6,16], index: 8, kind: input, shape index: {}]
  %s9 = inlined_call_operand.vmem [shape: f32[1,16], index: 9, kind: input, shape index: {}]
  %s10 = inlined_call_operand.hbm [shape: bf16[512,1024], index: 10, kind: input, shape index: {}]
  %s11 = inlined_call_operand.hbm [shape: bf16[16,1024], index: 11, kind: input, shape index: {}]
  %s12 = inlined_call_operand.vmem [shape: f32[1,1024], index: 12, kind: input, shape index: {}]
  %s13 = inlined_call_operand.hbm [shape: bf16[1024,256], index: 13, kind: input, shape index: {}]
  %s14 = inlined_call_operand.vmem [shape: f32[1,256], index: 14, kind: input, shape index: {}]
  %s15 = inlined_call_operand.hbm [shape: bf16[256,128], index: 15, kind: input, shape index: {}]
  %s16 = inlined_call_operand.vmem [shape: f32[1,128], index: 16, kind: input, shape index: {}]
  %s17 = inlined_call_operand.hbm [shape: f32[16,256], index: 17, kind: output, shape index: {0}]
  %s18 = inlined_call_operand.hbm [shape: f32[16,128], index: 18, kind: output, shape index: {1}]
  %19 = xla_tuple %s17, %s18
  %s20 = sld [smem:[#allocation0]]
  $region129: #{tpu_custom_call.1} parent=0
    _
  %s22 = ssub.s32 1, %s20
  %s23 = scalar_select 0, %s22, %s20
  $region1: #{tpu_custom_call.1} parent=0
    #allocation2 [shape = 'u8[32768]{0}', space=vmem, size = 0x8000, scoped, tag = 'input window, operand 4, single buffered']
    #allocation3 [shape = 's32[2]{0}', space=sflag, size = 0x8, scoped, tag = 'scoped memory for tpu_custom_call.1']
    #allocation4 [shape = 's32[2]{0}', space=sflag, size = 0x8, scoped, tag = 'scoped memory for tpu_custom_call.1']
    #allocation5 [shape = 'u8[1048576]{0}', space=vmem, size = 0x100000, scoped, tag = 'input window, operand 10, single buffered']
    #allocation6 [shape = 's32[1]{0}', space=sflag, size = 0x4, scoped, tag = 'scoped memory for tpu_custom_call.1']
    #allocation7 [shape = 'u8[32768]{0}', space=vmem, size = 0x8000, scoped, tag = 'input window, operand 11, single buffered']
    #allocation8 [shape = 'u8[524288]{0}', space=vmem, size = 0x80000, scoped, tag = 'input window, operand 13, single buffered']
    #allocation9 [shape = 's32[1]{0}', space=sflag, size = 0x4, scoped, tag = 'scoped memory for tpu_custom_call.1']
    #allocation10 [shape = 'u8[65536]{0}', space=vmem, size = 0x10000, scoped, tag = 'input window, operand 15, single buffered']
    #allocation11 [shape = 'u8[16384]{0}', space=vmem, size = 0x4000, scoped, tag = 'output window, operand 0']
    #allocation12 [shape = 'u8[8192]{0}', space=vmem, size = 0x2000, scoped, tag = 'output window, operand 1']
    #allocation13 [shape = 's32[2]{0}', space=sflag, size = 0x8, scoped, tag = 'scoped memory for tpu_custom_call.1']
    %24 = vsyncpa [#allocation3], 0
    %25 = vsyncpa [#allocation6], 0
    %26 = vsyncpa [#allocation9], 0
    %27 = vsyncpa [#allocation4], 0
    %s28 = scalar_lea.sflag [#allocation4], 1
    %29 = vsyncpa %s28, 0
    %30 = vsyncpa [#allocation13], 0
    %s31 = scalar_lea.sflag [#allocation13], 1
    %32 = vsyncpa %s31, 0
    loop: start=0, step=1, limit=4
    $region2: #{tpu_custom_call.1} parent=1 // loop_pre_header
      _
    $region3: #{tpu_custom_call.1} parent=1 // loop_header
      %s34 = sphi 0, %s38
      %p35 = scmp.ge.s32.totalorder %s34, 4
      %s44 = sphi 0, %s46
      %s47 = sphi 0, %s44
      %s48 = sphi 0, %s47
      %s64 = sphi 0, %s48
      %s70 = sphi 0, %s72
      %s73 = sphi 0, %s70
      %s74 = sphi 0, %s73
      %s90 = sphi 0, %s74
      %s94 = sphi 0, %s94
      %s96 = sphi 0, %s94
      %s97 = sphi 0, %s96
      %s111 = sphi 0, %s97
      %s115 = sphi 0, %s115
      %s117 = sphi 0, %s115
      %s118 = sphi 0, %s117
      %s132 = sphi 0, %s118
      %s136 = sphi 0, %s136
      %s138 = sphi 0, %s136
      %s139 = sphi 0, %s138
      %s153 = sphi 0, %s139
      %s157 = sphi 0, %s157
      %s159 = sphi 0, %s157
      %s160 = sphi 0, %s159
      %s174 = sphi 0, %s160
      %s178 = sphi 0, %s178
      %s180 = sphi 0, %s178
      %s181 = sphi 0, %s180
      %s195 = sphi 0, %s181
      %s199 = sphi 0, %s199
      %s201 = sphi 0, %s199
      %s202 = sphi 0, %s201
      %s216 = sphi 0, %s202
      %s220 = sphi 0, %s220
      %s222 = sphi 0, %s220
      %s223 = sphi 0, %s222
      %s237 = sphi 0, %s223
      %s241 = sphi 0, %s241
      %s243 = sphi 0, %s241
      %s244 = sphi 0, %s243
      %s258 = sphi 0, %s244
      %s262 = sphi 0, %s262
      %s264 = sphi 0, %s262
      %s265 = sphi 0, %s264
      %s279 = sphi 0, %s265
      %s283 = sphi 0, %s283
      %s285 = sphi 0, %s283
      %s286 = sphi 0, %s285
      %s300 = sphi 0, %s286
      %s304 = sphi 0, %s304
      %s306 = sphi 0, %s304
      %s307 = sphi 0, %s306
      %s321 = sphi 0, %s307
      %s325 = sphi 0, %s325
      %s327 = sphi 0, %s325
      %s328 = sphi 0, %s327
      %s342 = sphi 0, %s328
      %s346 = sphi 0, %s346
      %s348 = sphi 0, %s346
      %s349 = sphi 0, %s348
      %s363 = sphi 0, %s349
      %s367 = sphi 0, %s367
      %s369 = sphi 0, %s367
      %s370 = sphi 0, %s369
      %s384 = sphi 0, %s370
      %s388 = sphi 0, %s388
      %s390 = sphi 0, %s388
      %s391 = sphi 0, %s390
      %s405 = sphi 0, %s391
      %s411 = sphi 0, %s413
      %s414 = sphi 0, %s411
      %s415 = sphi 0, %s414
      %s431 = sphi 0, %s415
      %s437 = sphi 0, %s439
      %s440 = sphi 0, %s437
      %s441 = sphi 0, %s440
      %s457 = sphi 0, %s441
    $region4: #{tpu_custom_call.1} parent=1 // loop_header_branch
      %37 = sbr.rel (%p35) target = $region8
    $region5: #{tpu_custom_call.1} parent=1 // loop_body
      %s39 = ssub.s32 %s34, 1
      %s40 = ssub.s32 %s34, 2
      %s41 = sadd.s32 %s34, 1
      %s42 = ssub.s32 %s34, %s41
      %p43 = scmp.eq.s32.totalorder %s42, 0
      %s45 = sadd.s32 %s44, 1
      %s46 = scalar_select %p43, %s44, %s45
      %p49 = pneg %p43
      %p50 = scmp.eq.s32.totalorder %s34, 1
      %p51 = por %p49, %p50
      %p52 = scmp.ne.s32.totalorder %s44, %s47
      %p53 = scmp.eq.s32.totalorder %s34, 0
      %p54 = por %p52, %p53
      %p55 = scmp.ne.s32.totalorder %s44, %s47
      %p56 = scmp.eq.s32.totalorder %s39, 1
      %p57 = por %p55, %p56
      %p58 = scmp.ne.s32.totalorder %s47, %s48
      %p59 = scmp.eq.s32.totalorder %s39, 0
      %p60 = por %p58, %p59
      %p61 = scmp.ne.s32.totalorder %s47, %s48
      %p62 = scmp.eq.s32.totalorder %s40, 1
      %p63 = por %p61, %p62
      %p65 = scmp.ne.s32.totalorder %s48, %s64
      %p66 = scmp.eq.s32.totalorder %s40, 0
      %p67 = por %p65, %p66
      %s68 = ssub.s32 %s34, %s41
      %p69 = scmp.eq.s32.totalorder %s68, 0
      %s71 = sadd.s32 %s70, 1
      %s72 = scalar_select %p69, %s70, %s71
      %p75 = pneg %p69
      %p76 = scmp.eq.s32.totalorder %s34, 1
      %p77 = por %p75, %p76
      %p78 = scmp.ne.s32.totalorder %s70, %s73
      %p79 = scmp.eq.s32.totalorder %s34, 0
      %p80 = por %p78, %p79
      %p81 = scmp.ne.s32.totalorder %s70, %s73
      %p82 = scmp.eq.s32.totalorder %s39, 1
      %p83 = por %p81, %p82
      %p84 = scmp.ne.s32.totalorder %s73, %s74
      %p85 = scmp.eq.s32.totalorder %s39, 0
      %p86 = por %p84, %p85
      %p87 = scmp.ne.s32.totalorder %s73, %s74
      %p88 = scmp.eq.s32.totalorder %s40, 1
      %p89 = por %p87, %p88
      %p91 = scmp.ne.s32.totalorder %s74, %s90
      %p92 = scmp.eq.s32.totalorder %s40, 0
      %p93 = por %p91, %p92
      %s95 = sadd.s32 %s94, 1
      %p98 = scmp.eq.s32.totalorder %s34, 1
      %p99 = scmp.ne.s32.totalorder %s94, %s96
      %p100 = scmp.eq.s32.totalorder %s34, 0
      %p101 = por %p99, %p100
      %p102 = scmp.ne.s32.totalorder %s94, %s96
      %p103 = scmp.eq.s32.totalorder %s39, 1
      %p104 = por %p102, %p103
      %p105 = scmp.ne.s32.totalorder %s96, %s97
      %p106 = scmp.eq.s32.totalorder %s39, 0
      %p107 = por %p105, %p106
      %p108 = scmp.ne.s32.totalorder %s96, %s97
      %p109 = scmp.eq.s32.totalorder %s40, 1
      %p110 = por %p108, %p109
      %p112 = scmp.ne.s32.totalorder %s97, %s111
      %p113 = scmp.eq.s32.totalorder %s40, 0
      %p114 = por %p112, %p113
      %s116 = sadd.s32 %s115, 1
      %p119 = scmp.eq.s32.totalorder %s34, 1
      %p120 = scmp.ne.s32.totalorder %s115, %s117
      %p121 = scmp.eq.s32.totalorder %s34, 0
      %p122 = por %p120, %p121
      %p123 = scmp.ne.s32.totalorder %s115, %s117
      %p124 = scmp.eq.s32.totalorder %s39, 1
      %p125 = por %p123, %p124
      %p126 = scmp.ne.s32.totalorder %s117, %s118
      %p127 = scmp.eq.s32.totalorder %s39, 0
      %p128 = por %p126, %p127
      %p129 = scmp.ne.s32.totalorder %s117, %s118
      %p130 = scmp.eq.s32.totalorder %s40, 1
      %p131 = por %p129, %p130
      %p133 = scmp.ne.s32.totalorder %s118, %s132
      %p134 = scmp.eq.s32.totalorder %s40, 0
      %p135 = por %p133, %p134
      %s137 = sadd.s32 %s136, 1
      %p140 = scmp.eq.s32.totalorder %s34, 1
      %p141 = scmp.ne.s32.totalorder %s136, %s138
      %p142 = scmp.eq.s32.totalorder %s34, 0
      %p143 = por %p141, %p142
      %p144 = scmp.ne.s32.totalorder %s136, %s138
      %p145 = scmp.eq.s32.totalorder %s39, 1
      %p146 = por %p144, %p145
      %p147 = scmp.ne.s32.totalorder %s138, %s139
      %p148 = scmp.eq.s32.totalorder %s39, 0
      %p149 = por %p147, %p148
      %p150 = scmp.ne.s32.totalorder %s138, %s139
      %p151 = scmp.eq.s32.totalorder %s40, 1
      %p152 = por %p150, %p151
      %p154 = scmp.ne.s32.totalorder %s139, %s153
      %p155 = scmp.eq.s32.totalorder %s40, 0
      %p156 = por %p154, %p155
      %s158 = sadd.s32 %s157, 1
      %p161 = scmp.eq.s32.totalorder %s34, 1
      %p162 = scmp.ne.s32.totalorder %s157, %s159
      %p163 = scmp.eq.s32.totalorder %s34, 0
      %p164 = por %p162, %p163
      %p165 = scmp.ne.s32.totalorder %s157, %s159
      %p166 = scmp.eq.s32.totalorder %s39, 1
      %p167 = por %p165, %p166
      %p168 = scmp.ne.s32.totalorder %s159, %s160
      %p169 = scmp.eq.s32.totalorder %s39, 0
      %p170 = por %p168, %p169
      %p171 = scmp.ne.s32.totalorder %s159, %s160
      %p172 = scmp.eq.s32.totalorder %s40, 1
      %p173 = por %p171, %p172
      %p175 = scmp.ne.s32.totalorder %s160, %s174
      %p176 = scmp.eq.s32.totalorder %s40, 0
      %p177 = por %p175, %p176
      %s179 = sadd.s32 %s178, 1
      %p182 = scmp.eq.s32.totalorder %s34, 1
      %p183 = scmp.ne.s32.totalorder %s178, %s180
      %p184 = scmp.eq.s32.totalorder %s34, 0
      %p185 = por %p183, %p184
      %p186 = scmp.ne.s32.totalorder %s178, %s180
      %p187 = scmp.eq.s32.totalorder %s39, 1
      %p188 = por %p186, %p187
      %p189 = scmp.ne.s32.totalorder %s180, %s181
      %p190 = scmp.eq.s32.totalorder %s39, 0
      %p191 = por %p189, %p190
      %p192 = scmp.ne.s32.totalorder %s180, %s181
      %p193 = scmp.eq.s32.totalorder %s40, 1
      %p194 = por %p192, %p193
      %p196 = scmp.ne.s32.totalorder %s181, %s195
      %p197 = scmp.eq.s32.totalorder %s40, 0
      %p198 = por %p196, %p197
      %s200 = sadd.s32 %s199, 1
      %p203 = scmp.eq.s32.totalorder %s34, 1
      %p204 = scmp.ne.s32.totalorder %s199, %s201
      %p205 = scmp.eq.s32.totalorder %s34, 0
      %p206 = por %p204, %p205
      %p207 = scmp.ne.s32.totalorder %s199, %s201
      %p208 = scmp.eq.s32.totalorder %s39, 1
      %p209 = por %p207, %p208
      %p210 = scmp.ne.s32.totalorder %s201, %s202
      %p211 = scmp.eq.s32.totalorder %s39, 0
      %p212 = por %p210, %p211
      %p213 = scmp.ne.s32.totalorder %s201, %s202
      %p214 = scmp.eq.s32.totalorder %s40, 1
      %p215 = por %p213, %p214
      %p217 = scmp.ne.s32.totalorder %s202, %s216
      %p218 = scmp.eq.s32.totalorder %s40, 0
      %p219 = por %p217, %p218
      %s221 = sadd.s32 %s220, 1
      %p224 = scmp.eq.s32.totalorder %s34, 1
      %p225 = scmp.ne.s32.totalorder %s220, %s222
      %p226 = scmp.eq.s32.totalorder %s34, 0
      %p227 = por %p225, %p226
      %p228 = scmp.ne.s32.totalorder %s220, %s222
      %p229 = scmp.eq.s32.totalorder %s39, 1
      %p230 = por %p228, %p229
      %p231 = scmp.ne.s32.totalorder %s222, %s223
      %p232 = scmp.eq.s32.totalorder %s39, 0
      %p233 = por %p231, %p232
      %p234 = scmp.ne.s32.totalorder %s222, %s223
      %p235 = scmp.eq.s32.totalorder %s40, 1
      %p236 = por %p234, %p235
      %p238 = scmp.ne.s32.totalorder %s223, %s237
      %p239 = scmp.eq.s32.totalorder %s40, 0
      %p240 = por %p238, %p239
      %s242 = sadd.s32 %s241, 1
      %p245 = scmp.eq.s32.totalorder %s34, 1
      %p246 = scmp.ne.s32.totalorder %s241, %s243
      %p247 = scmp.eq.s32.totalorder %s34, 0
      %p248 = por %p246, %p247
      %p249 = scmp.ne.s32.totalorder %s241, %s243
      %p250 = scmp.eq.s32.totalorder %s39, 1
      %p251 = por %p249, %p250
      %p252 = scmp.ne.s32.totalorder %s243, %s244
      %p253 = scmp.eq.s32.totalorder %s39, 0
      %p254 = por %p252, %p253
      %p255 = scmp.ne.s32.totalorder %s243, %s244
      %p256 = scmp.eq.s32.totalorder %s40, 1
      %p257 = por %p255, %p256
      %p259 = scmp.ne.s32.totalorder %s244, %s258
      %p260 = scmp.eq.s32.totalorder %s40, 0
      %p261 = por %p259, %p260
      %s263 = sadd.s32 %s262, 1
      %p266 = scmp.eq.s32.totalorder %s34, 1
      %p267 = scmp.ne.s32.totalorder %s262, %s264
      %p268 = scmp.eq.s32.totalorder %s34, 0
      %p269 = por %p267, %p268
      %p270 = scmp.ne.s32.totalorder %s262, %s264
      %p271 = scmp.eq.s32.totalorder %s39, 1
      %p272 = por %p270, %p271
      %p273 = scmp.ne.s32.totalorder %s264, %s265
      %p274 = scmp.eq.s32.totalorder %s39, 0
      %p275 = por %p273, %p274
      %p276 = scmp.ne.s32.totalorder %s264, %s265
      %p277 = scmp.eq.s32.totalorder %s40, 1
      %p278 = por %p276, %p277
      %p280 = scmp.ne.s32.totalorder %s265, %s279
      %p281 = scmp.eq.s32.totalorder %s40, 0
      %p282 = por %p280, %p281
      %s284 = sadd.s32 %s283, 1
      %p287 = scmp.eq.s32.totalorder %s34, 1
      %p288 = scmp.ne.s32.totalorder %s283, %s285
      %p289 = scmp.eq.s32.totalorder %s34, 0
      %p290 = por %p288, %p289
      %p291 = scmp.ne.s32.totalorder %s283, %s285
      %p292 = scmp.eq.s32.totalorder %s39, 1
      %p293 = por %p291, %p292
      %p294 = scmp.ne.s32.totalorder %s285, %s286
      %p295 = scmp.eq.s32.totalorder %s39, 0
      %p296 = por %p294, %p295
      %p297 = scmp.ne.s32.totalorder %s285, %s286
      %p298 = scmp.eq.s32.totalorder %s40, 1
      %p299 = por %p297, %p298
      %p301 = scmp.ne.s32.totalorder %s286, %s300
      %p302 = scmp.eq.s32.totalorder %s40, 0
      %p303 = por %p301, %p302
      %s305 = sadd.s32 %s304, 1
      %p308 = scmp.eq.s32.totalorder %s34, 1
      %p309 = scmp.ne.s32.totalorder %s304, %s306
      %p310 = scmp.eq.s32.totalorder %s34, 0
      %p311 = por %p309, %p310
      %p312 = scmp.ne.s32.totalorder %s304, %s306
      %p313 = scmp.eq.s32.totalorder %s39, 1
      %p314 = por %p312, %p313
      %p315 = scmp.ne.s32.totalorder %s306, %s307
      %p316 = scmp.eq.s32.totalorder %s39, 0
      %p317 = por %p315, %p316
      %p318 = scmp.ne.s32.totalorder %s306, %s307
      %p319 = scmp.eq.s32.totalorder %s40, 1
      %p320 = por %p318, %p319
      %p322 = scmp.ne.s32.totalorder %s307, %s321
      %p323 = scmp.eq.s32.totalorder %s40, 0
      %p324 = por %p322, %p323
      %s326 = sadd.s32 %s325, 1
      %p329 = scmp.eq.s32.totalorder %s34, 1
      %p330 = scmp.ne.s32.totalorder %s325, %s327
      %p331 = scmp.eq.s32.totalorder %s34, 0
      %p332 = por %p330, %p331
      %p333 = scmp.ne.s32.totalorder %s325, %s327
      %p334 = scmp.eq.s32.totalorder %s39, 1
      %p335 = por %p333, %p334
      %p336 = scmp.ne.s32.totalorder %s327, %s328
      %p337 = scmp.eq.s32.totalorder %s39, 0
      %p338 = por %p336, %p337
      %p339 = scmp.ne.s32.totalorder %s327, %s328
      %p340 = scmp.eq.s32.totalorder %s40, 1
      %p341 = por %p339, %p340
      %p343 = scmp.ne.s32.totalorder %s328, %s342
      %p344 = scmp.eq.s32.totalorder %s40, 0
      %p345 = por %p343, %p344
      %s347 = sadd.s32 %s346, 1
      %p350 = scmp.eq.s32.totalorder %s34, 1
      %p351 = scmp.ne.s32.totalorder %s346, %s348
      %p352 = scmp.eq.s32.totalorder %s34, 0
      %p353 = por %p351, %p352
      %p354 = scmp.ne.s32.totalorder %s346, %s348
      %p355 = scmp.eq.s32.totalorder %s39, 1
      %p356 = por %p354, %p355
      %p357 = scmp.ne.s32.totalorder %s348, %s349
      %p358 = scmp.eq.s32.totalorder %s39, 0
      %p359 = por %p357, %p358
      %p360 = scmp.ne.s32.totalorder %s348, %s349
      %p361 = scmp.eq.s32.totalorder %s40, 1
      %p362 = por %p360, %p361
      %p364 = scmp.ne.s32.totalorder %s349, %s363
      %p365 = scmp.eq.s32.totalorder %s40, 0
      %p366 = por %p364, %p365
      %s368 = sadd.s32 %s367, 1
      %p371 = scmp.eq.s32.totalorder %s34, 1
      %p372 = scmp.ne.s32.totalorder %s367, %s369
      %p373 = scmp.eq.s32.totalorder %s34, 0
      %p374 = por %p372, %p373
      %p375 = scmp.ne.s32.totalorder %s367, %s369
      %p376 = scmp.eq.s32.totalorder %s39, 1
      %p377 = por %p375, %p376
      %p378 = scmp.ne.s32.totalorder %s369, %s370
      %p379 = scmp.eq.s32.totalorder %s39, 0
      %p380 = por %p378, %p379
      %p381 = scmp.ne.s32.totalorder %s369, %s370
      %p382 = scmp.eq.s32.totalorder %s40, 1
      %p383 = por %p381, %p382
      %p385 = scmp.ne.s32.totalorder %s370, %s384
      %p386 = scmp.eq.s32.totalorder %s40, 0
      %p387 = por %p385, %p386
      %s389 = sadd.s32 %s388, 1
      %p392 = scmp.eq.s32.totalorder %s34, 1
      %p393 = scmp.ne.s32.totalorder %s388, %s390
      %p394 = scmp.eq.s32.totalorder %s34, 0
      %p395 = por %p393, %p394
      %p396 = scmp.ne.s32.totalorder %s388, %s390
      %p397 = scmp.eq.s32.totalorder %s39, 1
      %p398 = por %p396, %p397
      %p399 = scmp.ne.s32.totalorder %s390, %s391
      %p400 = scmp.eq.s32.totalorder %s39, 0
      %p401 = por %p399, %p400
      %p402 = scmp.ne.s32.totalorder %s390, %s391
      %p403 = scmp.eq.s32.totalorder %s40, 1
      %p404 = por %p402, %p403
      %p406 = scmp.ne.s32.totalorder %s391, %s405
      %p407 = scmp.eq.s32.totalorder %s40, 0
      %p408 = por %p406, %p407
      %s409 = ssub.s32 %s34, %s41
      %p410 = scmp.eq.s32.totalorder %s409, 0
      %s412 = sadd.s32 %s411, 1
      %s413 = scalar_select %p410, %s411, %s412
      %p416 = pneg %p410
      %p417 = scmp.eq.s32.totalorder %s34, 1
      %p418 = por %p416, %p417
      %p419 = scmp.ne.s32.totalorder %s411, %s414
      %p420 = scmp.eq.s32.totalorder %s34, 0
      %p421 = por %p419, %p420
      %p422 = scmp.ne.s32.totalorder %s411, %s414
      %p423 = scmp.eq.s32.totalorder %s39, 1
      %p424 = por %p422, %p423
      %p425 = scmp.ne.s32.totalorder %s414, %s415
      %p426 = scmp.eq.s32.totalorder %s39, 0
      %p427 = por %p425, %p426
      %p428 = scmp.ne.s32.totalorder %s414, %s415
      %p429 = scmp.eq.s32.totalorder %s40, 1
      %p430 = por %p428, %p429
      %p432 = scmp.ne.s32.totalorder %s415, %s431
      %p433 = scmp.eq.s32.totalorder %s40, 0
      %p434 = por %p432, %p433
      %s435 = ssub.s32 %s34, %s41
      %p436 = scmp.eq.s32.totalorder %s435, 0
      %s438 = sadd.s32 %s437, 1
      %s439 = scalar_select %p436, %s437, %s438
      %p442 = pneg %p436
      %p443 = scmp.eq.s32.totalorder %s34, 1
      %p444 = por %p442, %p443
      %p445 = scmp.ne.s32.totalorder %s437, %s440
      %p446 = scmp.eq.s32.totalorder %s34, 0
      %p447 = por %p445, %p446
      %p448 = scmp.ne.s32.totalorder %s437, %s440
      %p449 = scmp.eq.s32.totalorder %s39, 1
      %p450 = por %p448, %p449
      %p451 = scmp.ne.s32.totalorder %s440, %s441
      %p452 = scmp.eq.s32.totalorder %s39, 0
      %p453 = por %p451, %p452
      %p454 = scmp.ne.s32.totalorder %s440, %s441
      %p455 = scmp.eq.s32.totalorder %s40, 1
      %p456 = por %p454, %p455
      %p458 = scmp.ne.s32.totalorder %s441, %s457
      %p459 = scmp.eq.s32.totalorder %s40, 0
      %p460 = por %p458, %p459
      %p461 = scmp.le.s32.totalorder 1, %s34
      %p462 = scmp.lt.s32.totalorder %s34, 3
      %p463 = pnand %p461, %p462
      %p464 = pneg %p463
      // Predicated region
      $region9: #{tpu_custom_call.1} parent=5 // pred_check
        _
      $region10: #{tpu_custom_call.1} parent=5 // pred_check_branch
        %466 = sbr.rel (%p463) target = $region12
      $region11: #{tpu_custom_call.1} parent=5 // pred_region
        %s467 = ssub.s32 %s34, 1
        // Predicated region
        $region13: #{tpu_custom_call.1} parent=11 // pred_check
          %p468 = pneg %p107
        $region14: #{tpu_custom_call.1} parent=11 // pred_check_branch
          %470 = sbr.rel (%p468) target = $region16
        $region15: #{tpu_custom_call.1} parent=11 // pred_region
          _
        $region16: #{tpu_custom_call.1} parent=11 // pred_fallthru
          _
        // Predicated region
        $region17: #{tpu_custom_call.1} parent=11 // pred_check
          %p471 = pneg %p128
        $region18: #{tpu_custom_call.1} parent=11 // pred_check_branch
          %473 = sbr.rel (%p471) target = $region20
        $region19: #{tpu_custom_call.1} parent=11 // pred_region
          _
        $region20: #{tpu_custom_call.1} parent=11 // pred_fallthru
          _
        // Predicated region
        $region21: #{tpu_custom_call.1} parent=11 // pred_check
          %p474 = pneg %p149
        $region22: #{tpu_custom_call.1} parent=11 // pred_check_branch
          %476 = sbr.rel (%p474) target = $region24
        $region23: #{tpu_custom_call.1} parent=11 // pred_region
          %s478 = ssub.s32 1024, 1024
          %479 = vsyncadd [#allocation3], %s478
          %s480 = sshll.u32 [#allocation2], 4
          %s481 = int_to_ptr.vmem [resolvable:$true] %s480
          %486 = dma.hbm_to_vmem [thread:$0]  %s4, 1024, %s481, [#allocation3], 64, 64, 4
        $region24: #{tpu_custom_call.1} parent=11 // pred_fallthru
          _
        // Predicated region
        $region25: #{tpu_custom_call.1} parent=11 // pred_check
          %p487 = pneg %p170
        $region26: #{tpu_custom_call.1} parent=11 // pred_check_branch
          %489 = sbr.rel (%p487) target = $region28
        $region27: #{tpu_custom_call.1} parent=11 // pred_region
          _
        $region28: #{tpu_custom_call.1} parent=11 // pred_fallthru
          _
        // Predicated region
        $region29: #{tpu_custom_call.1} parent=11 // pred_check
          %p490 = pneg %p191
        $region30: #{tpu_custom_call.1} parent=11 // pred_check_branch
          %492 = sbr.rel (%p490) target = $region32
        $region31: #{tpu_custom_call.1} parent=11 // pred_region
          _
        $region32: #{tpu_custom_call.1} parent=11 // pred_fallthru
          _
        // Predicated region
        $region33: #{tpu_custom_call.1} parent=11 // pred_check
          %p493 = pneg %p212
        $region34: #{tpu_custom_call.1} parent=11 // pred_check_branch
          %495 = sbr.rel (%p493) target = $region36
        $region35: #{tpu_custom_call.1} parent=11 // pred_region
          _
        $region36: #{tpu_custom_call.1} parent=11 // pred_fallthru
          _
        // Predicated region
        $region37: #{tpu_custom_call.1} parent=11 // pred_check
          %p496 = pneg %p233
        $region38: #{tpu_custom_call.1} parent=11 // pred_check_branch
          %498 = sbr.rel (%p496) target = $region40
        $region39: #{tpu_custom_call.1} parent=11 // pred_region
          _
        $region40: #{tpu_custom_call.1} parent=11 // pred_fallthru
          _
        // Predicated region
        $region41: #{tpu_custom_call.1} parent=11 // pred_check
          %p499 = pneg %p254
        $region42: #{tpu_custom_call.1} parent=11 // pred_check_branch
          %501 = sbr.rel (%p499) target = $region44
        $region43: #{tpu_custom_call.1} parent=11 // pred_region
          _
        $region44: #{tpu_custom_call.1} parent=11 // pred_fallthru
          _
        // Predicated region
        $region45: #{tpu_custom_call.1} parent=11 // pred_check
          %p502 = pneg %p275
        $region46: #{tpu_custom_call.1} parent=11 // pred_check_branch
          %504 = sbr.rel (%p502) target = $region48
        $region47: #{tpu_custom_call.1} parent=11 // pred_region
          %s506 = ssub.s32 32768, 32768
          %507 = vsyncadd [#allocation6], %s506
          %s508 = sshll.u32 [#allocation5], 4
          %s509 = int_to_ptr.vmem [resolvable:$true] %s508
          %514 = dma.hbm_to_vmem [thread:$0]  %s10, 32768, %s509, [#allocation6], 512, 512, 32
        $region48: #{tpu_custom_call.1} parent=11 // pred_fallthru
          _
        // Predicated region
        $region49: #{tpu_custom_call.1} parent=11 // pred_check
          %p515 = pneg %p296
        $region50: #{tpu_custom_call.1} parent=11 // pred_check_branch
          %517 = sbr.rel (%p515) target = $region52
        $region51: #{tpu_custom_call.1} parent=11 // pred_region
          %s519 = ssub.s32 1024, 1024
          %520 = vsyncadd [#allocation6], %s519
          %s521 = sshll.u32 [#allocation7], 4
          %s522 = int_to_ptr.vmem [resolvable:$true] %s521
          %527 = dma.hbm_to_vmem [thread:$0]  %s11, 1024, %s522, [#allocation6], 512, 512, 32
        $region52: #{tpu_custom_call.1} parent=11 // pred_fallthru
          _
        // Predicated region
        $region53: #{tpu_custom_call.1} parent=11 // pred_check
          %p528 = pneg %p317
        $region54: #{tpu_custom_call.1} parent=11 // pred_check_branch
          %530 = sbr.rel (%p528) target = $region56
        $region55: #{tpu_custom_call.1} parent=11 // pred_region
          _
        $region56: #{tpu_custom_call.1} parent=11 // pred_fallthru
          _
        // Predicated region
        $region57: #{tpu_custom_call.1} parent=11 // pred_check
          %p531 = pneg %p338
        $region58: #{tpu_custom_call.1} parent=11 // pred_check_branch
          %533 = sbr.rel (%p531) target = $region60
        $region59: #{tpu_custom_call.1} parent=11 // pred_region
          %s535 = ssub.s32 16384, 16384
          %536 = vsyncadd [#allocation9], %s535
          %s537 = sshll.u32 [#allocation8], 4
          %s538 = int_to_ptr.vmem [resolvable:$true] %s537
          %543 = dma.hbm_to_vmem [thread:$0]  %s13, 16384, %s538, [#allocation9], 128, 128, 8
        $region60: #{tpu_custom_call.1} parent=11 // pred_fallthru
          _
        // Predicated region
        $region61: #{tpu_custom_call.1} parent=11 // pred_check
          %p544 = pneg %p359
        $region62: #{tpu_custom_call.1} parent=11 // pred_check_branch
          %546 = sbr.rel (%p544) target = $region64
        $region63: #{tpu_custom_call.1} parent=11 // pred_region
          _
        $region64: #{tpu_custom_call.1} parent=11 // pred_fallthru
          _
        // Predicated region
        $region65: #{tpu_custom_call.1} parent=11 // pred_check
          %p547 = pneg %p380
        $region66: #{tpu_custom_call.1} parent=11 // pred_check_branch
          %549 = sbr.rel (%p547) target = $region68
        $region67: #{tpu_custom_call.1} parent=11 // pred_region
          %s551 = ssub.s32 2048, 2048
          %552 = vsyncadd [#allocation9], %s551
          %s553 = sshll.u32 [#allocation10], 4
          %s554 = int_to_ptr.vmem [resolvable:$true] %s553
          %559 = dma.hbm_to_vmem [thread:$0]  %s15, 2048, %s554, [#allocation9], 64, 64, 4
        $region68: #{tpu_custom_call.1} parent=11 // pred_fallthru
          _
        // Predicated region
        $region69: #{tpu_custom_call.1} parent=11 // pred_check
          %p560 = pneg %p401
        $region70: #{tpu_custom_call.1} parent=11 // pred_check_branch
          %562 = sbr.rel (%p560) target = $region72
        $region71: #{tpu_custom_call.1} parent=11 // pred_region
          _
        $region72: #{tpu_custom_call.1} parent=11 // pred_fallthru
          _
      $region12: #{tpu_custom_call.1} parent=5 // pred_fallthru
        _
      %p563 = scmp.lt.s32.totalorder %s34, 2
      // Predicated region
      $region73: #{tpu_custom_call.1} parent=5 // pred_check
        %p564 = pneg %p563
      $region74: #{tpu_custom_call.1} parent=5 // pred_check_branch
        %566 = sbr.rel (%p564) target = $region76
      $region75: #{tpu_custom_call.1} parent=5 // pred_region
        // Predicated region
        $region77: #{tpu_custom_call.1} parent=75 // pred_check
          %p567 = pneg %p54
        $region78: #{tpu_custom_call.1} parent=75 // pred_check_branch
          %569 = sbr.rel (%p567) target = $region80
        $region79: #{tpu_custom_call.1} parent=75 // pred_region
          %s570 = smul.u32 8, %s34
          %p571 = scmp.lt.s32.totalorder %s570, 15
          %s572 = scalar_select %p571, %s570, 15
          %s573 = smul.addr %s572, 8
          %s574 = scalar_lea.vmem %s0, %s573
          %s575 = smul.u32 8, %s34
        $region80: #{tpu_custom_call.1} parent=75 // pred_fallthru
          _
        // Predicated region
        $region81: #{tpu_custom_call.1} parent=75 // pred_check
          %p576 = pneg %p80
        $region82: #{tpu_custom_call.1} parent=75 // pred_check_branch
          %578 = sbr.rel (%p576) target = $region84
        $region83: #{tpu_custom_call.1} parent=75 // pred_region
          %p579 = scmp.lt.s32.totalorder %s34, 1
          %s580 = scalar_select %p579, %s34, 1
          %s581 = smul.addr %s580, 8
          %s582 = scalar_lea.vmem %s1, %s581
        $region84: #{tpu_custom_call.1} parent=75 // pred_fallthru
          _
      $region76: #{tpu_custom_call.1} parent=5 // pred_fallthru
        _
      %p583 = scmp.le.s32.totalorder 1, %s34
      %p584 = scmp.lt.s32.totalorder %s34, 3
      %p585 = pnand %p583, %p584
      %p586 = pneg %p585
      // Predicated region
      $region85: #{tpu_custom_call.1} parent=5 // pred_check
        _
      $region86: #{tpu_custom_call.1} parent=5 // pred_check_branch
        %588 = sbr.rel (%p585) target = $region88
      $region87: #{tpu_custom_call.1} parent=5 // pred_region
        %s589 = ssub.s32 %s34, 1
        // Predicated region
        $region89: #{tpu_custom_call.1} parent=87 // pred_check
          %p590 = pneg %p149
        $region90: #{tpu_custom_call.1} parent=87 // pred_check_branch
          %592 = sbr.rel (%p590) target = $region92
        $region91: #{tpu_custom_call.1} parent=87 // pred_region
          %593 = dma.done [#allocation3], 1024
        $region92: #{tpu_custom_call.1} parent=87 // pred_fallthru
          _
        // Predicated region
        $region93: #{tpu_custom_call.1} parent=87 // pred_check
          %p594 = pneg %p275
        $region94: #{tpu_custom_call.1} parent=87 // pred_check_branch
          %596 = sbr.rel (%p594) target = $region96
        $region95: #{tpu_custom_call.1} parent=87 // pred_region
          %597 = dma.done [#allocation6], 32768
        $region96: #{tpu_custom_call.1} parent=87 // pred_fallthru
          _
        // Predicated region
        $region97: #{tpu_custom_call.1} parent=87 // pred_check
          %p598 = pneg %p296
        $region98: #{tpu_custom_call.1} parent=87 // pred_check_branch
          %600 = sbr.rel (%p598) target = $region100
        $region99: #{tpu_custom_call.1} parent=87 // pred_region
          %601 = dma.done [#allocation6], 1024
        $region100: #{tpu_custom_call.1} parent=87 // pred_fallthru
          _
        // Predicated region
        $region101: #{tpu_custom_call.1} parent=87 // pred_check
          %p602 = pneg %p338
        $region102: #{tpu_custom_call.1} parent=87 // pred_check_branch
          %604 = sbr.rel (%p602) target = $region104
        $region103: #{tpu_custom_call.1} parent=87 // pred_region
          %605 = dma.done [#allocation9], 16384
        $region104: #{tpu_custom_call.1} parent=87 // pred_fallthru
          _
        // Predicated region
        $region105: #{tpu_custom_call.1} parent=87 // pred_check
          %p606 = pneg %p380
        $region106: #{tpu_custom_call.1} parent=87 // pred_check_branch
          %608 = sbr.rel (%p606) target = $region108
        $region107: #{tpu_custom_call.1} parent=87 // pred_region
          %609 = dma.done [#allocation9], 2048
        $region108: #{tpu_custom_call.1} parent=87 // pred_fallthru
          _
        %s610 = smul.u32 8, %s39
        %p611 = scmp.lt.s32.totalorder %s610, 15
        %s612 = scalar_select %p611, %s610, 15
        %s613 = smul.addr %s612, 8
        %s614 = scalar_lea.vmem %s0, %s613
        %p615 = pneg %p60
        %p616 = pneg %p57
        %p617 = scmp.lt.s32.totalorder %s39, 1
        %s618 = scalar_select %p617, %s39, 1
        %s619 = smul.addr %s618, 8
        %s620 = scalar_lea.vmem %s1, %s619
        %p621 = pneg %p86
        %p622 = pneg %p83
        %p623 = pneg %p107
        %p624 = pneg %p104
        %p625 = pneg %p128
        %p626 = pneg %p125
        %p627 = pneg %p149
        %p628 = pneg %p146
        %p629 = pneg %p170
        %p630 = pneg %p167
        %p631 = pneg %p191
        %p632 = pneg %p188
        %p633 = pneg %p212
        %p634 = pneg %p209
        %p635 = pneg %p233
        %p636 = pneg %p230
        %p637 = pneg %p254
        %p638 = pneg %p251
        %p639 = pneg %p275
        %p640 = pneg %p272
        %p641 = pneg %p296
        %p642 = pneg %p293
        %p643 = pneg %p317
        %p644 = pneg %p314
        %p645 = pneg %p338
        %p646 = pneg %p335
        %p647 = pneg %p359
        %p648 = pneg %p356
        %p649 = pneg %p380
        %p650 = pneg %p377
        %p651 = pneg %p401
        %p652 = pneg %p398
        %p653 = pneg %p427
        %p654 = pneg %p424
        %s655 = sand.u32 %s414, 1
        %s656 = scalar_lea.sflag [#allocation4], %s655
        %s657 = sand.u32 %s414, 1
        %s658 = smul.addr %s657, 16
        %s659 = scalar_lea.vmem [#allocation11], %s658
        %p660 = pneg %p453
        %p661 = pneg %p450
        %s662 = sand.u32 %s440, 1
        %s663 = scalar_lea.sflag [#allocation13], %s662
        %s664 = sand.u32 %s440, 1
        %s665 = smul.addr %s664, 8
        %s666 = scalar_lea.vmem [#allocation12], %s665
        %s667 = smul.u32 8, %s39
        %p668 = scmp.lt.s32.totalorder %s667, 15
        %s669 = scalar_select %p668, %s667, 15
        %s670 = smul.addr %s669, 8
        %s671 = scalar_lea.vmem %s0, %s670
        %s672 = smul.u32 8, %s39
        %p673 = scmp.lt.s32.totalorder %s39, 1
        %s674 = scalar_select %p673, %s39, 1
        %s675 = smul.addr %s674, 8
        %s676 = scalar_lea.vmem %s1, %s675
        %v679 = vld [vmem:[%s671] sm:$0xff]
        %v680 = vld [vmem:[%s671 + $0x8] sm:$0xff]
        %v681 = vld [vmem:[%s671 + $0x10] sm:$0xff]
        %v682 = vld [vmem:[%s671 + $0x18] sm:$0xff]
        %v683 = vld [vmem:[%s671 + $0x20] sm:$0xff]
        %v684 = vld [vmem:[%s671 + $0x28] sm:$0xff]
        %v685 = vld [vmem:[%s671 + $0x30] sm:$0xff]
        %v686 = vld [vmem:[%s671 + $0x38] sm:$0xff]
        %v687 = vpack.c.bf16 %v680, %v679
        %v688 = vpack.c.bf16 %v682, %v681
        %v689 = vpack.c.bf16 %v684, %v683
        %v690 = vpack.c.bf16 %v686, %v685
        %v691 = vld [vmem:[%s2] sm:$0xf]
        %vm692 = vcmask 64512
        %v694 = vsel %vm692, %v687, 0
        %v697 = vsel %vm692, %v688, 0
        %v700 = vsel %vm692, %v689, 0
        %v703 = vsel %vm692, %v690, 0
        %vm705 = vcmask 1043456
        %v707 = vsel %vm705, %v691, 0
        %709 = vmatprep.subr.bf16.mxu0 0
        %710 = vmatpush1.bf16.msra.mxu0 0
        %711 = vmatprep.subr.bf16.mxu0 0
        %712 = vmatpush1.bf16.msra.mxu0 0
        %713 = vmatprep.subr.bf16.mxu0 0
        %714 = vmatpush1.bf16.msra.mxu0 0
        %715 = vmatprep.subr.bf16.mxu0 0
        %716 = vmatpush1.bf16.msra.mxu0 0
        %717 = vmatprep.subr.bf16.mxu0 0
        %718 = vmatpush1.bf16.msra.mxu0 0
        %719 = vmatprep.subr.bf16.mxu0 0
        %720 = vmatpush1.bf16.msra.mxu0 0
        %721 = vmatprep.subr.bf16.mxu0 0
        %722 = vmatpush1.bf16.msra.mxu0 0
        %723 = vmatprep.subr.bf16.mxu0 0
        %724 = vmatpush1.bf16.msra.mxu0 %v707
        %725 = vmatprep.subr.bf16.mxu0 0
        %726 = vmatpush2.bf16.msra.mxu0 0
        %727 = vmatprep.subr.bf16.mxu0 0
        %728 = vmatpush2.bf16.msra.mxu0 0
        %729 = vmatprep.subr.bf16.mxu0 0
        %730 = vmatpush2.bf16.msra.mxu0 0
        %731 = vmatprep.subr.bf16.mxu0 0
        %732 = vmatpush2.bf16.msra.mxu0 0
        %733 = vmatprep.subr.bf16.mxu0 0
        %734 = vmatpush2.bf16.msra.mxu0 0
        %735 = vmatprep.subr.bf16.mxu0 0
        %736 = vmatpush2.bf16.msra.mxu0 0
        %737 = vmatprep.subr.bf16.mxu0 0
        %738 = vmatpush2.bf16.msra.mxu0 0
        %739 = vmatprep.subr.bf16.mxu0 0
        %740 = vmatpush2.bf16.msra.mxu0 0
        %741 = vmatprep.mubr.bf16.mxu0 0
        %742 = vmatmul.mubr.bf16.gmra.mxu0 %v694
        %v743 = vpop.f32.mrf.mxu0
        %v744 = vadd.f32 0.0, %v743
        %v745 = vpop.f32.mrf.mxu0
        %v746 = vpop.f32.mrf.mxu0
        %v747 = vadd.f32 0.0, %v746
        %v748 = vpop.f32.mrf.mxu0
        %749 = vmatprep.mubr.bf16.mxu0 0
        %750 = vmatmul.mubr.bf16.gmra.mxu0 %v697
        %v751 = vpop.f32.mrf.mxu0
        %v752 = vadd.f32 0.0, %v751
        %v753 = vpop.f32.mrf.mxu0
        %v754 = vpop.f32.mrf.mxu0
        %v755 = vadd.f32 0.0, %v754
        %v756 = vpop.f32.mrf.mxu0
        %757 = vmatprep.mubr.bf16.mxu0 0
        %758 = vmatmul.mubr.bf16.gmra.mxu0 %v700
        %v759 = vpop.f32.mrf.mxu0
        %v760 = vadd.f32 0.0, %v759
        %v761 = vpop.f32.mrf.mxu0
        %v762 = vpop.f32.mrf.mxu0
        %v763 = vadd.f32 0.0, %v762
        %v764 = vpop.f32.mrf.mxu0
        %765 = vmatprep.mubr.bf16.mxu0 0
        %766 = vmatmul.mubr.bf16.gmra.mxu0 %v703
        %v767 = vpop.f32.mrf.mxu0
        %v768 = vadd.f32 0.0, %v767
        %v769 = vpop.f32.mrf.mxu0
        %v770 = vpop.f32.mrf.mxu0
        %v771 = vadd.f32 0.0, %v770
        %v772 = vpop.f32.mrf.mxu0
        %773 = vdwg.mxu0
        %v774 = vpack.c.bf16 %v747, %v744
        %v775 = vpack.c.bf16 %v755, %v752
        %v776 = vpack.c.bf16 %v763, %v760
        %v777 = vpack.c.bf16 %v771, %v768
        %v778 = vld [vmem:[%s3] sm:$0x1]
        %v780 = vpack.i.b16 %v778, %v778
        %v782 = vlaneseq
        %v783 = vshrl.u32 %v782, 7
        %v784 = vsub.s32 0, %v783
        %v785 = vrot.slane %v780, %v784
        %v786 = vadd.bf16 %v774, %v785
        %v787 = vadd.bf16 %v775, %v785
        %v788 = vadd.bf16 %v776, %v785
        %v789 = vadd.bf16 %v777, %v785
        %v790 = vmul.bf16 %v786, 1045249613
        %v791 = vmul.bf16 %v787, 1045249613
        %v792 = vmul.bf16 %v788, 1045249613
        %v793 = vmul.bf16 %v789, 1045249613
        %v794 = vmax.bf16 %v786, %v790
        %v795 = vmax.bf16 %v787, %v791
        %v796 = vmax.bf16 %v788, %v792
        %v797 = vmax.bf16 %v789, %v793
        %v798 = vld [vmem:[#allocation2] sm:$0xf]
        %v799 = vld [vmem:[#allocation2 + $0x4] sm:$0xf]
        %v800 = vld [vmem:[#allocation2 + $0x8] sm:$0xf]
        %v801 = vld [vmem:[#allocation2 + $0xc] sm:$0xf]
        %v802 = vld [vmem:[#allocation2 + $0x10] sm:$0xf]
        %v803 = vld [vmem:[#allocation2 + $0x14] sm:$0xf]
        %v804 = vld [vmem:[#allocation2 + $0x18] sm:$0xf]
        %v805 = vld [vmem:[#allocation2 + $0x1c] sm:$0xf]
        %v806 = vld [vmem:[#allocation2 + $0x20] sm:$0xf]
        %v807 = vld [vmem:[#allocation2 + $0x24] sm:$0xf]
        %v808 = vld [vmem:[#allocation2 + $0x28] sm:$0xf]
        %v809 = vld [vmem:[#allocation2 + $0x2c] sm:$0xf]
        %v810 = vld [vmem:[#allocation2 + $0x30] sm:$0xf]
        %v811 = vld [vmem:[#allocation2 + $0x34] sm:$0xf]
        %v812 = vld [vmem:[#allocation2 + $0x38] sm:$0xf]
        %v813 = vld [vmem:[#allocation2 + $0x3c] sm:$0xf]
        %v830 = vunpack.c.l.b16 %v798
        %v831 = vunpack.c.l.b16 %v799
        %v832 = vunpack.c.l.b16 %v800
        %v833 = vunpack.c.l.b16 %v801
        %v834 = vunpack.c.l.b16 %v802
        %v835 = vunpack.c.l.b16 %v803
        %v836 = vunpack.c.l.b16 %v804
        %v837 = vunpack.c.l.b16 %v805
        %v838 = vunpack.c.l.b16 %v806
        %v839 = vunpack.c.l.b16 %v807
        %v840 = vunpack.c.l.b16 %v808
        %v841 = vunpack.c.l.b16 %v809
        %v842 = vunpack.c.l.b16 %v810
        %v843 = vunpack.c.l.b16 %v811
        %v844 = vunpack.c.l.b16 %v812
        %v845 = vunpack.c.l.b16 %v813
        %v846 = vpack.c.b16 %v831, %v830
        %v847 = vpack.c.b16 %v833, %v832
        %v848 = vpack.c.b16 %v835, %v834
        %v849 = vpack.c.b16 %v837, %v836
        %v850 = vpack.c.b16 %v839, %v838
        %v851 = vpack.c.b16 %v841, %v840
        %v852 = vpack.c.b16 %v843, %v842
        %v853 = vpack.c.b16 %v845, %v844
        %862 = vmatprep.subr.bf16.mxu0 0
        %863 = vmatpush1.bf16.msra.mxu0 %v853
        %864 = vmatprep.subr.bf16.mxu0 0
        %865 = vmatpush1.bf16.msra.mxu0 %v852
        %866 = vmatprep.subr.bf16.mxu0 0
        %867 = vmatpush1.bf16.msra.mxu0 %v851
        %868 = vmatprep.subr.bf16.mxu0 0
        %869 = vmatpush1.bf16.msra.mxu0 %v850
        %870 = vmatprep.subr.bf16.mxu0 0
        %871 = vmatpush1.bf16.msra.mxu0 %v849
        %872 = vmatprep.subr.bf16.mxu0 0
        %873 = vmatpush1.bf16.msra.mxu0 %v848
        %874 = vmatprep.subr.bf16.mxu0 0
        %875 = vmatpush1.bf16.msra.mxu0 %v847
        %876 = vmatprep.subr.bf16.mxu0 0
        %877 = vmatpush1.bf16.msra.mxu0 %v846
        %878 = vmatprep.subr.bf16.mxu0 0
        %879 = vmatpush2.bf16.msra.mxu0 0
        %880 = vmatprep.subr.bf16.mxu0 0
        %881 = vmatpush2.bf16.msra.mxu0 0
        %882 = vmatprep.subr.bf16.mxu0 0
        %883 = vmatpush2.bf16.msra.mxu0 0
        %884 = vmatprep.subr.bf16.mxu0 0
        %885 = vmatpush2.bf16.msra.mxu0 0
        %886 = vmatprep.subr.bf16.mxu0 0
        %887 = vmatpush2.bf16.msra.mxu0 0
        %888 = vmatprep.subr.bf16.mxu0 0
        %889 = vmatpush2.bf16.msra.mxu0 0
        %890 = vmatprep.subr.bf16.mxu0 0
        %891 = vmatpush2.bf16.msra.mxu0 0
        %892 = vmatprep.subr.bf16.mxu0 0
        %893 = vmatpush2.bf16.msra.mxu0 0
        %894 = vmatprep.mubr.bf16.mxu0 0
        %895 = vmatmul.mubr.bf16.gmra.mxu0 %v794
        %v896 = vpop.f32.mrf.mxu0
        %v897 = vadd.f32 0.0, %v896
        %v898 = vpop.f32.mrf.mxu0
        %v899 = vpop.f32.mrf.mxu0
        %v900 = vadd.f32 0.0, %v899
        %v901 = vpop.f32.mrf.mxu0
        %902 = vmatprep.mubr.bf16.mxu0 0
        %903 = vmatmul.mubr.bf16.gmra.mxu0 %v795
        %v904 = vpop.f32.mrf.mxu0
        %v905 = vadd.f32 0.0, %v904
        %v906 = vpop.f32.mrf.mxu0
        %v907 = vpop.f32.mrf.mxu0
        %v908 = vadd.f32 0.0, %v907
        %v909 = vpop.f32.mrf.mxu0
        %910 = vmatprep.mubr.bf16.mxu0 0
        %911 = vmatmul.mubr.bf16.gmra.mxu0 %v796
        %v912 = vpop.f32.mrf.mxu0
        %v913 = vadd.f32 0.0, %v912
        %v914 = vpop.f32.mrf.mxu0
        %v915 = vpop.f32.mrf.mxu0
        %v916 = vadd.f32 0.0, %v915
        %v917 = vpop.f32.mrf.mxu0
        %918 = vmatprep.mubr.bf16.mxu0 0
        %919 = vmatmul.mubr.bf16.gmra.mxu0 %v797
        %v920 = vpop.f32.mrf.mxu0
        %v921 = vadd.f32 0.0, %v920
        %v922 = vpop.f32.mrf.mxu0
        %v923 = vpop.f32.mrf.mxu0
        %v924 = vadd.f32 0.0, %v923
        %v925 = vpop.f32.mrf.mxu0
        %926 = vdwg.mxu0
        %v927 = vpack.c.bf16 %v900, %v897
        %v928 = vpack.c.bf16 %v908, %v905
        %v929 = vpack.c.bf16 %v916, %v913
        %v930 = vpack.c.bf16 %v924, %v921
        %v931 = vld [vmem:[%s5] sm:$0x1]
        %v933 = vpack.i.b16 %v931, %v931
        %v935 = vlaneseq
        %v936 = vshrl.u32 %v935, 7
        %v937 = vsub.s32 0, %v936
        %v938 = vrot.slane %v933, %v937
        %v939 = vadd.bf16 %v927, %v938
        %v940 = vadd.bf16 %v928, %v938
        %v941 = vadd.bf16 %v929, %v938
        %v942 = vadd.bf16 %v930, %v938
        %v943 = vmul.bf16 %v939, 1045249613
        %v944 = vmul.bf16 %v940, 1045249613
        %v945 = vmul.bf16 %v941, 1045249613
        %v946 = vmul.bf16 %v942, 1045249613
        %v947 = vmax.bf16 %v939, %v943
        %v948 = vmax.bf16 %v940, %v944
        %v949 = vmax.bf16 %v941, %v945
        %v950 = vmax.bf16 %v942, %v946
        %v951 = vld [vmem:[%s6] sm:$0xff]
        %v952 = vld [vmem:[%s6 + $0x8] sm:$0xff]
        %v953 = vld [vmem:[%s6 + $0x10] sm:$0xff]
        %v954 = vld [vmem:[%s6 + $0x18] sm:$0xff]
        %v955 = vld [vmem:[%s6 + $0x20] sm:$0xff]
        %v956 = vld [vmem:[%s6 + $0x28] sm:$0xff]
        %v957 = vld [vmem:[%s6 + $0x30] sm:$0xff]
        %v958 = vld [vmem:[%s6 + $0x38] sm:$0xff]
        %v959 = vld [vmem:[%s6 + $0x40] sm:$0xff]
        %v960 = vld [vmem:[%s6 + $0x48] sm:$0xff]
        %v961 = vld [vmem:[%s6 + $0x50] sm:$0xff]
        %v962 = vld [vmem:[%s6 + $0x58] sm:$0xff]
        %v963 = vld [vmem:[%s6 + $0x60] sm:$0xff]
        %v964 = vld [vmem:[%s6 + $0x68] sm:$0xff]
        %v965 = vld [vmem:[%s6 + $0x70] sm:$0xff]
        %v966 = vld [vmem:[%s6 + $0x78] sm:$0xff]
        %v967 = vld [vmem:[%s7] sm:$0x3]
        %v969 = vlaneseq
        %v970 = vshrl.u32 %v969, 7
        %v971 = vsub.s32 0, %v970
        %v972 = vrot.slane %v967, %v971
        %v973 = vlaneseq
        %v974 = vshrl.u32 %v973, 7
        %v975 = vsub.s32 1, %v974
        %v976 = vrot.slane %v967, %v975
        %v995 = vunpack.c.l.b16 %v951
        %v996 = vunpack.c.h.b16 %v951
        %v997 = vunpack.c.l.b16 %v952
        %v998 = vunpack.c.h.b16 %v952
        %v999 = vunpack.c.l.b16 %v953
        %v1000 = vunpack.c.h.b16 %v953
        %v1001 = vunpack.c.l.b16 %v954
        %v1002 = vunpack.c.h.b16 %v954
        %v1003 = vunpack.c.l.b16 %v955
        %v1004 = vunpack.c.h.b16 %v955
        %v1005 = vunpack.c.l.b16 %v956
        %v1006 = vunpack.c.h.b16 %v956
        %v1007 = vunpack.c.l.b16 %v957
        %v1008 = vunpack.c.h.b16 %v957
        %v1009 = vunpack.c.l.b16 %v958
        %v1010 = vunpack.c.h.b16 %v958
        %v1011 = vunpack.c.l.b16 %v959
        %v1012 = vunpack.c.h.b16 %v959
        %v1013 = vunpack.c.l.b16 %v960
        %v1014 = vunpack.c.h.b16 %v960
        %v1015 = vunpack.c.l.b16 %v961
        %v1016 = vunpack.c.h.b16 %v961
        %v1017 = vunpack.c.l.b16 %v962
        %v1018 = vunpack.c.h.b16 %v962
        %v1019 = vunpack.c.l.b16 %v963
        %v1020 = vunpack.c.h.b16 %v963
        %v1021 = vunpack.c.l.b16 %v964
        %v1022 = vunpack.c.h.b16 %v964
        %v1023 = vunpack.c.l.b16 %v965
        %v1024 = vunpack.c.h.b16 %v965
        %v1025 = vunpack.c.l.b16 %v966
        %v1026 = vunpack.c.h.b16 %v966
        %v1027 = vpack.c.b16 %v997, %v995
        %v1028 = vpack.c.b16 %v998, %v996
        %v1029 = vpack.c.b16 %v1001, %v999
        %v1030 = vpack.c.b16 %v1002, %v1000
        %v1031 = vpack.c.b16 %v1005, %v1003
        %v1032 = vpack.c.b16 %v1006, %v1004
        %v1033 = vpack.c.b16 %v1009, %v1007
        %v1034 = vpack.c.b16 %v1010, %v1008
        %v1035 = vpack.c.b16 %v1013, %v1011
        %v1036 = vpack.c.b16 %v1014, %v1012
        %v1037 = vpack.c.b16 %v1017, %v1015
        %v1038 = vpack.c.b16 %v1018, %v1016
        %v1039 = vpack.c.b16 %v1021, %v1019
        %v1040 = vpack.c.b16 %v1022, %v1020
        %v1041 = vpack.c.b16 %v1025, %v1023
        %v1042 = vpack.c.b16 %v1026, %v1024
        %1059 = vmatprep.subr.bf16.mxu0 %v1042
        %1060 = vmatpush1.bf16.msra.mxu0 %v1041
        %1061 = vmatprep.subr.bf16.mxu0 %v1040
        %1062 = vmatpush1.bf16.msra.mxu0 %v1039
        %1063 = vmatprep.subr.bf16.mxu0 %v1038
        %1064 = vmatpush1.bf16.msra.mxu0 %v1037
        %1065 = vmatprep.subr.bf16.mxu0 %v1036
        %1066 = vmatpush1.bf16.msra.mxu0 %v1035
        %1067 = vmatprep.subr.bf16.mxu0 %v1034
        %1068 = vmatpush1.bf16.msra.mxu0 %v1033
        %1069 = vmatprep.subr.bf16.mxu0 %v1032
        %1070 = vmatpush1.bf16.msra.mxu0 %v1031
        %1071 = vmatprep.subr.bf16.mxu0 %v1030
        %1072 = vmatpush1.bf16.msra.mxu0 %v1029
        %1073 = vmatprep.subr.bf16.mxu0 %v1028
        %1074 = vmatpush1.bf16.msra.mxu0 %v1027
        %1075 = vmatprep.subr.bf16.mxu0 0
        %1076 = vmatpush2.bf16.msra.mxu0 0
        %1077 = vmatprep.subr.bf16.mxu0 0
        %1078 = vmatpush2.bf16.msra.mxu0 0
        %1079 = vmatprep.subr.bf16.mxu0 0
        %1080 = vmatpush2.bf16.msra.mxu0 0
        %1081 = vmatprep.subr.bf16.mxu0 0
        %1082 = vmatpush2.bf16.msra.mxu0 0
        %1083 = vmatprep.subr.bf16.mxu0 0
        %1084 = vmatpush2.bf16.msra.mxu0 0
        %1085 = vmatprep.subr.bf16.mxu0 0
        %1086 = vmatpush2.bf16.msra.mxu0 0
        %1087 = vmatprep.subr.bf16.mxu0 0
        %1088 = vmatpush2.bf16.msra.mxu0 0
        %1089 = vmatprep.subr.bf16.mxu0 0
        %1090 = vmatpush2.bf16.msra.mxu0 0
        %1091 = vmatprep.mubr.bf16.mxu0 0
        %1092 = vmatmul.mubr.bf16.gmra.mxu0 %v947
        %v1093 = vpop.f32.mrf.mxu0
        %v1094 = vadd.f32 %v972, %v1093
        %v1095 = vpop.f32.mrf.mxu0
        %v1096 = vadd.f32 %v976, %v1095
        %v1097 = vpop.f32.mrf.mxu0
        %v1098 = vadd.f32 %v972, %v1097
        %v1099 = vpop.f32.mrf.mxu0
        %v1100 = vadd.f32 %v976, %v1099
        %1101 = vmatprep.mubr.bf16.mxu0 0
        %1102 = vmatmul.mubr.bf16.gmra.mxu0 %v948
        %v1103 = vpop.f32.mrf.mxu0
        %v1104 = vadd.f32 %v972, %v1103
        %v1105 = vpop.f32.mrf.mxu0
        %v1106 = vadd.f32 %v976, %v1105
        %v1107 = vpop.f32.mrf.mxu0
        %v1108 = vadd.f32 %v972, %v1107
        %v1109 = vpop.f32.mrf.mxu0
        %v1110 = vadd.f32 %v976, %v1109
        %1111 = vmatprep.mubr.bf16.mxu0 0
        %1112 = vmatmul.mubr.bf16.gmra.mxu0 %v949
        %v1113 = vpop.f32.mrf.mxu0
        %v1114 = vadd.f32 %v972, %v1113
        %v1115 = vpop.f32.mrf.mxu0
        %v1116 = vadd.f32 %v976, %v1115
        %v1117 = vpop.f32.mrf.mxu0
        %v1118 = vadd.f32 %v972, %v1117
        %v1119 = vpop.f32.mrf.mxu0
        %v1120 = vadd.f32 %v976, %v1119
        %1121 = vmatprep.mubr.bf16.mxu0 0
        %1122 = vmatmul.mubr.bf16.gmra.mxu0 %v950
        %v1123 = vpop.f32.mrf.mxu0
        %v1124 = vadd.f32 %v972, %v1123
        %v1125 = vpop.f32.mrf.mxu0
        %v1126 = vadd.f32 %v976, %v1125
        %v1127 = vpop.f32.mrf.mxu0
        %v1128 = vadd.f32 %v972, %v1127
        %v1129 = vpop.f32.mrf.mxu0
        %v1130 = vadd.f32 %v976, %v1129
        %1131 = vdwg.mxu0
        %v1132 = vmul.f32 %v1094, 0.2
        %v1133 = vmul.f32 %v1096, 0.2
        %v1134 = vmul.f32 %v1098, 0.2
        %v1135 = vmul.f32 %v1100, 0.2
        %v1136 = vmul.f32 %v1104, 0.2
        %v1137 = vmul.f32 %v1106, 0.2
        %v1138 = vmul.f32 %v1108, 0.2
        %v1139 = vmul.f32 %v1110, 0.2
        %v1140 = vmul.f32 %v1114, 0.2
        %v1141 = vmul.f32 %v1116, 0.2
        %v1142 = vmul.f32 %v1118, 0.2
        %v1143 = vmul.f32 %v1120, 0.2
        %v1144 = vmul.f32 %v1124, 0.2
        %v1145 = vmul.f32 %v1126, 0.2
        %v1146 = vmul.f32 %v1128, 0.2
        %v1147 = vmul.f32 %v1130, 0.2
        %v1148 = vmax.f32 %v1094, %v1132
        %v1149 = vmax.f32 %v1096, %v1133
        %v1150 = vmax.f32 %v1098, %v1134
        %v1151 = vmax.f32 %v1100, %v1135
        %v1152 = vmax.f32 %v1104, %v1136
        %v1153 = vmax.f32 %v1106, %v1137
        %v1154 = vmax.f32 %v1108, %v1138
        %v1155 = vmax.f32 %v1110, %v1139
        %v1156 = vmax.f32 %v1114, %v1140
        %v1157 = vmax.f32 %v1116, %v1141
        %v1158 = vmax.f32 %v1118, %v1142
        %v1159 = vmax.f32 %v1120, %v1143
        %v1160 = vmax.f32 %v1124, %v1144
        %v1161 = vmax.f32 %v1126, %v1145
        %v1162 = vmax.f32 %v1128, %v1146
        %v1163 = vmax.f32 %v1130, %v1147
        %vm1164 = vcmask 1042432
        %v1165 = vsel %vm1164, %v1148, 0.0
        %v1166 = vrot.slane %v1165, 4
        %v1167 = vadd.f32 %v1165, %v1166
        %v1168 = vrot.slane %v1167, 2
        %v1169 = vadd.f32 %v1167, %v1168
        %v1170 = vrot.slane %v1169, 1
        %v1171 = vadd.f32 %v1169, %v1170
        %v1172 = vsel %vm1164, %v1149, 0.0
        %v1173 = vrot.slane %v1172, 4
        %v1174 = vadd.f32 %v1172, %v1173
        %v1175 = vrot.slane %v1174, 2
        %v1176 = vadd.f32 %v1174, %v1175
        %v1177 = vrot.slane %v1176, 1
        %v1178 = vadd.f32 %v1176, %v1177
        %v1179 = vsel %vm1164, %v1150, 0.0
        %v1180 = vrot.slane %v1179, 4
        %v1181 = vadd.f32 %v1179, %v1180
        %v1182 = vrot.slane %v1181, 2
        %v1183 = vadd.f32 %v1181, %v1182
        %v1184 = vrot.slane %v1183, 1
        %v1185 = vadd.f32 %v1183, %v1184
        %v1186 = vsel %vm1164, %v1151, 0.0
        %v1187 = vrot.slane %v1186, 4
        %v1188 = vadd.f32 %v1186, %v1187
        %v1189 = vrot.slane %v1188, 2
        %v1190 = vadd.f32 %v1188, %v1189
        %v1191 = vrot.slane %v1190, 1
        %v1192 = vadd.f32 %v1190, %v1191
        %v1193 = vsel %vm1164, %v1152, 0.0
        %v1194 = vrot.slane %v1193, 4
        %v1195 = vadd.f32 %v1193, %v1194
        %v1196 = vrot.slane %v1195, 2
        %v1197 = vadd.f32 %v1195, %v1196
        %v1198 = vrot.slane %v1197, 1
        %v1199 = vadd.f32 %v1197, %v1198
        %v1200 = vsel %vm1164, %v1153, 0.0
        %v1201 = vrot.slane %v1200, 4
        %v1202 = vadd.f32 %v1200, %v1201
        %v1203 = vrot.slane %v1202, 2
        %v1204 = vadd.f32 %v1202, %v1203
        %v1205 = vrot.slane %v1204, 1
        %v1206 = vadd.f32 %v1204, %v1205
        %v1207 = vsel %vm1164, %v1154, 0.0
        %v1208 = vrot.slane %v1207, 4
        %v1209 = vadd.f32 %v1207, %v1208
        %v1210 = vrot.slane %v1209, 2
        %v1211 = vadd.f32 %v1209, %v1210
        %v1212 = vrot.slane %v1211, 1
        %v1213 = vadd.f32 %v1211, %v1212
        %v1214 = vsel %vm1164, %v1155, 0.0
        %v1215 = vrot.slane %v1214, 4
        %v1216 = vadd.f32 %v1214, %v1215
        %v1217 = vrot.slane %v1216, 2
        %v1218 = vadd.f32 %v1216, %v1217
        %v1219 = vrot.slane %v1218, 1
        %v1220 = vadd.f32 %v1218, %v1219
        %v1221 = vsel %vm1164, %v1156, 0.0
        %v1222 = vrot.slane %v1221, 4
        %v1223 = vadd.f32 %v1221, %v1222
        %v1224 = vrot.slane %v1223, 2
        %v1225 = vadd.f32 %v1223, %v1224
        %v1226 = vrot.slane %v1225, 1
        %v1227 = vadd.f32 %v1225, %v1226
        %v1228 = vsel %vm1164, %v1157, 0.0
        %v1229 = vrot.slane %v1228, 4
        %v1230 = vadd.f32 %v1228, %v1229
        %v1231 = vrot.slane %v1230, 2
        %v1232 = vadd.f32 %v1230, %v1231
        %v1233 = vrot.slane %v1232, 1
        %v1234 = vadd.f32 %v1232, %v1233
        %v1235 = vsel %vm1164, %v1158, 0.0
        %v1236 = vrot.slane %v1235, 4
        %v1237 = vadd.f32 %v1235, %v1236
        %v1238 = vrot.slane %v1237, 2
        %v1239 = vadd.f32 %v1237, %v1238
        %v1240 = vrot.slane %v1239, 1
        %v1241 = vadd.f32 %v1239, %v1240
        %v1242 = vsel %vm1164, %v1159, 0.0
        %v1243 = vrot.slane %v1242, 4
        %v1244 = vadd.f32 %v1242, %v1243
        %v1245 = vrot.slane %v1244, 2
        %v1246 = vadd.f32 %v1244, %v1245
        %v1247 = vrot.slane %v1246, 1
        %v1248 = vadd.f32 %v1246, %v1247
        %v1249 = vsel %vm1164, %v1160, 0.0
        %v1250 = vrot.slane %v1249, 4
        %v1251 = vadd.f32 %v1249, %v1250
        %v1252 = vrot.slane %v1251, 2
        %v1253 = vadd.f32 %v1251, %v1252
        %v1254 = vrot.slane %v1253, 1
        %v1255 = vadd.f32 %v1253, %v1254
        %v1256 = vsel %vm1164, %v1161, 0.0
        %v1257 = vrot.slane %v1256, 4
        %v1258 = vadd.f32 %v1256, %v1257
        %v1259 = vrot.slane %v1258, 2
        %v1260 = vadd.f32 %v1258, %v1259
        %v1261 = vrot.slane %v1260, 1
        %v1262 = vadd.f32 %v1260, %v1261
        %v1263 = vsel %vm1164, %v1162, 0.0
        %v1264 = vrot.slane %v1263, 4
        %v1265 = vadd.f32 %v1263, %v1264
        %v1266 = vrot.slane %v1265, 2
        %v1267 = vadd.f32 %v1265, %v1266
        %v1268 = vrot.slane %v1267, 1
        %v1269 = vadd.f32 %v1267, %v1268
        %v1270 = vsel %vm1164, %v1163, 0.0
        %v1271 = vrot.slane %v1270, 4
        %v1272 = vadd.f32 %v1270, %v1271
        %v1273 = vrot.slane %v1272, 2
        %v1274 = vadd.f32 %v1272, %v1273
        %v1275 = vrot.slane %v1274, 1
        %v1276 = vadd.f32 %v1274, %v1275
        %v1293 = vrot.slane %v1148, 3
        %v1294 = vrot.slane %v1149, 3
        %v1295 = vrot.slane %v1150, 3
        %v1296 = vrot.slane %v1151, 3
        %v1297 = vrot.slane %v1152, 3
        %v1298 = vrot.slane %v1153, 3
        %v1299 = vrot.slane %v1154, 3
        %v1300 = vrot.slane %v1155, 3
        %v1301 = vrot.slane %v1156, 3
        %v1302 = vrot.slane %v1157, 3
        %v1303 = vrot.slane %v1158, 3
        %v1304 = vrot.slane %v1159, 3
        %v1305 = vrot.slane %v1160, 3
        %v1306 = vrot.slane %v1161, 3
        %v1307 = vrot.slane %v1162, 3
        %v1308 = vrot.slane %v1163, 3
        %vm1325 = vcmask 1044480
        %v1326 = vsel %vm1325, %v1293, 0.0
        %v1327 = vrot.slane %v1326, 4
        %v1328 = vadd.f32 %v1326, %v1327
        %v1329 = vrot.slane %v1328, 2
        %v1330 = vadd.f32 %v1328, %v1329
        %v1331 = vrot.slane %v1330, 1
        %v1332 = vadd.f32 %v1330, %v1331
        %v1333 = vsel %vm1325, %v1294, 0.0
        %v1334 = vrot.slane %v1333, 4
        %v1335 = vadd.f32 %v1333, %v1334
        %v1336 = vrot.slane %v1335, 2
        %v1337 = vadd.f32 %v1335, %v1336
        %v1338 = vrot.slane %v1337, 1
        %v1339 = vadd.f32 %v1337, %v1338
        %v1340 = vsel %vm1325, %v1295, 0.0
        %v1341 = vrot.slane %v1340, 4
        %v1342 = vadd.f32 %v1340, %v1341
        %v1343 = vrot.slane %v1342, 2
        %v1344 = vadd.f32 %v1342, %v1343
        %v1345 = vrot.slane %v1344, 1
        %v1346 = vadd.f32 %v1344, %v1345
        %v1347 = vsel %vm1325, %v1296, 0.0
        %v1348 = vrot.slane %v1347, 4
        %v1349 = vadd.f32 %v1347, %v1348
        %v1350 = vrot.slane %v1349, 2
        %v1351 = vadd.f32 %v1349, %v1350
        %v1352 = vrot.slane %v1351, 1
        %v1353 = vadd.f32 %v1351, %v1352
        %v1354 = vsel %vm1325, %v1297, 0.0
        %v1355 = vrot.slane %v1354, 4
        %v1356 = vadd.f32 %v1354, %v1355
        %v1357 = vrot.slane %v1356, 2
        %v1358 = vadd.f32 %v1356, %v1357
        %v1359 = vrot.slane %v1358, 1
        %v1360 = vadd.f32 %v1358, %v1359
        %v1361 = vsel %vm1325, %v1298, 0.0
        %v1362 = vrot.slane %v1361, 4
        %v1363 = vadd.f32 %v1361, %v1362
        %v1364 = vrot.slane %v1363, 2
        %v1365 = vadd.f32 %v1363, %v1364
        %v1366 = vrot.slane %v1365, 1
        %v1367 = vadd.f32 %v1365, %v1366
        %v1368 = vsel %vm1325, %v1299, 0.0
        %v1369 = vrot.slane %v1368, 4
        %v1370 = vadd.f32 %v1368, %v1369
        %v1371 = vrot.slane %v1370, 2
        %v1372 = vadd.f32 %v1370, %v1371
        %v1373 = vrot.slane %v1372, 1
        %v1374 = vadd.f32 %v1372, %v1373
        %v1375 = vsel %vm1325, %v1300, 0.0
        %v1376 = vrot.slane %v1375, 4
        %v1377 = vadd.f32 %v1375, %v1376
        %v1378 = vrot.slane %v1377, 2
        %v1379 = vadd.f32 %v1377, %v1378
        %v1380 = vrot.slane %v1379, 1
        %v1381 = vadd.f32 %v1379, %v1380
        %v1382 = vsel %vm1325, %v1301, 0.0
        %v1383 = vrot.slane %v1382, 4
        %v1384 = vadd.f32 %v1382, %v1383
        %v1385 = vrot.slane %v1384, 2
        %v1386 = vadd.f32 %v1384, %v1385
        %v1387 = vrot.slane %v1386, 1
        %v1388 = vadd.f32 %v1386, %v1387
        %v1389 = vsel %vm1325, %v1302, 0.0
        %v1390 = vrot.slane %v1389, 4
        %v1391 = vadd.f32 %v1389, %v1390
        %v1392 = vrot.slane %v1391, 2
        %v1393 = vadd.f32 %v1391, %v1392
        %v1394 = vrot.slane %v1393, 1
        %v1395 = vadd.f32 %v1393, %v1394
        %v1396 = vsel %vm1325, %v1303, 0.0
        %v1397 = vrot.slane %v1396, 4
        %v1398 = vadd.f32 %v1396, %v1397
        %v1399 = vrot.slane %v1398, 2
        %v1400 = vadd.f32 %v1398, %v1399
        %v1401 = vrot.slane %v1400, 1
        %v1402 = vadd.f32 %v1400, %v1401
        %v1403 = vsel %vm1325, %v1304, 0.0
        %v1404 = vrot.slane %v1403, 4
        %v1405 = vadd.f32 %v1403, %v1404
        %v1406 = vrot.slane %v1405, 2
        %v1407 = vadd.f32 %v1405, %v1406
        %v1408 = vrot.slane %v1407, 1
        %v1409 = vadd.f32 %v1407, %v1408
        %v1410 = vsel %vm1325, %v1305, 0.0
        %v1411 = vrot.slane %v1410, 4
        %v1412 = vadd.f32 %v1410, %v1411
        %v1413 = vrot.slane %v1412, 2
        %v1414 = vadd.f32 %v1412, %v1413
        %v1415 = vrot.slane %v1414, 1
        %v1416 = vadd.f32 %v1414, %v1415
        %v1417 = vsel %vm1325, %v1306, 0.0
        %v1418 = vrot.slane %v1417, 4
        %v1419 = vadd.f32 %v1417, %v1418
        %v1420 = vrot.slane %v1419, 2
        %v1421 = vadd.f32 %v1419, %v1420
        %v1422 = vrot.slane %v1421, 1
        %v1423 = vadd.f32 %v1421, %v1422
        %v1424 = vsel %vm1325, %v1307, 0.0
        %v1425 = vrot.slane %v1424, 4
        %v1426 = vadd.f32 %v1424, %v1425
        %v1427 = vrot.slane %v1426, 2
        %v1428 = vadd.f32 %v1426, %v1427
        %v1429 = vrot.slane %v1428, 1
        %v1430 = vadd.f32 %v1428, %v1429
        %v1431 = vsel %vm1325, %v1308, 0.0
        %v1432 = vrot.slane %v1431, 4
        %v1433 = vadd.f32 %v1431, %v1432
        %v1434 = vrot.slane %v1433, 2
        %v1435 = vadd.f32 %v1433, %v1434
        %v1436 = vrot.slane %v1435, 1
        %v1437 = vadd.f32 %v1435, %v1436
        %vm1454 = vcmask 1041409
        %v1455 = vsel %vm1454, %v1185, %v1171
        %vm1456 = vcmask 1042434
        %v1457 = vsel %vm1456, %v1199, %v1455
        %vm1458 = vcmask 1043459
        %v1459 = vsel %vm1458, %v1213, %v1457
        %vm1460 = vcmask 1044484
        %v1461 = vsel %vm1460, %v1227, %v1459
        %vm1462 = vcmask 1045509
        %v1463 = vsel %vm1462, %v1241, %v1461
        %vm1464 = vcmask 1046534
        %v1465 = vsel %vm1464, %v1255, %v1463
        %vm1466 = vcmask 1047559
        %v1467 = vsel %vm1466, %v1269, %v1465
        %v1468 = vsel %vm1454, %v1192, %v1178
        %v1469 = vsel %vm1456, %v1206, %v1468
        %v1470 = vsel %vm1458, %v1220, %v1469
        %v1471 = vsel %vm1460, %v1234, %v1470
        %v1472 = vsel %vm1462, %v1248, %v1471
        %v1473 = vsel %vm1464, %v1262, %v1472
        %v1474 = vsel %vm1466, %v1276, %v1473
        %v1493 = vsel %vm1454, %v1346, %v1332
        %v1494 = vsel %vm1456, %v1360, %v1493
        %v1495 = vsel %vm1458, %v1374, %v1494
        %v1496 = vsel %vm1460, %v1388, %v1495
        %v1497 = vsel %vm1462, %v1402, %v1496
        %v1498 = vsel %vm1464, %v1416, %v1497
        %v1499 = vsel %vm1466, %v1430, %v1498
        %v1500 = vsel %vm1454, %v1353, %v1339
        %v1501 = vsel %vm1456, %v1367, %v1500
        %v1502 = vsel %vm1458, %v1381, %v1501
        %v1503 = vsel %vm1460, %v1395, %v1502
        %v1504 = vsel %vm1462, %v1409, %v1503
        %v1505 = vsel %vm1464, %v1423, %v1504
        %v1506 = vsel %vm1466, %v1437, %v1505
        %v1509 = vpack.c.bf16 %v1467, %v1467
        %v1510 = vpack.c.bf16 %v1474, %v1474
        %v1511 = vpack.c.bf16 %v1499, %v1499
        %v1512 = vpack.c.bf16 %v1506, %v1506
        %v1513 = vld [vmem:[%s676] sm:$0xff]
        %v1514 = vld [vmem:[%s8] sm:$0x3f]
        %v1515 = vld [vmem:[%s9] sm:$0x1]
        %v1517 = vlaneseq
        %v1518 = vshrl.u32 %v1517, 7
        %v1519 = vsub.s32 0, %v1518
        %v1520 = vrot.slane %v1515, %v1519
        %vm1522 = vcmask 48128
        %v1524 = vsel %vm1522, %v1513, 0
        %vm1526 = vcmask 1045504
        %v1528 = vsel %vm1526, %v1514, 0
        %1530 = vmatprep.subr.mxu0 0.0
        %1531 = vmatpush1.msra.mxu0 0.0
        %1532 = vmatprep.subr.mxu0 0.0
        %1533 = vmatpush1.msra.mxu0 0.0
        %1534 = vmatprep.subr.mxu0 0.0
        %1535 = vmatpush1.msra.mxu0 0.0
        %1536 = vmatprep.subr.mxu0 0.0
        %1537 = vmatpush1.msra.mxu0 0.0
        %1538 = vmatprep.subr.mxu0 0.0
        %1539 = vmatpush1.msra.mxu0 0.0
        %1540 = vmatprep.subr.mxu0 0.0
        %1541 = vmatpush1.msra.mxu0 0.0
        %1542 = vmatprep.subr.mxu0 0.0
        %1543 = vmatpush1.msra.mxu0 0.0
        %1544 = vmatprep.subr.mxu0 0.0
        %1545 = vmatpush1.msra.mxu0 0.0
        %1546 = vmatprep.subr.mxu0 0.0
        %1547 = vmatpush1.msra.mxu0 0.0
        %1548 = vmatprep.subr.mxu0 0.0
        %1549 = vmatpush1.msra.mxu0 0.0
        %1550 = vmatprep.subr.mxu0 0.0
        %1551 = vmatpush1.msra.mxu0 0.0
        %1552 = vmatprep.subr.mxu0 0.0
        %1553 = vmatpush1.msra.mxu0 0.0
        %1554 = vmatprep.subr.mxu0 0.0
        %1555 = vmatpush1.msra.mxu0 0.0
        %1556 = vmatprep.subr.mxu0 0.0
        %1557 = vmatpush1.msra.mxu0 0.0
        %1558 = vmatprep.subr.mxu0 0.0
        %1559 = vmatpush1.msra.mxu0 0.0
        %1560 = vmatprep.subr.mxu0 0.0
        %1561 = vmatpush1.msra.mxu0 %v1528
        %1562 = vmatprep.subr.mxu0 0.0
        %1563 = vmatpush2.msra.mxu0 0.0
        %1564 = vmatprep.subr.mxu0 0.0
        %1565 = vmatpush2.msra.mxu0 0.0
        %1566 = vmatprep.subr.mxu0 0.0
        %1567 = vmatpush2.msra.mxu0 0.0
        %1568 = vmatprep.subr.mxu0 0.0
        %1569 = vmatpush2.msra.mxu0 0.0
        %1570 = vmatprep.subr.mxu0 0.0
        %1571 = vmatpush2.msra.mxu0 0.0
        %1572 = vmatprep.subr.mxu0 0.0
        %1573 = vmatpush2.msra.mxu0 0.0
        %1574 = vmatprep.subr.mxu0 0.0
        %1575 = vmatpush2.msra.mxu0 0.0
        %1576 = vmatprep.subr.mxu0 0.0
        %1577 = vmatpush2.msra.mxu0 0.0
        %1578 = vmatprep.subr.mxu0 0.0
        %1579 = vmatpush2.msra.mxu0 0.0
        %1580 = vmatprep.subr.mxu0 0.0
        %1581 = vmatpush2.msra.mxu0 0.0
        %1582 = vmatprep.subr.mxu0 0.0
        %1583 = vmatpush2.msra.mxu0 0.0
        %1584 = vmatprep.subr.mxu0 0.0
        %1585 = vmatpush2.msra.mxu0 0.0
        %1586 = vmatprep.subr.mxu0 0.0
        %1587 = vmatpush2.msra.mxu0 0.0
        %1588 = vmatprep.subr.mxu0 0.0
        %1589 = vmatpush2.msra.mxu0 0.0
        %1590 = vmatprep.subr.mxu0 0.0
        %1591 = vmatpush2.msra.mxu0 0.0
        %1592 = vmatprep.subr.mxu0 0.0
        %1593 = vmatpush2.msra.mxu0 0.0
        %1594 = vmatprep.mubr.f32.mxu0 0.0
        %1595 = vmatmul.mubr.f32.gmra.mxu0 %v1524
        %v1596 = vpop.f32.mrf.mxu0
        %v1597 = vadd.f32 %v1520, %v1596
        %v1598 = vpop.f32.mrf.mxu0
        %1599 = vdwg.mxu0
        %v1600 = vmul.f32 %v1597, 0.2
        %v1601 = vmax.f32 %v1597, %v1600
        %v1602 = vld [vmem:[#allocation5] sm:$0xff]
        %v1603 = vld [vmem:[#allocation5 + $0x8] sm:$0xff]
        %v1604 = vld [vmem:[#allocation5 + $0x10] sm:$0xff]
        %v1605 = vld [vmem:[#allocation5 + $0x18] sm:$0xff]
        %v1606 = vld [vmem:[#allocation5 + $0x20] sm:$0xff]
        %v1607 = vld [vmem:[#allocation5 + $0x28] sm:$0xff]
        %v1608 = vld [vmem:[#allocation5 + $0x30] sm:$0xff]
        %v1609 = vld [vmem:[#allocation5 + $0x38] sm:$0xff]
        %v1610 = vld [vmem:[#allocation5 + $0x40] sm:$0xff]
        %v1611 = vld [vmem:[#allocation5 + $0x48] sm:$0xff]
        %v1612 = vld [vmem:[#allocation5 + $0x50] sm:$0xff]
        %v1613 = vld [vmem:[#allocation5 + $0x58] sm:$0xff]
        %v1614 = vld [vmem:[#allocation5 + $0x60] sm:$0xff]
        %v1615 = vld [vmem:[#allocation5 + $0x68] sm:$0xff]
        %v1616 = vld [vmem:[#allocation5 + $0x70] sm:$0xff]
        %v1617 = vld [vmem:[#allocation5 + $0x78] sm:$0xff]
        %v1618 = vld [vmem:[#allocation5 + $0x80] sm:$0xff]
        %v1619 = vld [vmem:[#allocation5 + $0x88] sm:$0xff]
        %v1620 = vld [vmem:[#allocation5 + $0x90] sm:$0xff]
        %v1621 = vld [vmem:[#allocation5 + $0x98] sm:$0xff]
        %v1622 = vld [vmem:[#allocation5 + $0xa0] sm:$0xff]
        %v1623 = vld [vmem:[#allocation5 + $0xa8] sm:$0xff]
        %v1624 = vld [vmem:[#allocation5 + $0xb0] sm:$0xff]
        %v1625 = vld [vmem:[#allocation5 + $0xb8] sm:$0xff]
        %v1626 = vld [vmem:[#allocation5 + $0xc0] sm:$0xff]
        %v1627 = vld [vmem:[#allocation5 + $0xc8] sm:$0xff]
        %v1628 = vld [vmem:[#allocation5 + $0xd0] sm:$0xff]
        %v1629 = vld [vmem:[#allocation5 + $0xd8] sm:$0xff]
        %v1630 = vld [vmem:[#allocation5 + $0xe0] sm:$0xff]
        %v1631 = vld [vmem:[#allocation5 + $0xe8] sm:$0xff]
        %v1632 = vld [vmem:[#allocation5 + $0xf0] sm:$0xff]
        %v1633 = vld [vmem:[#allocation5 + $0xf8] sm:$0xff]
        %v1634 = vld [vmem:[#allocation5 + $0x100] sm:$0xff]
        %v1635 = vld [vmem:[#allocation5 + $0x108] sm:$0xff]
        %v1636 = vld [vmem:[#allocation5 + $0x110] sm:$0xff]
        %v1637 = vld [vmem:[#allocation5 + $0x118] sm:$0xff]
        %v1638 = vld [vmem:[#allocation5 + $0x120] sm:$0xff]
        %v1639 = vld [vmem:[#allocation5 + $0x128] sm:$0xff]
        %v1640 = vld [vmem:[#allocation5 + $0x130] sm:$0xff]
        %v1641 = vld [vmem:[#allocation5 + $0x138] sm:$0xff]
        %v1642 = vld [vmem:[#allocation5 + $0x140] sm:$0xff]
        %v1643 = vld [vmem:[#allocation5 + $0x148] sm:$0xff]
        %v1644 = vld [vmem:[#allocation5 + $0x150] sm:$0xff]
        %v1645 = vld [vmem:[#allocation5 + $0x158] sm:$0xff]
        %v1646 = vld [vmem:[#allocation5 + $0x160] sm:$0xff]
        %v1647 = vld [vmem:[#allocation5 + $0x168] sm:$0xff]
        %v1648 = vld [vmem:[#allocation5 + $0x170] sm:$0xff]
        %v1649 = vld [vmem:[#allocation5 + $0x178] sm:$0xff]
        %v1650 = vld [vmem:[#allocation5 + $0x180] sm:$0xff]
        %v1651 = vld [vmem:[#allocation5 + $0x188] sm:$0xff]
        %v1652 = vld [vmem:[#allocation5 + $0x190] sm:$0xff]
        %v1653 = vld [vmem:[#allocation5 + $0x198] sm:$0xff]
        %v1654 = vld [vmem:[#allocation5 + $0x1a0] sm:$0xff]
        %v1655 = vld [vmem:[#allocation5 + $0x1a8] sm:$0xff]
        %v1656 = vld [vmem:[#allocation5 + $0x1b0] sm:$0xff]
        %v1657 = vld [vmem:[#allocation5 + $0x1b8] sm:$0xff]
        %v1658 = vld [vmem:[#allocation5 + $0x1c0] sm:$0xff]
        %v1659 = vld [vmem:[#allocation5 + $0x1c8] sm:$0xff]
        %v1660 = vld [vmem:[#allocation5 + $0x1d0] sm:$0xff]
        %v1661 = vld [vmem:[#allocation5 + $0x1d8] sm:$0xff]
        %v1662 = vld [vmem:[#allocation5 + $0x1e0] sm:$0xff]
        %v1663 = vld [vmem:[#allocation5 + $0x1e8] sm:$0xff]
        %v1664 = vld [vmem:[#allocation5 + $0x1f0] sm:$0xff]
        %v1665 = vld [vmem:[#allocation5 + $0x1f8] sm:$0xff]
        %v1666 = vld [vmem:[#allocation5 + $0x200] sm:$0xff]
        %v1667 = vld [vmem:[#allocation5 + $0x208] sm:$0xff]
        %v1668 = vld [vmem:[#allocation5 + $0x210] sm:$0xff]
        %v1669 = vld [vmem:[#allocation5 + $0x218] sm:$0xff]
        %v1670 = vld [vmem:[#allocation5 + $0x220] sm:$0xff]
        %v1671 = vld [vmem:[#allocation5 + $0x228] sm:$0xff]
        %v1672 = vld [vmem:[#allocation5 + $0x230] sm:$0xff]
        %v1673 = vld [vmem:[#allocation5 + $0x238] sm:$0xff]
        %v1674 = vld [vmem:[#allocation5 + $0x240] sm:$0xff]
        %v1675 = vld [vmem:[#allocation5 + $0x248] sm:$0xff]
        %v1676 = vld [vmem:[#allocation5 + $0x250] sm:$0xff]
        %v1677 = vld [vmem:[#allocation5 + $0x258] sm:$0xff]
        %v1678 = vld [vmem:[#allocation5 + $0x260] sm:$0xff]
        %v1679 = vld [vmem:[#allocation5 + $0x268] sm:$0xff]
        %v1680 = vld [vmem:[#allocation5 + $0x270] sm:$0xff]
        %v1681 = vld [vmem:[#allocation5 + $0x278] sm:$0xff]
        %v1682 = vld [vmem:[#allocation5 + $0x280] sm:$0xff]
        %v1683 = vld [vmem:[#allocation5 + $0x288] sm:$0xff]
        %v1684 = vld [vmem:[#allocation5 + $0x290] sm:$0xff]
        %v1685 = vld [vmem:[#allocation5 + $0x298] sm:$0xff]
        %v1686 = vld [vmem:[#allocation5 + $0x2a0] sm:$0xff]
        %v1687 = vld [vmem:[#allocation5 + $0x2a8] sm:$0xff]
        %v1688 = vld [vmem:[#allocation5 + $0x2b0] sm:$0xff]
        %v1689 = vld [vmem:[#allocation5 + $0x2b8] sm:$0xff]
        %v1690 = vld [vmem:[#allocation5 + $0x2c0] sm:$0xff]
        %v1691 = vld [vmem:[#allocation5 + $0x2c8] sm:$0xff]
        %v1692 = vld [vmem:[#allocation5 + $0x2d0] sm:$0xff]
        %v1693 = vld [vmem:[#allocation5 + $0x2d8] sm:$0xff]
        %v1694 = vld [vmem:[#allocation5 + $0x2e0] sm:$0xff]
        %v1695 = vld [vmem:[#allocation5 + $0x2e8] sm:$0xff]
        %v1696 = vld [vmem:[#allocation5 + $0x2f0] sm:$0xff]
        %v1697 = vld [vmem:[#allocation5 + $0x2f8] sm:$0xff]
        %v1698 = vld [vmem:[#allocation5 + $0x300] sm:$0xff]
        %v1699 = vld [vmem:[#allocation5 + $0x308] sm:$0xff]
        %v1700 = vld [vmem:[#allocation5 + $0x310] sm:$0xff]
        %v1701 = vld [vmem:[#allocation5 + $0x318] sm:$0xff]
        %v1702 = vld [vmem:[#allocation5 + $0x320] sm:$0xff]
        %v1703 = vld [vmem:[#allocation5 + $0x328] sm:$0xff]
        %v1704 = vld [vmem:[#allocation5 + $0x330] sm:$0xff]
        %v1705 = vld [vmem:[#allocation5 + $0x338] sm:$0xff]
        %v1706 = vld [vmem:[#allocation5 + $0x340] sm:$0xff]
        %v1707 = vld [vmem:[#allocation5 + $0x348] sm:$0xff]
        %v1708 = vld [vmem:[#allocation5 + $0x350] sm:$0xff]
        %v1709 = vld [vmem:[#allocation5 + $0x358] sm:$0xff]
        %v1710 = vld [vmem:[#allocation5 + $0x360] sm:$0xff]
        %v1711 = vld [vmem:[#allocation5 + $0x368] sm:$0xff]
        %v1712 = vld [vmem:[#allocation5 + $0x370] sm:$0xff]
        %v1713 = vld [vmem:[#allocation5 + $0x378] sm:$0xff]
        %v1714 = vld [vmem:[#allocation5 + $0x380] sm:$0xff]
        %v1715 = vld [vmem:[#allocation5 + $0x388] sm:$0xff]
        %v1716 = vld [vmem:[#allocation5 + $0x390] sm:$0xff]
        %v1717 = vld [vmem:[#allocation5 + $0x398] sm:$0xff]
        %v1718 = vld [vmem:[#allocation5 + $0x3a0] sm:$0xff]
        %v1719 = vld [vmem:[#allocation5 + $0x3a8] sm:$0xff]
        %v1720 = vld [vmem:[#allocation5 + $0x3b0] sm:$0xff]
        %v1721 = vld [vmem:[#allocation5 + $0x3b8] sm:$0xff]
        %v1722 = vld [vmem:[#allocation5 + $0x3c0] sm:$0xff]
        %v1723 = vld [vmem:[#allocation5 + $0x3c8] sm:$0xff]
        %v1724 = vld [vmem:[#allocation5 + $0x3d0] sm:$0xff]
        %v1725 = vld [vmem:[#allocation5 + $0x3d8] sm:$0xff]
        %v1726 = vld [vmem:[#allocation5 + $0x3e0] sm:$0xff]
        %v1727 = vld [vmem:[#allocation5 + $0x3e8] sm:$0xff]
        %v1728 = vld [vmem:[#allocation5 + $0x3f0] sm:$0xff]
        %v1729 = vld [vmem:[#allocation5 + $0x3f8] sm:$0xff]
        %v1730 = vld [vmem:[#allocation5 + $0x400] sm:$0xff]
        %v1731 = vld [vmem:[#allocation5 + $0x408] sm:$0xff]
        %v1732 = vld [vmem:[#allocation5 + $0x410] sm:$0xff]
        %v1733 = vld [vmem:[#allocation5 + $0x418] sm:$0xff]
        %v1734 = vld [vmem:[#allocation5 + $0x420] sm:$0xff]
        %v1735 = vld [vmem:[#allocation5 + $0x428] sm:$0xff]
        %v1736 = vld [vmem:[#allocation5 + $0x430] sm:$0xff]
        %v1737 = vld [vmem:[#allocation5 + $0x438] sm:$0xff]
        %v1738 = vld [vmem:[#allocation5 + $0x440] sm:$0xff]
        %v1739 = vld [vmem:[#allocation5 + $0x448] sm:$0xff]
        %v1740 = vld [vmem:[#allocation5 + $0x450] sm:$0xff]
        %v1741 = vld [vmem:[#allocation5 + $0x458] sm:$0xff]
        %v1742 = vld [vmem:[#allocation5 + $0x460] sm:$0xff]
        %v1743 = vld [vmem:[#allocation5 + $0x468] sm:$0xff]
        %v1744 = vld [vmem:[#allocation5 + $0x470] sm:$0xff]
        %v1745 = vld [vmem:[#allocation5 + $0x478] sm:$0xff]
        %v1746 = vld [vmem:[#allocation5 + $0x480] sm:$0xff]
        %v1747 = vld [vmem:[#allocation5 + $0x488] sm:$0xff]
        %v1748 = vld [vmem:[#allocation5 + $0x490] sm:$0xff]
        %v1749 = vld [vmem:[#allocation5 + $0x498] sm:$0xff]
        %v1750 = vld [vmem:[#allocation5 + $0x4a0] sm:$0xff]
        %v1751 = vld [vmem:[#allocation5 + $0x4a8] sm:$0xff]
        %v1752 = vld [vmem:[#allocation5 + $0x4b0] sm:$0xff]
        %v1753 = vld [vmem:[#allocation5 + $0x4b8] sm:$0xff]
        %v1754 = vld [vmem:[#allocation5 + $0x4c0] sm:$0xff]
        %v1755 = vld [vmem:[#allocation5 + $0x4c8] sm:$0xff]
        %v1756 = vld [vmem:[#allocation5 + $0x4d0] sm:$0xff]
        %v1757 = vld [vmem:[#allocation5 + $0x4d8] sm:$0xff]
        %v1758 = vld [vmem:[#allocation5 + $0x4e0] sm:$0xff]
        %v1759 = vld [vmem:[#allocation5 + $0x4e8] sm:$0xff]
        %v1760 = vld [vmem:[#allocation5 + $0x4f0] sm:$0xff]
        %v1761 = vld [vmem:[#allocation5 + $0x4f8] sm:$0xff]
        %v1762 = vld [vmem:[#allocation5 + $0x500] sm:$0xff]
        %v1763 = vld [vmem:[#allocation5 + $0x508] sm:$0xff]
        %v1764 = vld [vmem:[#allocation5 + $0x510] sm:$0xff]
        %v1765 = vld [vmem:[#allocation5 + $0x518] sm:$0xff]
        %v1766 = vld [vmem:[#allocation5 + $0x520] sm:$0xff]
        %v1767 = vld [vmem:[#allocation5 + $0x528] sm:$0xff]
        %v1768 = vld [vmem:[#allocation5 + $0x530] sm:$0xff]
        %v1769 = vld [vmem:[#allocation5 + $0x538] sm:$0xff]
        %v1770 = vld [vmem:[#allocation5 + $0x540] sm:$0xff]
        %v1771 = vld [vmem:[#allocation5 + $0x548] sm:$0xff]
        %v1772 = vld [vmem:[#allocation5 + $0x550] sm:$0xff]
        %v1773 = vld [vmem:[#allocation5 + $0x558] sm:$0xff]
        %v1774 = vld [vmem:[#allocation5 + $0x560] sm:$0xff]
        %v1775 = vld [vmem:[#allocation5 + $0x568] sm:$0xff]
        %v1776 = vld [vmem:[#allocation5 + $0x570] sm:$0xff]
        %v1777 = vld [vmem:[#allocation5 + $0x578] sm:$0xff]
        %v1778 = vld [vmem:[#allocation5 + $0x580] sm:$0xff]
        %v1779 = vld [vmem:[#allocation5 + $0x588] sm:$0xff]
        %v1780 = vld [vmem:[#allocation5 + $0x590] sm:$0xff]
        %v1781 = vld [vmem:[#allocation5 + $0x598] sm:$0xff]
        %v1782 = vld [vmem:[#allocation5 + $0x5a0] sm:$0xff]
        %v1783 = vld [vmem:[#allocation5 + $0x5a8] sm:$0xff]
        %v1784 = vld [vmem:[#allocation5 + $0x5b0] sm:$0xff]
        %v1785 = vld [vmem:[#allocation5 + $0x5b8] sm:$0xff]
        %v1786 = vld [vmem:[#allocation5 + $0x5c0] sm:$0xff]
        %v1787 = vld [vmem:[#allocation5 + $0x5c8] sm:$0xff]
        %v1788 = vld [vmem:[#allocation5 + $0x5d0] sm:$0xff]
        %v1789 = vld [vmem:[#allocation5 + $0x5d8] sm:$0xff]
        %v1790 = vld [vmem:[#allocation5 + $0x5e0] sm:$0xff]
        %v1791 = vld [vmem:[#allocation5 + $0x5e8] sm:$0xff]
        %v1792 = vld [vmem:[#allocation5 + $0x5f0] sm:$0xff]
        %v1793 = vld [vmem:[#allocation5 + $0x5f8] sm:$0xff]
        %v1794 = vld [vmem:[#allocation5 + $0x600] sm:$0xff]
        %v1795 = vld [vmem:[#allocation5 + $0x608] sm:$0xff]
        %v1796 = vld [vmem:[#allocation5 + $0x610] sm:$0xff]
        %v1797 = vld [vmem:[#allocation5 + $0x618] sm:$0xff]
        %v1798 = vld [vmem:[#allocation5 + $0x620] sm:$0xff]
        %v1799 = vld [vmem:[#allocation5 + $0x628] sm:$0xff]
        %v1800 = vld [vmem:[#allocation5 + $0x630] sm:$0xff]
        %v1801 = vld [vmem:[#allocation5 + $0x638] sm:$0xff]
        %v1802 = vld [vmem:[#allocation5 + $0x640] sm:$0xff]
        %v1803 = vld [vmem:[#allocation5 + $0x648] sm:$0xff]
        %v1804 = vld [vmem:[#allocation5 + $0x650] sm:$0xff]
        %v1805 = vld [vmem:[#allocation5 + $0x658] sm:$0xff]
        %v1806 = vld [vmem:[#allocation5 + $0x660] sm:$0xff]
        %v1807 = vld [vmem:[#allocation5 + $0x668] sm:$0xff]
        %v1808 = vld [vmem:[#allocation5 + $0x670] sm:$0xff]
        %v1809 = vld [vmem:[#allocation5 + $0x678] sm:$0xff]
        %v1810 = vld [vmem:[#allocation5 + $0x680] sm:$0xff]
        %v1811 = vld [vmem:[#allocation5 + $0x688] sm:$0xff]
        %v1812 = vld [vmem:[#allocation5 + $0x690] sm:$0xff]
        %v1813 = vld [vmem:[#allocation5 + $0x698] sm:$0xff]
        %v1814 = vld [vmem:[#allocation5 + $0x6a0] sm:$0xff]
        %v1815 = vld [vmem:[#allocation5 + $0x6a8] sm:$0xff]
        %v1816 = vld [vmem:[#allocation5 + $0x6b0] sm:$0xff]
        %v1817 = vld [vmem:[#allocation5 + $0x6b8] sm:$0xff]
        %v1818 = vld [vmem:[#allocation5 + $0x6c0] sm:$0xff]
        %v1819 = vld [vmem:[#allocation5 + $0x6c8] sm:$0xff]
        %v1820 = vld [vmem:[#allocation5 + $0x6d0] sm:$0xff]
        %v1821 = vld [vmem:[#allocation5 + $0x6d8] sm:$0xff]
        %v1822 = vld [vmem:[#allocation5 + $0x6e0] sm:$0xff]
        %v1823 = vld [vmem:[#allocation5 + $0x6e8] sm:$0xff]
        %v1824 = vld [vmem:[#allocation5 + $0x6f0] sm:$0xff]
        %v1825 = vld [vmem:[#allocation5 + $0x6f8] sm:$0xff]
        %v1826 = vld [vmem:[#allocation5 + $0x700] sm:$0xff]
        %v1827 = vld [vmem:[#allocation5 + $0x708] sm:$0xff]
        %v1828 = vld [vmem:[#allocation5 + $0x710] sm:$0xff]
        %v1829 = vld [vmem:[#allocation5 + $0x718] sm:$0xff]
        %v1830 = vld [vmem:[#allocation5 + $0x720] sm:$0xff]
        %v1831 = vld [vmem:[#allocation5 + $0x728] sm:$0xff]
        %v1832 = vld [vmem:[#allocation5 + $0x730] sm:$0xff]
        %v1833 = vld [vmem:[#allocation5 + $0x738] sm:$0xff]
        %v1834 = vld [vmem:[#allocation5 + $0x740] sm:$0xff]
        %v1835 = vld [vmem:[#allocation5 + $0x748] sm:$0xff]
        %v1836 = vld [vmem:[#allocation5 + $0x750] sm:$0xff]
        %v1837 = vld [vmem:[#allocation5 + $0x758] sm:$0xff]
        %v1838 = vld [vmem:[#allocation5 + $0x760] sm:$0xff]
        %v1839 = vld [vmem:[#allocation5 + $0x768] sm:$0xff]
        %v1840 = vld [vmem:[#allocation5 + $0x770] sm:$0xff]
        %v1841 = vld [vmem:[#allocation5 + $0x778] sm:$0xff]
        %v1842 = vld [vmem:[#allocation5 + $0x780] sm:$0xff]
        %v1843 = vld [vmem:[#allocation5 + $0x788] sm:$0xff]
        %v1844 = vld [vmem:[#allocation5 + $0x790] sm:$0xff]
        %v1845 = vld [vmem:[#allocation5 + $0x798] sm:$0xff]
        %v1846 = vld [vmem:[#allocation5 + $0x7a0] sm:$0xff]
        %v1847 = vld [vmem:[#allocation5 + $0x7a8] sm:$0xff]
        %v1848 = vld [vmem:[#allocation5 + $0x7b0] sm:$0xff]
        %v1849 = vld [vmem:[#allocation5 + $0x7b8] sm:$0xff]
        %v1850 = vld [vmem:[#allocation5 + $0x7c0] sm:$0xff]
        %v1851 = vld [vmem:[#allocation5 + $0x7c8] sm:$0xff]
        %v1852 = vld [vmem:[#allocation5 + $0x7d0] sm:$0xff]
        %v1853 = vld [vmem:[#allocation5 + $0x7d8] sm:$0xff]
        %v1854 = vld [vmem:[#allocation5 + $0x7e0] sm:$0xff]
        %v1855 = vld [vmem:[#allocation5 + $0x7e8] sm:$0xff]
        %v1856 = vld [vmem:[#allocation5 + $0x7f0] sm:$0xff]
        %v1857 = vld [vmem:[#allocation5 + $0x7f8] sm:$0xff]
        %v1858 = vpack.c.bf16 %v1601, %v1601
        %v1859 = vld [vmem:[#allocation7] sm:$0xff]
        %v1860 = vld [vmem:[#allocation7 + $0x8] sm:$0xff]
        %v1861 = vld [vmem:[#allocation7 + $0x10] sm:$0xff]
        %v1862 = vld [vmem:[#allocation7 + $0x18] sm:$0xff]
        %v1863 = vld [vmem:[#allocation7 + $0x20] sm:$0xff]
        %v1864 = vld [vmem:[#allocation7 + $0x28] sm:$0xff]
        %v1865 = vld [vmem:[#allocation7 + $0x30] sm:$0xff]
        %v1866 = vld [vmem:[#allocation7 + $0x38] sm:$0xff]
        %v1875 = vunpack.c.l.b16 %v1859
        %v1876 = vunpack.c.h.b16 %v1859
        %v1877 = vunpack.c.l.b16 %v1860
        %v1878 = vunpack.c.h.b16 %v1860
        %v1879 = vunpack.c.l.b16 %v1861
        %v1880 = vunpack.c.h.b16 %v1861
        %v1881 = vunpack.c.l.b16 %v1862
        %v1882 = vunpack.c.h.b16 %v1862
        %v1883 = vunpack.c.l.b16 %v1863
        %v1884 = vunpack.c.h.b16 %v1863
        %v1885 = vunpack.c.l.b16 %v1864
        %v1886 = vunpack.c.h.b16 %v1864
        %v1887 = vunpack.c.l.b16 %v1865
        %v1888 = vunpack.c.h.b16 %v1865
        %v1889 = vunpack.c.l.b16 %v1866
        %v1890 = vunpack.c.h.b16 %v1866
        %v1891 = vpack.c.b16 %v1883, %v1875
        %v1892 = vpack.c.b16 %v1884, %v1876
        %v1893 = vpack.c.b16 %v1885, %v1877
        %v1894 = vpack.c.b16 %v1886, %v1878
        %v1895 = vpack.c.b16 %v1887, %v1879
        %v1896 = vpack.c.b16 %v1888, %v1880
        %v1897 = vpack.c.b16 %v1889, %v1881
        %v1898 = vpack.c.b16 %v1890, %v1882
        %vm1907 = vcmask 130048
        %v1909 = vsel %vm1907, %v1858, 0
        %1911 = vmatprep.subr.bf16.mxu0 0
        %1912 = vmatpush1.bf16.msra.mxu0 0
        %1913 = vmatprep.subr.bf16.mxu0 0
        %1914 = vmatpush1.bf16.msra.mxu0 0
        %1915 = vmatprep.subr.bf16.mxu0 0
        %1916 = vmatpush1.bf16.msra.mxu0 0
        %1917 = vmatprep.subr.bf16.mxu0 0
        %1918 = vmatpush1.bf16.msra.mxu0 0
        %1919 = vmatprep.subr.bf16.mxu0 0
        %1920 = vmatpush1.bf16.msra.mxu0 0
        %1921 = vmatprep.subr.bf16.mxu0 0
        %1922 = vmatpush1.bf16.msra.mxu0 0
        %1923 = vmatprep.subr.bf16.mxu0 0
        %1924 = vmatpush1.bf16.msra.mxu0 0
        %1925 = vmatprep.subr.bf16.mxu0 %v1892
        %1926 = vmatpush1.bf16.msra.mxu0 %v1891
        %1927 = vmatprep.subr.bf16.mxu0 0
        %1928 = vmatpush2.bf16.msra.mxu0 0
        %1929 = vmatprep.subr.bf16.mxu0 0
        %1930 = vmatpush2.bf16.msra.mxu0 0
        %1931 = vmatprep.subr.bf16.mxu0 0
        %1932 = vmatpush2.bf16.msra.mxu0 0
        %1933 = vmatprep.subr.bf16.mxu0 0
        %1934 = vmatpush2.bf16.msra.mxu0 0
        %1935 = vmatprep.subr.bf16.mxu0 0
        %1936 = vmatpush2.bf16.msra.mxu0 0
        %1937 = vmatprep.subr.bf16.mxu0 0
        %1938 = vmatpush2.bf16.msra.mxu0 0
        %1939 = vmatprep.subr.bf16.mxu0 0
        %1940 = vmatpush2.bf16.msra.mxu0 0
        %1941 = vmatprep.subr.bf16.mxu0 0
        %1942 = vmatpush2.bf16.msra.mxu0 0
        %1943 = vmatprep.mubr.bf16.mxu0 0
        %1944 = vmatmul.mubr.bf16.gmra.mxu0 %v1909
        %v1945 = vpop.f32.mrf.mxu0
        %v1946 = vadd.f32 0.0, %v1945
        %v1947 = vpop.f32.mrf.mxu0
        %v1948 = vadd.f32 0.0, %v1947
        %v1949 = vpop.f32.mrf.mxu0
        %v1950 = vpop.f32.mrf.mxu0
        %1951 = vdwg.mxu0
        %1952 = vmatprep.subr.bf16.mxu0 0
        %1953 = vmatpush1.bf16.msra.mxu0 0
        %1954 = vmatprep.subr.bf16.mxu0 0
        %1955 = vmatpush1.bf16.msra.mxu0 0
        %1956 = vmatprep.subr.bf16.mxu0 0
        %1957 = vmatpush1.bf16.msra.mxu0 0
        %1958 = vmatprep.subr.bf16.mxu0 0
        %1959 = vmatpush1.bf16.msra.mxu0 0
        %1960 = vmatprep.subr.bf16.mxu0 0
        %1961 = vmatpush1.bf16.msra.mxu0 0
        %1962 = vmatprep.subr.bf16.mxu0 0
        %1963 = vmatpush1.bf16.msra.mxu0 0
        %1964 = vmatprep.subr.bf16.mxu0 0
        %1965 = vmatpush1.bf16.msra.mxu0 0
        %1966 = vmatprep.subr.bf16.mxu0 %v1894
        %1967 = vmatpush1.bf16.msra.mxu0 %v1893
        %1968 = vmatprep.subr.bf16.mxu0 0
        %1969 = vmatpush2.bf16.msra.mxu0 0
        %1970 = vmatprep.subr.bf16.mxu0 0
        %1971 = vmatpush2.bf16.msra.mxu0 0
        %1972 = vmatprep.subr.bf16.mxu0 0
        %1973 = vmatpush2.bf16.msra.mxu0 0
        %1974 = vmatprep.subr.bf16.mxu0 0
        %1975 = vmatpush2.bf16.msra.mxu0 0
        %1976 = vmatprep.subr.bf16.mxu0 0
        %1977 = vmatpush2.bf16.msra.mxu0 0
        %1978 = vmatprep.subr.bf16.mxu0 0
        %1979 = vmatpush2.bf16.msra.mxu0 0
        %1980 = vmatprep.subr.bf16.mxu0 0
        %1981 = vmatpush2.bf16.msra.mxu0 0
        %1982 = vmatprep.subr.bf16.mxu0 0
        %1983 = vmatpush2.bf16.msra.mxu0 0
        %1984 = vmatprep.mubr.bf16.mxu0 0
        %1985 = vmatmul.mubr.bf16.gmra.mxu0 %v1909
        %v1986 = vpop.f32.mrf.mxu0
        %v1987 = vadd.f32 0.0, %v1986
        %v1988 = vpop.f32.mrf.mxu0
        %v1989 = vadd.f32 0.0, %v1988
        %v1990 = vpop.f32.mrf.mxu0
        %v1991 = vpop.f32.mrf.mxu0
        %1992 = vdwg.mxu0
        %1993 = vmatprep.subr.bf16.mxu0 0
        %1994 = vmatpush1.bf16.msra.mxu0 0
        %1995 = vmatprep.subr.bf16.mxu0 0
        %1996 = vmatpush1.bf16.msra.mxu0 0
        %1997 = vmatprep.subr.bf16.mxu0 0
        %1998 = vmatpush1.bf16.msra.mxu0 0
        %1999 = vmatprep.subr.bf16.mxu0 0
        %2000 = vmatpush1.bf16.msra.mxu0 0
        %2001 = vmatprep.subr.bf16.mxu0 0
        %2002 = vmatpush1.bf16.msra.mxu0 0
        %2003 = vmatprep.subr.bf16.mxu0 0
        %2004 = vmatpush1.bf16.msra.mxu0 0
        %2005 = vmatprep.subr.bf16.mxu0 0
        %2006 = vmatpush1.bf16.msra.mxu0 0
        %2007 = vmatprep.subr.bf16.mxu0 %v1896
        %2008 = vmatpush1.bf16.msra.mxu0 %v1895
        %2009 = vmatprep.subr.bf16.mxu0 0
        %2010 = vmatpush2.bf16.msra.mxu0 0
        %2011 = vmatprep.subr.bf16.mxu0 0
        %2012 = vmatpush2.bf16.msra.mxu0 0
        %2013 = vmatprep.subr.bf16.mxu0 0
        %2014 = vmatpush2.bf16.msra.mxu0 0
        %2015 = vmatprep.subr.bf16.mxu0 0
        %2016 = vmatpush2.bf16.msra.mxu0 0
        %2017 = vmatprep.subr.bf16.mxu0 0
        %2018 = vmatpush2.bf16.msra.mxu0 0
        %2019 = vmatprep.subr.bf16.mxu0 0
        %2020 = vmatpush2.bf16.msra.mxu0 0
        %2021 = vmatprep.subr.bf16.mxu0 0
        %2022 = vmatpush2.bf16.msra.mxu0 0
        %2023 = vmatprep.subr.bf16.mxu0 0
        %2024 = vmatpush2.bf16.msra.mxu0 0
        %2025 = vmatprep.mubr.bf16.mxu0 0
        %2026 = vmatmul.mubr.bf16.gmra.mxu0 %v1909
        %v2027 = vpop.f32.mrf.mxu0
        %v2028 = vadd.f32 0.0, %v2027
        %v2029 = vpop.f32.mrf.mxu0
        %v2030 = vadd.f32 0.0, %v2029
        %v2031 = vpop.f32.mrf.mxu0
        %v2032 = vpop.f32.mrf.mxu0
        %2033 = vdwg.mxu0
        %2034 = vmatprep.subr.bf16.mxu0 0
        %2035 = vmatpush1.bf16.msra.mxu0 0
        %2036 = vmatprep.subr.bf16.mxu0 0
        %2037 = vmatpush1.bf16.msra.mxu0 0
        %2038 = vmatprep.subr.bf16.mxu0 0
        %2039 = vmatpush1.bf16.msra.mxu0 0
        %2040 = vmatprep.subr.bf16.mxu0 0
        %2041 = vmatpush1.bf16.msra.mxu0 0
        %2042 = vmatprep.subr.bf16.mxu0 0
        %2043 = vmatpush1.bf16.msra.mxu0 0
        %2044 = vmatprep.subr.bf16.mxu0 0
        %2045 = vmatpush1.bf16.msra.mxu0 0
        %2046 = vmatprep.subr.bf16.mxu0 0
        %2047 = vmatpush1.bf16.msra.mxu0 0
        %2048 = vmatprep.subr.bf16.mxu0 %v1898
        %2049 = vmatpush1.bf16.msra.mxu0 %v1897
        %2050 = vmatprep.subr.bf16.mxu0 0
        %2051 = vmatpush2.bf16.msra.mxu0 0
        %2052 = vmatprep.subr.bf16.mxu0 0
        %2053 = vmatpush2.bf16.msra.mxu0 0
        %2054 = vmatprep.subr.bf16.mxu0 0
        %2055 = vmatpush2.bf16.msra.mxu0 0
        %2056 = vmatprep.subr.bf16.mxu0 0
        %2057 = vmatpush2.bf16.msra.mxu0 0
        %2058 = vmatprep.subr.bf16.mxu0 0
        %2059 = vmatpush2.bf16.msra.mxu0 0
        %2060 = vmatprep.subr.bf16.mxu0 0
        %2061 = vmatpush2.bf16.msra.mxu0 0
        %2062 = vmatprep.subr.bf16.mxu0 0
        %2063 = vmatpush2.bf16.msra.mxu0 0
        %2064 = vmatprep.subr.bf16.mxu0 0
        %2065 = vmatpush2.bf16.msra.mxu0 0
        %2066 = vmatprep.mubr.bf16.mxu0 0
        %2067 = vmatmul.mubr.bf16.gmra.mxu0 %v1909
        %v2068 = vpop.f32.mrf.mxu0
        %v2069 = vadd.f32 0.0, %v2068
        %v2070 = vpop.f32.mrf.mxu0
        %v2071 = vadd.f32 0.0, %v2070
        %v2072 = vpop.f32.mrf.mxu0
        %v2073 = vpop.f32.mrf.mxu0
        %2074 = vdwg.mxu0
        %v2331 = vunpack.c.l.b16 %v1602
        %v2332 = vunpack.c.h.b16 %v1602
        %v2333 = vunpack.c.l.b16 %v1603
        %v2334 = vunpack.c.h.b16 %v1603
        %v2335 = vunpack.c.l.b16 %v1604
        %v2336 = vunpack.c.h.b16 %v1604
        %v2337 = vunpack.c.l.b16 %v1605
        %v2338 = vunpack.c.h.b16 %v1605
        %v2339 = vunpack.c.l.b16 %v1606
        %v2340 = vunpack.c.h.b16 %v1606
        %v2341 = vunpack.c.l.b16 %v1607
        %v2342 = vunpack.c.h.b16 %v1607
        %v2343 = vunpack.c.l.b16 %v1608
        %v2344 = vunpack.c.h.b16 %v1608
        %v2345 = vunpack.c.l.b16 %v1609
        %v2346 = vunpack.c.h.b16 %v1609
        %v2347 = vunpack.c.l.b16 %v1610
        %v2348 = vunpack.c.h.b16 %v1610
        %v2349 = vunpack.c.l.b16 %v1611
        %v2350 = vunpack.c.h.b16 %v1611
        %v2351 = vunpack.c.l.b16 %v1612
        %v2352 = vunpack.c.h.b16 %v1612
        %v2353 = vunpack.c.l.b16 %v1613
        %v2354 = vunpack.c.h.b16 %v1613
        %v2355 = vunpack.c.l.b16 %v1614
        %v2356 = vunpack.c.h.b16 %v1614
        %v2357 = vunpack.c.l.b16 %v1615
        %v2358 = vunpack.c.h.b16 %v1615
        %v2359 = vunpack.c.l.b16 %v1616
        %v2360 = vunpack.c.h.b16 %v1616
        %v2361 = vunpack.c.l.b16 %v1617
        %v2362 = vunpack.c.h.b16 %v1617
        %v2363 = vunpack.c.l.b16 %v1618
        %v2364 = vunpack.c.h.b16 %v1618
        %v2365 = vunpack.c.l.b16 %v1619
        %v2366 = vunpack.c.h.b16 %v1619
        %v2367 = vunpack.c.l.b16 %v1620
        %v2368 = vunpack.c.h.b16 %v1620
        %v2369 = vunpack.c.l.b16 %v1621
        %v2370 = vunpack.c.h.b16 %v1621
        %v2371 = vunpack.c.l.b16 %v1622
        %v2372 = vunpack.c.h.b16 %v1622
        %v2373 = vunpack.c.l.b16 %v1623
        %v2374 = vunpack.c.h.b16 %v1623
        %v2375 = vunpack.c.l.b16 %v1624
        %v2376 = vunpack.c.h.b16 %v1624
        %v2377 = vunpack.c.l.b16 %v1625
        %v2378 = vunpack.c.h.b16 %v1625
        %v2379 = vunpack.c.l.b16 %v1626
        %v2380 = vunpack.c.h.b16 %v1626
        %v2381 = vunpack.c.l.b16 %v1627
        %v2382 = vunpack.c.h.b16 %v1627
        %v2383 = vunpack.c.l.b16 %v1628
        %v2384 = vunpack.c.h.b16 %v1628
        %v2385 = vunpack.c.l.b16 %v1629
        %v2386 = vunpack.c.h.b16 %v1629
        %v2387 = vunpack.c.l.b16 %v1630
        %v2388 = vunpack.c.h.b16 %v1630
        %v2389 = vunpack.c.l.b16 %v1631
        %v2390 = vunpack.c.h.b16 %v1631
        %v2391 = vunpack.c.l.b16 %v1632
        %v2392 = vunpack.c.h.b16 %v1632
        %v2393 = vunpack.c.l.b16 %v1633
        %v2394 = vunpack.c.h.b16 %v1633
        %v2395 = vunpack.c.l.b16 %v1634
        %v2396 = vunpack.c.h.b16 %v1634
        %v2397 = vunpack.c.l.b16 %v1635
        %v2398 = vunpack.c.h.b16 %v1635
        %v2399 = vunpack.c.l.b16 %v1636
        %v2400 = vunpack.c.h.b16 %v1636
        %v2401 = vunpack.c.l.b16 %v1637
        %v2402 = vunpack.c.h.b16 %v1637
        %v2403 = vunpack.c.l.b16 %v1638
        %v2404 = vunpack.c.h.b16 %v1638
        %v2405 = vunpack.c.l.b16 %v1639
        %v2406 = vunpack.c.h.b16 %v1639
        %v2407 = vunpack.c.l.b16 %v1640
        %v2408 = vunpack.c.h.b16 %v1640
        %v2409 = vunpack.c.l.b16 %v1641
        %v2410 = vunpack.c.h.b16 %v1641
        %v2411 = vunpack.c.l.b16 %v1642
        %v2412 = vunpack.c.h.b16 %v1642
        %v2413 = vunpack.c.l.b16 %v1643
        %v2414 = vunpack.c.h.b16 %v1643
        %v2415 = vunpack.c.l.b16 %v1644
        %v2416 = vunpack.c.h.b16 %v1644
        %v2417 = vunpack.c.l.b16 %v1645
        %v2418 = vunpack.c.h.b16 %v1645
        %v2419 = vunpack.c.l.b16 %v1646
        %v2420 = vunpack.c.h.b16 %v1646
        %v2421 = vunpack.c.l.b16 %v1647
        %v2422 = vunpack.c.h.b16 %v1647
        %v2423 = vunpack.c.l.b16 %v1648
        %v2424 = vunpack.c.h.b16 %v1648
        %v2425 = vunpack.c.l.b16 %v1649
        %v2426 = vunpack.c.h.b16 %v1649
        %v2427 = vunpack.c.l.b16 %v1650
        %v2428 = vunpack.c.h.b16 %v1650
        %v2429 = vunpack.c.l.b16 %v1651
        %v2430 = vunpack.c.h.b16 %v1651
        %v2431 = vunpack.c.l.b16 %v1652
        %v2432 = vunpack.c.h.b16 %v1652
        %v2433 = vunpack.c.l.b16 %v1653
        %v2434 = vunpack.c.h.b16 %v1653
        %v2435 = vunpack.c.l.b16 %v1654
        %v2436 = vunpack.c.h.b16 %v1654
        %v2437 = vunpack.c.l.b16 %v1655
        %v2438 = vunpack.c.h.b16 %v1655
        %v2439 = vunpack.c.l.b16 %v1656
        %v2440 = vunpack.c.h.b16 %v1656
        %v2441 = vunpack.c.l.b16 %v1657
        %v2442 = vunpack.c.h.b16 %v1657
        %v2443 = vunpack.c.l.b16 %v1658
        %v2444 = vunpack.c.h.b16 %v1658
        %v2445 = vunpack.c.l.b16 %v1659
        %v2446 = vunpack.c.h.b16 %v1659
        %v2447 = vunpack.c.l.b16 %v1660
        %v2448 = vunpack.c.h.b16 %v1660
        %v2449 = vunpack.c.l.b16 %v1661
        %v2450 = vunpack.c.h.b16 %v1661
        %v2451 = vunpack.c.l.b16 %v1662
        %v2452 = vunpack.c.h.b16 %v1662
        %v2453 = vunpack.c.l.b16 %v1663
        %v2454 = vunpack.c.h.b16 %v1663
        %v2455 = vunpack.c.l.b16 %v1664
        %v2456 = vunpack.c.h.b16 %v1664
        %v2457 = vunpack.c.l.b16 %v1665
        %v2458 = vunpack.c.h.b16 %v1665
        %v2459 = vunpack.c.l.b16 %v1666
        %v2460 = vunpack.c.h.b16 %v1666
        %v2461 = vunpack.c.l.b16 %v1667
        %v2462 = vunpack.c.h.b16 %v1667
        %v2463 = vunpack.c.l.b16 %v1668
        %v2464 = vunpack.c.h.b16 %v1668
        %v2465 = vunpack.c.l.b16 %v1669
        %v2466 = vunpack.c.h.b16 %v1669
        %v2467 = vunpack.c.l.b16 %v1670
        %v2468 = vunpack.c.h.b16 %v1670
        %v2469 = vunpack.c.l.b16 %v1671
        %v2470 = vunpack.c.h.b16 %v1671
        %v2471 = vunpack.c.l.b16 %v1672
        %v2472 = vunpack.c.h.b16 %v1672
        %v2473 = vunpack.c.l.b16 %v1673
        %v2474 = vunpack.c.h.b16 %v1673
        %v2475 = vunpack.c.l.b16 %v1674
        %v2476 = vunpack.c.h.b16 %v1674
        %v2477 = vunpack.c.l.b16 %v1675
        %v2478 = vunpack.c.h.b16 %v1675
        %v2479 = vunpack.c.l.b16 %v1676
        %v2480 = vunpack.c.h.b16 %v1676
        %v2481 = vunpack.c.l.b16 %v1677
        %v2482 = vunpack.c.h.b16 %v1677
        %v2483 = vunpack.c.l.b16 %v1678
        %v2484 = vunpack.c.h.b16 %v1678
        %v2485 = vunpack.c.l.b16 %v1679
        %v2486 = vunpack.c.h.b16 %v1679
        %v2487 = vunpack.c.l.b16 %v1680
        %v2488 = vunpack.c.h.b16 %v1680
        %v2489 = vunpack.c.l.b16 %v1681
        %v2490 = vunpack.c.h.b16 %v1681
        %v2491 = vunpack.c.l.b16 %v1682
        %v2492 = vunpack.c.h.b16 %v1682
        %v2493 = vunpack.c.l.b16 %v1683
        %v2494 = vunpack.c.h.b16 %v1683
        %v2495 = vunpack.c.l.b16 %v1684
        %v2496 = vunpack.c.h.b16 %v1684
        %v2497 = vunpack.c.l.b16 %v1685
        %v2498 = vunpack.c.h.b16 %v1685
        %v2499 = vunpack.c.l.b16 %v1686
        %v2500 = vunpack.c.h.b16 %v1686
        %v2501 = vunpack.c.l.b16 %v1687
        %v2502 = vunpack.c.h.b16 %v1687
        %v2503 = vunpack.c.l.b16 %v1688
        %v2504 = vunpack.c.h.b16 %v1688
        %v2505 = vunpack.c.l.b16 %v1689
        %v2506 = vunpack.c.h.b16 %v1689
        %v2507 = vunpack.c.l.b16 %v1690
        %v2508 = vunpack.c.h.b16 %v1690
        %v2509 = vunpack.c.l.b16 %v1691
        %v2510 = vunpack.c.h.b16 %v1691
        %v2511 = vunpack.c.l.b16 %v1692
        %v2512 = vunpack.c.h.b16 %v1692
        %v2513 = vunpack.c.l.b16 %v1693
        %v2514 = vunpack.c.h.b16 %v1693
        %v2515 = vunpack.c.l.b16 %v1694
        %v2516 = vunpack.c.h.b16 %v1694
        %v2517 = vunpack.c.l.b16 %v1695
        %v2518 = vunpack.c.h.b16 %v1695
        %v2519 = vunpack.c.l.b16 %v1696
        %v2520 = vunpack.c.h.b16 %v1696
        %v2521 = vunpack.c.l.b16 %v1697
        %v2522 = vunpack.c.h.b16 %v1697
        %v2523 = vunpack.c.l.b16 %v1698
        %v2524 = vunpack.c.h.b16 %v1698
        %v2525 = vunpack.c.l.b16 %v1699
        %v2526 = vunpack.c.h.b16 %v1699
        %v2527 = vunpack.c.l.b16 %v1700
        %v2528 = vunpack.c.h.b16 %v1700
        %v2529 = vunpack.c.l.b16 %v1701
        %v2530 = vunpack.c.h.b16 %v1701
        %v2531 = vunpack.c.l.b16 %v1702
        %v2532 = vunpack.c.h.b16 %v1702
        %v2533 = vunpack.c.l.b16 %v1703
        %v2534 = vunpack.c.h.b16 %v1703
        %v2535 = vunpack.c.l.b16 %v1704
        %v2536 = vunpack.c.h.b16 %v1704
        %v2537 = vunpack.c.l.b16 %v1705
        %v2538 = vunpack.c.h.b16 %v1705
        %v2539 = vunpack.c.l.b16 %v1706
        %v2540 = vunpack.c.h.b16 %v1706
        %v2541 = vunpack.c.l.b16 %v1707
        %v2542 = vunpack.c.h.b16 %v1707
        %v2543 = vunpack.c.l.b16 %v1708
        %v2544 = vunpack.c.h.b16 %v1708
        %v2545 = vunpack.c.l.b16 %v1709
        %v2546 = vunpack.c.h.b16 %v1709
        %v2547 = vunpack.c.l.b16 %v1710
        %v2548 = vunpack.c.h.b16 %v1710
        %v2549 = vunpack.c.l.b16 %v1711
        %v2550 = vunpack.c.h.b16 %v1711
        %v2551 = vunpack.c.l.b16 %v1712
        %v2552 = vunpack.c.h.b16 %v1712
        %v2553 = vunpack.c.l.b16 %v1713
        %v2554 = vunpack.c.h.b16 %v1713
        %v2555 = vunpack.c.l.b16 %v1714
        %v2556 = vunpack.c.h.b16 %v1714
        %v2557 = vunpack.c.l.b16 %v1715
        %v2558 = vunpack.c.h.b16 %v1715
        %v2559 = vunpack.c.l.b16 %v1716
        %v2560 = vunpack.c.h.b16 %v1716
        %v2561 = vunpack.c.l.b16 %v1717
        %v2562 = vunpack.c.h.b16 %v1717
        %v2563 = vunpack.c.l.b16 %v1718
        %v2564 = vunpack.c.h.b16 %v1718
        %v2565 = vunpack.c.l.b16 %v1719
        %v2566 = vunpack.c.h.b16 %v1719
        %v2567 = vunpack.c.l.b16 %v1720
        %v2568 = vunpack.c.h.b16 %v1720
        %v2569 = vunpack.c.l.b16 %v1721
        %v2570 = vunpack.c.h.b16 %v1721
        %v2571 = vunpack.c.l.b16 %v1722
        %v2572 = vunpack.c.h.b16 %v1722
        %v2573 = vunpack.c.l.b16 %v1723
        %v2574 = vunpack.c.h.b16 %v1723
        %v2575 = vunpack.c.l.b16 %v1724
        %v2576 = vunpack.c.h.b16 %v1724
        %v2577 = vunpack.c.l.b16 %v1725
        %v2578 = vunpack.c.h.b16 %v1725
        %v2579 = vunpack.c.l.b16 %v1726
        %v2580 = vunpack.c.h.b16 %v1726
        %v2581 = vunpack.c.l.b16 %v1727
        %v2582 = vunpack.c.h.b16 %v1727
        %v2583 = vunpack.c.l.b16 %v1728
        %v2584 = vunpack.c.h.b16 %v1728
        %v2585 = vunpack.c.l.b16 %v1729
        %v2586 = vunpack.c.h.b16 %v1729
        %v2587 = vunpack.c.l.b16 %v1730
        %v2588 = vunpack.c.h.b16 %v1730
        %v2589 = vunpack.c.l.b16 %v1731
        %v2590 = vunpack.c.h.b16 %v1731
        %v2591 = vunpack.c.l.b16 %v1732
        %v2592 = vunpack.c.h.b16 %v1732
        %v2593 = vunpack.c.l.b16 %v1733
        %v2594 = vunpack.c.h.b16 %v1733
        %v2595 = vunpack.c.l.b16 %v1734
        %v2596 = vunpack.c.h.b16 %v1734
        %v2597 = vunpack.c.l.b16 %v1735
        %v2598 = vunpack.c.h.b16 %v1735
        %v2599 = vunpack.c.l.b16 %v1736
        %v2600 = vunpack.c.h.b16 %v1736
        %v2601 = vunpack.c.l.b16 %v1737
        %v2602 = vunpack.c.h.b16 %v1737
        %v2603 = vunpack.c.l.b16 %v1738
        %v2604 = vunpack.c.h.b16 %v1738
        %v2605 = vunpack.c.l.b16 %v1739
        %v2606 = vunpack.c.h.b16 %v1739
        %v2607 = vunpack.c.l.b16 %v1740
        %v2608 = vunpack.c.h.b16 %v1740
        %v2609 = vunpack.c.l.b16 %v1741
        %v2610 = vunpack.c.h.b16 %v1741
        %v2611 = vunpack.c.l.b16 %v1742
        %v2612 = vunpack.c.h.b16 %v1742
        %v2613 = vunpack.c.l.b16 %v1743
        %v2614 = vunpack.c.h.b16 %v1743
        %v2615 = vunpack.c.l.b16 %v1744
        %v2616 = vunpack.c.h.b16 %v1744
        %v2617 = vunpack.c.l.b16 %v1745
        %v2618 = vunpack.c.h.b16 %v1745
        %v2619 = vunpack.c.l.b16 %v1746
        %v2620 = vunpack.c.h.b16 %v1746
        %v2621 = vunpack.c.l.b16 %v1747
        %v2622 = vunpack.c.h.b16 %v1747
        %v2623 = vunpack.c.l.b16 %v1748
        %v2624 = vunpack.c.h.b16 %v1748
        %v2625 = vunpack.c.l.b16 %v1749
        %v2626 = vunpack.c.h.b16 %v1749
        %v2627 = vunpack.c.l.b16 %v1750
        %v2628 = vunpack.c.h.b16 %v1750
        %v2629 = vunpack.c.l.b16 %v1751
        %v2630 = vunpack.c.h.b16 %v1751
        %v2631 = vunpack.c.l.b16 %v1752
        %v2632 = vunpack.c.h.b16 %v1752
        %v2633 = vunpack.c.l.b16 %v1753
        %v2634 = vunpack.c.h.b16 %v1753
        %v2635 = vunpack.c.l.b16 %v1754
        %v2636 = vunpack.c.h.b16 %v1754
        %v2637 = vunpack.c.l.b16 %v1755
        %v2638 = vunpack.c.h.b16 %v1755
        %v2639 = vunpack.c.l.b16 %v1756
        %v2640 = vunpack.c.h.b16 %v1756
        %v2641 = vunpack.c.l.b16 %v1757
        %v2642 = vunpack.c.h.b16 %v1757
        %v2643 = vunpack.c.l.b16 %v1758
        %v2644 = vunpack.c.h.b16 %v1758
        %v2645 = vunpack.c.l.b16 %v1759
        %v2646 = vunpack.c.h.b16 %v1759
        %v2647 = vunpack.c.l.b16 %v1760
        %v2648 = vunpack.c.h.b16 %v1760
        %v2649 = vunpack.c.l.b16 %v1761
        %v2650 = vunpack.c.h.b16 %v1761
        %v2651 = vunpack.c.l.b16 %v1762
        %v2652 = vunpack.c.h.b16 %v1762
        %v2653 = vunpack.c.l.b16 %v1763
        %v2654 = vunpack.c.h.b16 %v1763
        %v2655 = vunpack.c.l.b16 %v1764
        %v2656 = vunpack.c.h.b16 %v1764
        %v2657 = vunpack.c.l.b16 %v1765
        %v2658 = vunpack.c.h.b16 %v1765
        %v2659 = vunpack.c.l.b16 %v1766
        %v2660 = vunpack.c.h.b16 %v1766
        %v2661 = vunpack.c.l.b16 %v1767
        %v2662 = vunpack.c.h.b16 %v1767
        %v2663 = vunpack.c.l.b16 %v1768
        %v2664 = vunpack.c.h.b16 %v1768
        %v2665 = vunpack.c.l.b16 %v1769
        %v2666 = vunpack.c.h.b16 %v1769
        %v2667 = vunpack.c.l.b16 %v1770
        %v2668 = vunpack.c.h.b16 %v1770
        %v2669 = vunpack.c.l.b16 %v1771
        %v2670 = vunpack.c.h.b16 %v1771
        %v2671 = vunpack.c.l.b16 %v1772
        %v2672 = vunpack.c.h.b16 %v1772
        %v2673 = vunpack.c.l.b16 %v1773
        %v2674 = vunpack.c.h.b16 %v1773
        %v2675 = vunpack.c.l.b16 %v1774
        %v2676 = vunpack.c.h.b16 %v1774
        %v2677 = vunpack.c.l.b16 %v1775
        %v2678 = vunpack.c.h.b16 %v1775
        %v2679 = vunpack.c.l.b16 %v1776
        %v2680 = vunpack.c.h.b16 %v1776
        %v2681 = vunpack.c.l.b16 %v1777
        %v2682 = vunpack.c.h.b16 %v1777
        %v2683 = vunpack.c.l.b16 %v1778
        %v2684 = vunpack.c.h.b16 %v1778
        %v2685 = vunpack.c.l.b16 %v1779
        %v2686 = vunpack.c.h.b16 %v1779
        %v2687 = vunpack.c.l.b16 %v1780
        %v2688 = vunpack.c.h.b16 %v1780
        %v2689 = vunpack.c.l.b16 %v1781
        %v2690 = vunpack.c.h.b16 %v1781
        %v2691 = vunpack.c.l.b16 %v1782
        %v2692 = vunpack.c.h.b16 %v1782
        %v2693 = vunpack.c.l.b16 %v1783
        %v2694 = vunpack.c.h.b16 %v1783
        %v2695 = vunpack.c.l.b16 %v1784
        %v2696 = vunpack.c.h.b16 %v1784
        %v2697 = vunpack.c.l.b16 %v1785
        %v2698 = vunpack.c.h.b16 %v1785
        %v2699 = vunpack.c.l.b16 %v1786
        %v2700 = vunpack.c.h.b16 %v1786
        %v2701 = vunpack.c.l.b16 %v1787
        %v2702 = vunpack.c.h.b16 %v1787
        %v2703 = vunpack.c.l.b16 %v1788
        %v2704 = vunpack.c.h.b16 %v1788
        %v2705 = vunpack.c.l.b16 %v1789
        %v2706 = vunpack.c.h.b16 %v1789
        %v2707 = vunpack.c.l.b16 %v1790
        %v2708 = vunpack.c.h.b16 %v1790
        %v2709 = vunpack.c.l.b16 %v1791
        %v2710 = vunpack.c.h.b16 %v1791
        %v2711 = vunpack.c.l.b16 %v1792
        %v2712 = vunpack.c.h.b16 %v1792
        %v2713 = vunpack.c.l.b16 %v1793
        %v2714 = vunpack.c.h.b16 %v1793
        %v2715 = vunpack.c.l.b16 %v1794
        %v2716 = vunpack.c.h.b16 %v1794
        %v2717 = vunpack.c.l.b16 %v1795
        %v2718 = vunpack.c.h.b16 %v1795
        %v2719 = vunpack.c.l.b16 %v1796
        %v2720 = vunpack.c.h.b16 %v1796
        %v2721 = vunpack.c.l.b16 %v1797
        %v2722 = vunpack.c.h.b16 %v1797
        %v2723 = vunpack.c.l.b16 %v1798
        %v2724 = vunpack.c.h.b16 %v1798
        %v2725 = vunpack.c.l.b16 %v1799
        %v2726 = vunpack.c.h.b16 %v1799
        %v2727 = vunpack.c.l.b16 %v1800
        %v2728 = vunpack.c.h.b16 %v1800
        %v2729 = vunpack.c.l.b16 %v1801
        %v2730 = vunpack.c.h.b16 %v1801
        %v2731 = vunpack.c.l.b16 %v1802
        %v2732 = vunpack.c.h.b16 %v1802
        %v2733 = vunpack.c.l.b16 %v1803
        %v2734 = vunpack.c.h.b16 %v1803
        %v2735 = vunpack.c.l.b16 %v1804
        %v2736 = vunpack.c.h.b16 %v1804
        %v2737 = vunpack.c.l.b16 %v1805
        %v2738 = vunpack.c.h.b16 %v1805
        %v2739 = vunpack.c.l.b16 %v1806
        %v2740 = vunpack.c.h.b16 %v1806
        %v2741 = vunpack.c.l.b16 %v1807
        %v2742 = vunpack.c.h.b16 %v1807
        %v2743 = vunpack.c.l.b16 %v1808
        %v2744 = vunpack.c.h.b16 %v1808
        %v2745 = vunpack.c.l.b16 %v1809
        %v2746 = vunpack.c.h.b16 %v1809
        %v2747 = vunpack.c.l.b16 %v1810
        %v2748 = vunpack.c.h.b16 %v1810
        %v2749 = vunpack.c.l.b16 %v1811
        %v2750 = vunpack.c.h.b16 %v1811
        %v2751 = vunpack.c.l.b16 %v1812
        %v2752 = vunpack.c.h.b16 %v1812
        %v2753 = vunpack.c.l.b16 %v1813
        %v2754 = vunpack.c.h.b16 %v1813
        %v2755 = vunpack.c.l.b16 %v1814
        %v2756 = vunpack.c.h.b16 %v1814
        %v2757 = vunpack.c.l.b16 %v1815
        %v2758 = vunpack.c.h.b16 %v1815
        %v2759 = vunpack.c.l.b16 %v1816
        %v2760 = vunpack.c.h.b16 %v1816
        %v2761 = vunpack.c.l.b16 %v1817
        %v2762 = vunpack.c.h.b16 %v1817
        %v2763 = vunpack.c.l.b16 %v1818
        %v2764 = vunpack.c.h.b16 %v1818
        %v2765 = vunpack.c.l.b16 %v1819
        %v2766 = vunpack.c.h.b16 %v1819
        %v2767 = vunpack.c.l.b16 %v1820
        %v2768 = vunpack.c.h.b16 %v1820
        %v2769 = vunpack.c.l.b16 %v1821
        %v2770 = vunpack.c.h.b16 %v1821
        %v2771 = vunpack.c.l.b16 %v1822
        %v2772 = vunpack.c.h.b16 %v1822
        %v2773 = vunpack.c.l.b16 %v1823
        %v2774 = vunpack.c.h.b16 %v1823
        %v2775 = vunpack.c.l.b16 %v1824
        %v2776 = vunpack.c.h.b16 %v1824
        %v2777 = vunpack.c.l.b16 %v1825
        %v2778 = vunpack.c.h.b16 %v1825
        %v2779 = vunpack.c.l.b16 %v1826
        %v2780 = vunpack.c.h.b16 %v1826
        %v2781 = vunpack.c.l.b16 %v1827
        %v2782 = vunpack.c.h.b16 %v1827
        %v2783 = vunpack.c.l.b16 %v1828
        %v2784 = vunpack.c.h.b16 %v1828
        %v2785 = vunpack.c.l.b16 %v1829
        %v2786 = vunpack.c.h.b16 %v1829
        %v2787 = vunpack.c.l.b16 %v1830
        %v2788 = vunpack.c.h.b16 %v1830
        %v2789 = vunpack.c.l.b16 %v1831
        %v2790 = vunpack.c.h.b16 %v1831
        %v2791 = vunpack.c.l.b16 %v1832
        %v2792 = vunpack.c.h.b16 %v1832
        %v2793 = vunpack.c.l.b16 %v1833
        %v2794 = vunpack.c.h.b16 %v1833
        %v2795 = vunpack.c.l.b16 %v1834
        %v2796 = vunpack.c.h.b16 %v1834
        %v2797 = vunpack.c.l.b16 %v1835
        %v2798 = vunpack.c.h.b16 %v1835
        %v2799 = vunpack.c.l.b16 %v1836
        %v2800 = vunpack.c.h.b16 %v1836
        %v2801 = vunpack.c.l.b16 %v1837
        %v2802 = vunpack.c.h.b16 %v1837
        %v2803 = vunpack.c.l.b16 %v1838
        %v2804 = vunpack.c.h.b16 %v1838
        %v2805 = vunpack.c.l.b16 %v1839
        %v2806 = vunpack.c.h.b16 %v1839
        %v2807 = vunpack.c.l.b16 %v1840
        %v2808 = vunpack.c.h.b16 %v1840
        %v2809 = vunpack.c.l.b16 %v1841
        %v2810 = vunpack.c.h.b16 %v1841
        %v2811 = vunpack.c.l.b16 %v1842
        %v2812 = vunpack.c.h.b16 %v1842
        %v2813 = vunpack.c.l.b16 %v1843
        %v2814 = vunpack.c.h.b16 %v1843
        %v2815 = vunpack.c.l.b16 %v1844
        %v2816 = vunpack.c.h.b16 %v1844
        %v2817 = vunpack.c.l.b16 %v1845
        %v2818 = vunpack.c.h.b16 %v1845
        %v2819 = vunpack.c.l.b16 %v1846
        %v2820 = vunpack.c.h.b16 %v1846
        %v2821 = vunpack.c.l.b16 %v1847
        %v2822 = vunpack.c.h.b16 %v1847
        %v2823 = vunpack.c.l.b16 %v1848
        %v2824 = vunpack.c.h.b16 %v1848
        %v2825 = vunpack.c.l.b16 %v1849
        %v2826 = vunpack.c.h.b16 %v1849
        %v2827 = vunpack.c.l.b16 %v1850
        %v2828 = vunpack.c.h.b16 %v1850
        %v2829 = vunpack.c.l.b16 %v1851
        %v2830 = vunpack.c.h.b16 %v1851
        %v2831 = vunpack.c.l.b16 %v1852
        %v2832 = vunpack.c.h.b16 %v1852
        %v2833 = vunpack.c.l.b16 %v1853
        %v2834 = vunpack.c.h.b16 %v1853
        %v2835 = vunpack.c.l.b16 %v1854
        %v2836 = vunpack.c.h.b16 %v1854
        %v2837 = vunpack.c.l.b16 %v1855
        %v2838 = vunpack.c.h.b16 %v1855
        %v2839 = vunpack.c.l.b16 %v1856
        %v2840 = vunpack.c.h.b16 %v1856
        %v2841 = vunpack.c.l.b16 %v1857
        %v2842 = vunpack.c.h.b16 %v1857
        %v2843 = vpack.c.b16 %v2339, %v2331
        %v2844 = vpack.c.b16 %v2340, %v2332
        %v2845 = vpack.c.b16 %v2341, %v2333
        %v2846 = vpack.c.b16 %v2342, %v2334
        %v2847 = vpack.c.b16 %v2343, %v2335
        %v2848 = vpack.c.b16 %v2344, %v2336
        %v2849 = vpack.c.b16 %v2345, %v2337
        %v2850 = vpack.c.b16 %v2346, %v2338
        %v2851 = vpack.c.b16 %v2355, %v2347
        %v2852 = vpack.c.b16 %v2356, %v2348
        %v2853 = vpack.c.b16 %v2357, %v2349
        %v2854 = vpack.c.b16 %v2358, %v2350
        %v2855 = vpack.c.b16 %v2359, %v2351
        %v2856 = vpack.c.b16 %v2360, %v2352
        %v2857 = vpack.c.b16 %v2361, %v2353
        %v2858 = vpack.c.b16 %v2362, %v2354
        %v2859 = vpack.c.b16 %v2371, %v2363
        %v2860 = vpack.c.b16 %v2372, %v2364
        %v2861 = vpack.c.b16 %v2373, %v2365
        %v2862 = vpack.c.b16 %v2374, %v2366
        %v2863 = vpack.c.b16 %v2375, %v2367
        %v2864 = vpack.c.b16 %v2376, %v2368
        %v2865 = vpack.c.b16 %v2377, %v2369
        %v2866 = vpack.c.b16 %v2378, %v2370
        %v2867 = vpack.c.b16 %v2387, %v2379
        %v2868 = vpack.c.b16 %v2388, %v2380
        %v2869 = vpack.c.b16 %v2389, %v2381
        %v2870 = vpack.c.b16 %v2390, %v2382
        %v2871 = vpack.c.b16 %v2391, %v2383
        %v2872 = vpack.c.b16 %v2392, %v2384
        %v2873 = vpack.c.b16 %v2393, %v2385
        %v2874 = vpack.c.b16 %v2394, %v2386
        %v2875 = vpack.c.b16 %v2403, %v2395
        %v2876 = vpack.c.b16 %v2404, %v2396
        %v2877 = vpack.c.b16 %v2405, %v2397
        %v2878 = vpack.c.b16 %v2406, %v2398
        %v2879 = vpack.c.b16 %v2407, %v2399
        %v2880 = vpack.c.b16 %v2408, %v2400
        %v2881 = vpack.c.b16 %v2409, %v2401
        %v2882 = vpack.c.b16 %v2410, %v2402
        %v2883 = vpack.c.b16 %v2419, %v2411
        %v2884 = vpack.c.b16 %v2420, %v2412
        %v2885 = vpack.c.b16 %v2421, %v2413
        %v2886 = vpack.c.b16 %v2422, %v2414
        %v2887 = vpack.c.b16 %v2423, %v2415
        %v2888 = vpack.c.b16 %v2424, %v2416
        %v2889 = vpack.c.b16 %v2425, %v2417
        %v2890 = vpack.c.b16 %v2426, %v2418
        %v2891 = vpack.c.b16 %v2435, %v2427
        %v2892 = vpack.c.b16 %v2436, %v2428
        %v2893 = vpack.c.b16 %v2437, %v2429
        %v2894 = vpack.c.b16 %v2438, %v2430
        %v2895 = vpack.c.b16 %v2439, %v2431
        %v2896 = vpack.c.b16 %v2440, %v2432
        %v2897 = vpack.c.b16 %v2441, %v2433
        %v2898 = vpack.c.b16 %v2442, %v2434
        %v2899 = vpack.c.b16 %v2451, %v2443
        %v2900 = vpack.c.b16 %v2452, %v2444
        %v2901 = vpack.c.b16 %v2453, %v2445
        %v2902 = vpack.c.b16 %v2454, %v2446
        %v2903 = vpack.c.b16 %v2455, %v2447
        %v2904 = vpack.c.b16 %v2456, %v2448
        %v2905 = vpack.c.b16 %v2457, %v2449
        %v2906 = vpack.c.b16 %v2458, %v2450
        %v2907 = vpack.c.b16 %v2467, %v2459
        %v2908 = vpack.c.b16 %v2468, %v2460
        %v2909 = vpack.c.b16 %v2469, %v2461
        %v2910 = vpack.c.b16 %v2470, %v2462
        %v2911 = vpack.c.b16 %v2471, %v2463
        %v2912 = vpack.c.b16 %v2472, %v2464
        %v2913 = vpack.c.b16 %v2473, %v2465
        %v2914 = vpack.c.b16 %v2474, %v2466
        %v2915 = vpack.c.b16 %v2483, %v2475
        %v2916 = vpack.c.b16 %v2484, %v2476
        %v2917 = vpack.c.b16 %v2485, %v2477
        %v2918 = vpack.c.b16 %v2486, %v2478
        %v2919 = vpack.c.b16 %v2487, %v2479
        %v2920 = vpack.c.b16 %v2488, %v2480
        %v2921 = vpack.c.b16 %v2489, %v2481
        %v2922 = vpack.c.b16 %v2490, %v2482
        %v2923 = vpack.c.b16 %v2499, %v2491
        %v2924 = vpack.c.b16 %v2500, %v2492
        %v2925 = vpack.c.b16 %v2501, %v2493
        %v2926 = vpack.c.b16 %v2502, %v2494
        %v2927 = vpack.c.b16 %v2503, %v2495
        %v2928 = vpack.c.b16 %v2504, %v2496
        %v2929 = vpack.c.b16 %v2505, %v2497
        %v2930 = vpack.c.b16 %v2506, %v2498
        %v2931 = vpack.c.b16 %v2515, %v2507
        %v2932 = vpack.c.b16 %v2516, %v2508
        %v2933 = vpack.c.b16 %v2517, %v2509
        %v2934 = vpack.c.b16 %v2518, %v2510
        %v2935 = vpack.c.b16 %v2519, %v2511
        %v2936 = vpack.c.b16 %v2520, %v2512
        %v2937 = vpack.c.b16 %v2521, %v2513
        %v2938 = vpack.c.b16 %v2522, %v2514
        %v2939 = vpack.c.b16 %v2531, %v2523
        %v2940 = vpack.c.b16 %v2532, %v2524
        %v2941 = vpack.c.b16 %v2533, %v2525
        %v2942 = vpack.c.b16 %v2534, %v2526
        %v2943 = vpack.c.b16 %v2535, %v2527
        %v2944 = vpack.c.b16 %v2536, %v2528
        %v2945 = vpack.c.b16 %v2537, %v2529
        %v2946 = vpack.c.b16 %v2538, %v2530
        %v2947 = vpack.c.b16 %v2547, %v2539
        %v2948 = vpack.c.b16 %v2548, %v2540
        %v2949 = vpack.c.b16 %v2549, %v2541
        %v2950 = vpack.c.b16 %v2550, %v2542
        %v2951 = vpack.c.b16 %v2551, %v2543
        %v2952 = vpack.c.b16 %v2552, %v2544
        %v2953 = vpack.c.b16 %v2553, %v2545
        %v2954 = vpack.c.b16 %v2554, %v2546
        %v2955 = vpack.c.b16 %v2563, %v2555
        %v2956 = vpack.c.b16 %v2564, %v2556
        %v2957 = vpack.c.b16 %v2565, %v2557
        %v2958 = vpack.c.b16 %v2566, %v2558
        %v2959 = vpack.c.b16 %v2567, %v2559
        %v2960 = vpack.c.b16 %v2568, %v2560
        %v2961 = vpack.c.b16 %v2569, %v2561
        %v2962 = vpack.c.b16 %v2570, %v2562
        %v2963 = vpack.c.b16 %v2579, %v2571
        %v2964 = vpack.c.b16 %v2580, %v2572
        %v2965 = vpack.c.b16 %v2581, %v2573
        %v2966 = vpack.c.b16 %v2582, %v2574
        %v2967 = vpack.c.b16 %v2583, %v2575
        %v2968 = vpack.c.b16 %v2584, %v2576
        %v2969 = vpack.c.b16 %v2585, %v2577
        %v2970 = vpack.c.b16 %v2586, %v2578
        %v2971 = vpack.c.b16 %v2595, %v2587
        %v2972 = vpack.c.b16 %v2596, %v2588
        %v2973 = vpack.c.b16 %v2597, %v2589
        %v2974 = vpack.c.b16 %v2598, %v2590
        %v2975 = vpack.c.b16 %v2599, %v2591
        %v2976 = vpack.c.b16 %v2600, %v2592
        %v2977 = vpack.c.b16 %v2601, %v2593
        %v2978 = vpack.c.b16 %v2602, %v2594
        %v2979 = vpack.c.b16 %v2611, %v2603
        %v2980 = vpack.c.b16 %v2612, %v2604
        %v2981 = vpack.c.b16 %v2613, %v2605
        %v2982 = vpack.c.b16 %v2614, %v2606
        %v2983 = vpack.c.b16 %v2615, %v2607
        %v2984 = vpack.c.b16 %v2616, %v2608
        %v2985 = vpack.c.b16 %v2617, %v2609
        %v2986 = vpack.c.b16 %v2618, %v2610
        %v2987 = vpack.c.b16 %v2627, %v2619
        %v2988 = vpack.c.b16 %v2628, %v2620
        %v2989 = vpack.c.b16 %v2629, %v2621
        %v2990 = vpack.c.b16 %v2630, %v2622
        %v2991 = vpack.c.b16 %v2631, %v2623
        %v2992 = vpack.c.b16 %v2632, %v2624
        %v2993 = vpack.c.b16 %v2633, %v2625
        %v2994 = vpack.c.b16 %v2634, %v2626
        %v2995 = vpack.c.b16 %v2643, %v2635
        %v2996 = vpack.c.b16 %v2644, %v2636
        %v2997 = vpack.c.b16 %v2645, %v2637
        %v2998 = vpack.c.b16 %v2646, %v2638
        %v2999 = vpack.c.b16 %v2647, %v2639
        %v3000 = vpack.c.b16 %v2648, %v2640
        %v3001 = vpack.c.b16 %v2649, %v2641
        %v3002 = vpack.c.b16 %v2650, %v2642
        %v3003 = vpack.c.b16 %v2659, %v2651
        %v3004 = vpack.c.b16 %v2660, %v2652
        %v3005 = vpack.c.b16 %v2661, %v2653
        %v3006 = vpack.c.b16 %v2662, %v2654
        %v3007 = vpack.c.b16 %v2663, %v2655
        %v3008 = vpack.c.b16 %v2664, %v2656
        %v3009 = vpack.c.b16 %v2665, %v2657
        %v3010 = vpack.c.b16 %v2666, %v2658
        %v3011 = vpack.c.b16 %v2675, %v2667
        %v3012 = vpack.c.b16 %v2676, %v2668
        %v3013 = vpack.c.b16 %v2677, %v2669
        %v3014 = vpack.c.b16 %v2678, %v2670
        %v3015 = vpack.c.b16 %v2679, %v2671
        %v3016 = vpack.c.b16 %v2680, %v2672
        %v3017 = vpack.c.b16 %v2681, %v2673
        %v3018 = vpack.c.b16 %v2682, %v2674
        %v3019 = vpack.c.b16 %v2691, %v2683
        %v3020 = vpack.c.b16 %v2692, %v2684
        %v3021 = vpack.c.b16 %v2693, %v2685
        %v3022 = vpack.c.b16 %v2694, %v2686
        %v3023 = vpack.c.b16 %v2695, %v2687
        %v3024 = vpack.c.b16 %v2696, %v2688
        %v3025 = vpack.c.b16 %v2697, %v2689
        %v3026 = vpack.c.b16 %v2698, %v2690
        %v3027 = vpack.c.b16 %v2707, %v2699
        %v3028 = vpack.c.b16 %v2708, %v2700
        %v3029 = vpack.c.b16 %v2709, %v2701
        %v3030 = vpack.c.b16 %v2710, %v2702
        %v3031 = vpack.c.b16 %v2711, %v2703
        %v3032 = vpack.c.b16 %v2712, %v2704
        %v3033 = vpack.c.b16 %v2713, %v2705
        %v3034 = vpack.c.b16 %v2714, %v2706
        %v3035 = vpack.c.b16 %v2723, %v2715
        %v3036 = vpack.c.b16 %v2724, %v2716
        %v3037 = vpack.c.b16 %v2725, %v2717
        %v3038 = vpack.c.b16 %v2726, %v2718
        %v3039 = vpack.c.b16 %v2727, %v2719
        %v3040 = vpack.c.b16 %v2728, %v2720
        %v3041 = vpack.c.b16 %v2729, %v2721
        %v3042 = vpack.c.b16 %v2730, %v2722
        %v3043 = vpack.c.b16 %v2739, %v2731
        %v3044 = vpack.c.b16 %v2740, %v2732
        %v3045 = vpack.c.b16 %v2741, %v2733
        %v3046 = vpack.c.b16 %v2742, %v2734
        %v3047 = vpack.c.b16 %v2743, %v2735
        %v3048 = vpack.c.b16 %v2744, %v2736
        %v3049 = vpack.c.b16 %v2745, %v2737
        %v3050 = vpack.c.b16 %v2746, %v2738
        %v3051 = vpack.c.b16 %v2755, %v2747
        %v3052 = vpack.c.b16 %v2756, %v2748
        %v3053 = vpack.c.b16 %v2757, %v2749
        %v3054 = vpack.c.b16 %v2758, %v2750
        %v3055 = vpack.c.b16 %v2759, %v2751
        %v3056 = vpack.c.b16 %v2760, %v2752
        %v3057 = vpack.c.b16 %v2761, %v2753
        %v3058 = vpack.c.b16 %v2762, %v2754
        %v3059 = vpack.c.b16 %v2771, %v2763
        %v3060 = vpack.c.b16 %v2772, %v2764
        %v3061 = vpack.c.b16 %v2773, %v2765
        %v3062 = vpack.c.b16 %v2774, %v2766
        %v3063 = vpack.c.b16 %v2775, %v2767
        %v3064 = vpack.c.b16 %v2776, %v2768
        %v3065 = vpack.c.b16 %v2777, %v2769
        %v3066 = vpack.c.b16 %v2778, %v2770
        %v3067 = vpack.c.b16 %v2787, %v2779
        %v3068 = vpack.c.b16 %v2788, %v2780
        %v3069 = vpack.c.b16 %v2789, %v2781
        %v3070 = vpack.c.b16 %v2790, %v2782
        %v3071 = vpack.c.b16 %v2791, %v2783
        %v3072 = vpack.c.b16 %v2792, %v2784
        %v3073 = vpack.c.b16 %v2793, %v2785
        %v3074 = vpack.c.b16 %v2794, %v2786
        %v3075 = vpack.c.b16 %v2803, %v2795
        %v3076 = vpack.c.b16 %v2804, %v2796
        %v3077 = vpack.c.b16 %v2805, %v2797
        %v3078 = vpack.c.b16 %v2806, %v2798
        %v3079 = vpack.c.b16 %v2807, %v2799
        %v3080 = vpack.c.b16 %v2808, %v2800
        %v3081 = vpack.c.b16 %v2809, %v2801
        %v3082 = vpack.c.b16 %v2810, %v2802
        %v3083 = vpack.c.b16 %v2819, %v2811
        %v3084 = vpack.c.b16 %v2820, %v2812
        %v3085 = vpack.c.b16 %v2821, %v2813
        %v3086 = vpack.c.b16 %v2822, %v2814
        %v3087 = vpack.c.b16 %v2823, %v2815
        %v3088 = vpack.c.b16 %v2824, %v2816
        %v3089 = vpack.c.b16 %v2825, %v2817
        %v3090 = vpack.c.b16 %v2826, %v2818
        %v3091 = vpack.c.b16 %v2835, %v2827
        %v3092 = vpack.c.b16 %v2836, %v2828
        %v3093 = vpack.c.b16 %v2837, %v2829
        %v3094 = vpack.c.b16 %v2838, %v2830
        %v3095 = vpack.c.b16 %v2839, %v2831
        %v3096 = vpack.c.b16 %v2840, %v2832
        %v3097 = vpack.c.b16 %v2841, %v2833
        %v3098 = vpack.c.b16 %v2842, %v2834
        %3355 = vmatprep.subr.bf16.mxu0 %v2900
        %3356 = vmatpush1.bf16.msra.mxu0 %v2899
        %3357 = vmatprep.subr.bf16.mxu0 %v2892
        %3358 = vmatpush1.bf16.msra.mxu0 %v2891
        %3359 = vmatprep.subr.bf16.mxu0 %v2884
        %3360 = vmatpush1.bf16.msra.mxu0 %v2883
        %3361 = vmatprep.subr.bf16.mxu0 %v2876
        %3362 = vmatpush1.bf16.msra.mxu0 %v2875
        %3363 = vmatprep.subr.bf16.mxu0 %v2868
        %3364 = vmatpush1.bf16.msra.mxu0 %v2867
        %3365 = vmatprep.subr.bf16.mxu0 %v2860
        %3366 = vmatpush1.bf16.msra.mxu0 %v2859
        %3367 = vmatprep.subr.bf16.mxu0 %v2852
        %3368 = vmatpush1.bf16.msra.mxu0 %v2851
        %3369 = vmatprep.subr.bf16.mxu0 %v2844
        %3370 = vmatpush1.bf16.msra.mxu0 %v2843
        %3371 = vmatprep.subr.bf16.mxu0 %v2964
        %3372 = vmatpush2.bf16.msra.mxu0 %v2963
        %3373 = vmatprep.subr.bf16.mxu0 %v2956
        %3374 = vmatpush2.bf16.msra.mxu0 %v2955
        %3375 = vmatprep.subr.bf16.mxu0 %v2948
        %3376 = vmatpush2.bf16.msra.mxu0 %v2947
        %3377 = vmatprep.subr.bf16.mxu0 %v2940
        %3378 = vmatpush2.bf16.msra.mxu0 %v2939
        %3379 = vmatprep.subr.bf16.mxu0 %v2932
        %3380 = vmatpush2.bf16.msra.mxu0 %v2931
        %3381 = vmatprep.subr.bf16.mxu0 %v2924
        %3382 = vmatpush2.bf16.msra.mxu0 %v2923
        %3383 = vmatprep.subr.bf16.mxu0 %v2916
        %3384 = vmatpush2.bf16.msra.mxu0 %v2915
        %3385 = vmatprep.subr.bf16.mxu0 %v2908
        %3386 = vmatpush2.bf16.msra.mxu0 %v2907
        %3387 = vmatprep.mubr.bf16.mxu0 %v1510
        %3388 = vmatmul.mubr.bf16.gmra.mxu0 %v1509
        %v3389 = vpop.f32.mrf.mxu0
        %v3390 = vadd.f32 %v1946, %v3389
        %v3391 = vpop.f32.mrf.mxu0
        %v3392 = vadd.f32 %v1948, %v3391
        %v3393 = vpop.f32.mrf.mxu0
        %v3394 = vpop.f32.mrf.mxu0
        %3395 = vdwg.mxu0
        %3396 = vmatprep.subr.bf16.mxu0 %v3028
        %3397 = vmatpush1.bf16.msra.mxu0 %v3027
        %3398 = vmatprep.subr.bf16.mxu0 %v3020
        %3399 = vmatpush1.bf16.msra.mxu0 %v3019
        %3400 = vmatprep.subr.bf16.mxu0 %v3012
        %3401 = vmatpush1.bf16.msra.mxu0 %v3011
        %3402 = vmatprep.subr.bf16.mxu0 %v3004
        %3403 = vmatpush1.bf16.msra.mxu0 %v3003
        %3404 = vmatprep.subr.bf16.mxu0 %v2996
        %3405 = vmatpush1.bf16.msra.mxu0 %v2995
        %3406 = vmatprep.subr.bf16.mxu0 %v2988
        %3407 = vmatpush1.bf16.msra.mxu0 %v2987
        %3408 = vmatprep.subr.bf16.mxu0 %v2980
        %3409 = vmatpush1.bf16.msra.mxu0 %v2979
        %3410 = vmatprep.subr.bf16.mxu0 %v2972
        %3411 = vmatpush1.bf16.msra.mxu0 %v2971
        %3412 = vmatprep.subr.bf16.mxu0 %v3092
        %3413 = vmatpush2.bf16.msra.mxu0 %v3091
        %3414 = vmatprep.subr.bf16.mxu0 %v3084
        %3415 = vmatpush2.bf16.msra.mxu0 %v3083
        %3416 = vmatprep.subr.bf16.mxu0 %v3076
        %3417 = vmatpush2.bf16.msra.mxu0 %v3075
        %3418 = vmatprep.subr.bf16.mxu0 %v3068
        %3419 = vmatpush2.bf16.msra.mxu0 %v3067
        %3420 = vmatprep.subr.bf16.mxu0 %v3060
        %3421 = vmatpush2.bf16.msra.mxu0 %v3059
        %3422 = vmatprep.subr.bf16.mxu0 %v3052
        %3423 = vmatpush2.bf16.msra.mxu0 %v3051
        %3424 = vmatprep.subr.bf16.mxu0 %v3044
        %3425 = vmatpush2.bf16.msra.mxu0 %v3043
        %3426 = vmatprep.subr.bf16.mxu0 %v3036
        %3427 = vmatpush2.bf16.msra.mxu0 %v3035
        %3428 = vmatprep.mubr.bf16.mxu0 %v1512
        %3429 = vmatmul.mubr.bf16.gmra.mxu0 %v1511
        %v3430 = vpop.f32.mrf.mxu0
        %v3431 = vadd.f32 %v3390, %v3430
        %v3432 = vpop.f32.mrf.mxu0
        %v3433 = vadd.f32 %v3392, %v3432
        %v3434 = vpop.f32.mrf.mxu0
        %v3435 = vpop.f32.mrf.mxu0
        %3436 = vdwg.mxu0
        %3437 = vmatprep.subr.bf16.mxu0 %v2902
        %3438 = vmatpush1.bf16.msra.mxu0 %v2901
        %3439 = vmatprep.subr.bf16.mxu0 %v2894
        %3440 = vmatpush1.bf16.msra.mxu0 %v2893
        %3441 = vmatprep.subr.bf16.mxu0 %v2886
        %3442 = vmatpush1.bf16.msra.mxu0 %v2885
        %3443 = vmatprep.subr.bf16.mxu0 %v2878
        %3444 = vmatpush1.bf16.msra.mxu0 %v2877
        %3445 = vmatprep.subr.bf16.mxu0 %v2870
        %3446 = vmatpush1.bf16.msra.mxu0 %v2869
        %3447 = vmatprep.subr.bf16.mxu0 %v2862
        %3448 = vmatpush1.bf16.msra.mxu0 %v2861
        %3449 = vmatprep.subr.bf16.mxu0 %v2854
        %3450 = vmatpush1.bf16.msra.mxu0 %v2853
        %3451 = vmatprep.subr.bf16.mxu0 %v2846
        %3452 = vmatpush1.bf16.msra.mxu0 %v2845
        %3453 = vmatprep.subr.bf16.mxu0 %v2966
        %3454 = vmatpush2.bf16.msra.mxu0 %v2965
        %3455 = vmatprep.subr.bf16.mxu0 %v2958
        %3456 = vmatpush2.bf16.msra.mxu0 %v2957
        %3457 = vmatprep.subr.bf16.mxu0 %v2950
        %3458 = vmatpush2.bf16.msra.mxu0 %v2949
        %3459 = vmatprep.subr.bf16.mxu0 %v2942
        %3460 = vmatpush2.bf16.msra.mxu0 %v2941
        %3461 = vmatprep.subr.bf16.mxu0 %v2934
        %3462 = vmatpush2.bf16.msra.mxu0 %v2933
        %3463 = vmatprep.subr.bf16.mxu0 %v2926
        %3464 = vmatpush2.bf16.msra.mxu0 %v2925
        %3465 = vmatprep.subr.bf16.mxu0 %v2918
        %3466 = vmatpush2.bf16.msra.mxu0 %v2917
        %3467 = vmatprep.subr.bf16.mxu0 %v2910
        %3468 = vmatpush2.bf16.msra.mxu0 %v2909
        %3469 = vmatprep.mubr.bf16.mxu0 %v1510
        %3470 = vmatmul.mubr.bf16.gmra.mxu0 %v1509
        %v3471 = vpop.f32.mrf.mxu0
        %v3472 = vadd.f32 %v1987, %v3471
        %v3473 = vpop.f32.mrf.mxu0
        %v3474 = vadd.f32 %v1989, %v3473
        %v3475 = vpop.f32.mrf.mxu0
        %v3476 = vpop.f32.mrf.mxu0
        %3477 = vdwg.mxu0
        %3478 = vmatprep.subr.bf16.mxu0 %v3030
        %3479 = vmatpush1.bf16.msra.mxu0 %v3029
        %3480 = vmatprep.subr.bf16.mxu0 %v3022
        %3481 = vmatpush1.bf16.msra.mxu0 %v3021
        %3482 = vmatprep.subr.bf16.mxu0 %v3014
        %3483 = vmatpush1.bf16.msra.mxu0 %v3013
        %3484 = vmatprep.subr.bf16.mxu0 %v3006
        %3485 = vmatpush1.bf16.msra.mxu0 %v3005
        %3486 = vmatprep.subr.bf16.mxu0 %v2998
        %3487 = vmatpush1.bf16.msra.mxu0 %v2997
        %3488 = vmatprep.subr.bf16.mxu0 %v2990
        %3489 = vmatpush1.bf16.msra.mxu0 %v2989
        %3490 = vmatprep.subr.bf16.mxu0 %v2982
        %3491 = vmatpush1.bf16.msra.mxu0 %v2981
        %3492 = vmatprep.subr.bf16.mxu0 %v2974
        %3493 = vmatpush1.bf16.msra.mxu0 %v2973
        %3494 = vmatprep.subr.bf16.mxu0 %v3094
        %3495 = vmatpush2.bf16.msra.mxu0 %v3093
        %3496 = vmatprep.subr.bf16.mxu0 %v3086
        %3497 = vmatpush2.bf16.msra.mxu0 %v3085
        %3498 = vmatprep.subr.bf16.mxu0 %v3078
        %3499 = vmatpush2.bf16.msra.mxu0 %v3077
        %3500 = vmatprep.subr.bf16.mxu0 %v3070
        %3501 = vmatpush2.bf16.msra.mxu0 %v3069
        %3502 = vmatprep.subr.bf16.mxu0 %v3062
        %3503 = vmatpush2.bf16.msra.mxu0 %v3061
        %3504 = vmatprep.subr.bf16.mxu0 %v3054
        %3505 = vmatpush2.bf16.msra.mxu0 %v3053
        %3506 = vmatprep.subr.bf16.mxu0 %v3046
        %3507 = vmatpush2.bf16.msra.mxu0 %v3045
        %3508 = vmatprep.subr.bf16.mxu0 %v3038
        %3509 = vmatpush2.bf16.msra.mxu0 %v3037
        %3510 = vmatprep.mubr.bf16.mxu0 %v1512
        %3511 = vmatmul.mubr.bf16.gmra.mxu0 %v1511
        %v3512 = vpop.f32.mrf.mxu0
        %v3513 = vadd.f32 %v3472, %v3512
        %v3514 = vpop.f32.mrf.mxu0
        %v3515 = vadd.f32 %v3474, %v3514
        %v3516 = vpop.f32.mrf.mxu0
        %v3517 = vpop.f32.mrf.mxu0
        %3518 = vdwg.mxu0
        %3519 = vmatprep.subr.bf16.mxu0 %v2904
        %3520 = vmatpush1.bf16.msra.mxu0 %v2903
        %3521 = vmatprep.subr.bf16.mxu0 %v2896
        %3522 = vmatpush1.bf16.msra.mxu0 %v2895
        %3523 = vmatprep.subr.bf16.mxu0 %v2888
        %3524 = vmatpush1.bf16.msra.mxu0 %v2887
        %3525 = vmatprep.subr.bf16.mxu0 %v2880
        %3526 = vmatpush1.bf16.msra.mxu0 %v2879
        %3527 = vmatprep.subr.bf16.mxu0 %v2872
        %3528 = vmatpush1.bf16.msra.mxu0 %v2871
        %3529 = vmatprep.subr.bf16.mxu0 %v2864
        %3530 = vmatpush1.bf16.msra.mxu0 %v2863
        %3531 = vmatprep.subr.bf16.mxu0 %v2856
        %3532 = vmatpush1.bf16.msra.mxu0 %v2855
        %3533 = vmatprep.subr.bf16.mxu0 %v2848
        %3534 = vmatpush1.bf16.msra.mxu0 %v2847
        %3535 = vmatprep.subr.bf16.mxu0 %v2968
        %3536 = vmatpush2.bf16.msra.mxu0 %v2967
        %3537 = vmatprep.subr.bf16.mxu0 %v2960
        %3538 = vmatpush2.bf16.msra.mxu0 %v2959
        %3539 = vmatprep.subr.bf16.mxu0 %v2952
        %3540 = vmatpush2.bf16.msra.mxu0 %v2951
        %3541 = vmatprep.subr.bf16.mxu0 %v2944
        %3542 = vmatpush2.bf16.msra.mxu0 %v2943
        %3543 = vmatprep.subr.bf16.mxu0 %v2936
        %3544 = vmatpush2.bf16.msra.mxu0 %v2935
        %3545 = vmatprep.subr.bf16.mxu0 %v2928
        %3546 = vmatpush2.bf16.msra.mxu0 %v2927
        %3547 = vmatprep.subr.bf16.mxu0 %v2920
        %3548 = vmatpush2.bf16.msra.mxu0 %v2919
        %3549 = vmatprep.subr.bf16.mxu0 %v2912
        %3550 = vmatpush2.bf16.msra.mxu0 %v2911
        %3551 = vmatprep.mubr.bf16.mxu0 %v1510
        %3552 = vmatmul.mubr.bf16.gmra.mxu0 %v1509
        %v3553 = vpop.f32.mrf.mxu0
        %v3554 = vadd.f32 %v2028, %v3553
        %v3555 = vpop.f32.mrf.mxu0
        %v3556 = vadd.f32 %v2030, %v3555
        %v3557 = vpop.f32.mrf.mxu0
        %v3558 = vpop.f32.mrf.mxu0
        %3559 = vdwg.mxu0
        %3560 = vmatprep.subr.bf16.mxu0 %v3032
        %3561 = vmatpush1.bf16.msra.mxu0 %v3031
        %3562 = vmatprep.subr.bf16.mxu0 %v3024
        %3563 = vmatpush1.bf16.msra.mxu0 %v3023
        %3564 = vmatprep.subr.bf16.mxu0 %v3016
        %3565 = vmatpush1.bf16.msra.mxu0 %v3015
        %3566 = vmatprep.subr.bf16.mxu0 %v3008
        %3567 = vmatpush1.bf16.msra.mxu0 %v3007
        %3568 = vmatprep.subr.bf16.mxu0 %v3000
        %3569 = vmatpush1.bf16.msra.mxu0 %v2999
        %3570 = vmatprep.subr.bf16.mxu0 %v2992
        %3571 = vmatpush1.bf16.msra.mxu0 %v2991
        %3572 = vmatprep.subr.bf16.mxu0 %v2984
        %3573 = vmatpush1.bf16.msra.mxu0 %v2983
        %3574 = vmatprep.subr.bf16.mxu0 %v2976
        %3575 = vmatpush1.bf16.msra.mxu0 %v2975
        %3576 = vmatprep.subr.bf16.mxu0 %v3096
        %3577 = vmatpush2.bf16.msra.mxu0 %v3095
        %3578 = vmatprep.subr.bf16.mxu0 %v3088
        %3579 = vmatpush2.bf16.msra.mxu0 %v3087
        %3580 = vmatprep.subr.bf16.mxu0 %v3080
        %3581 = vmatpush2.bf16.msra.mxu0 %v3079
        %3582 = vmatprep.subr.bf16.mxu0 %v3072
        %3583 = vmatpush2.bf16.msra.mxu0 %v3071
        %3584 = vmatprep.subr.bf16.mxu0 %v3064
        %3585 = vmatpush2.bf16.msra.mxu0 %v3063
        %3586 = vmatprep.subr.bf16.mxu0 %v3056
        %3587 = vmatpush2.bf16.msra.mxu0 %v3055
        %3588 = vmatprep.subr.bf16.mxu0 %v3048
        %3589 = vmatpush2.bf16.msra.mxu0 %v3047
        %3590 = vmatprep.subr.bf16.mxu0 %v3040
        %3591 = vmatpush2.bf16.msra.mxu0 %v3039
        %3592 = vmatprep.mubr.bf16.mxu0 %v1512
        %3593 = vmatmul.mubr.bf16.gmra.mxu0 %v1511
        %v3594 = vpop.f32.mrf.mxu0
        %v3595 = vadd.f32 %v3554, %v3594
        %v3596 = vpop.f32.mrf.mxu0
        %v3597 = vadd.f32 %v3556, %v3596
        %v3598 = vpop.f32.mrf.mxu0
        %v3599 = vpop.f32.mrf.mxu0
        %3600 = vdwg.mxu0
        %3601 = vmatprep.subr.bf16.mxu0 %v2906
        %3602 = vmatpush1.bf16.msra.mxu0 %v2905
        %3603 = vmatprep.subr.bf16.mxu0 %v2898
        %3604 = vmatpush1.bf16.msra.mxu0 %v2897
        %3605 = vmatprep.subr.bf16.mxu0 %v2890
        %3606 = vmatpush1.bf16.msra.mxu0 %v2889
        %3607 = vmatprep.subr.bf16.mxu0 %v2882
        %3608 = vmatpush1.bf16.msra.mxu0 %v2881
        %3609 = vmatprep.subr.bf16.mxu0 %v2874
        %3610 = vmatpush1.bf16.msra.mxu0 %v2873
        %3611 = vmatprep.subr.bf16.mxu0 %v2866
        %3612 = vmatpush1.bf16.msra.mxu0 %v2865
        %3613 = vmatprep.subr.bf16.mxu0 %v2858
        %3614 = vmatpush1.bf16.msra.mxu0 %v2857
        %3615 = vmatprep.subr.bf16.mxu0 %v2850
        %3616 = vmatpush1.bf16.msra.mxu0 %v2849
        %3617 = vmatprep.subr.bf16.mxu0 %v2970
        %3618 = vmatpush2.bf16.msra.mxu0 %v2969
        %3619 = vmatprep.subr.bf16.mxu0 %v2962
        %3620 = vmatpush2.bf16.msra.mxu0 %v2961
        %3621 = vmatprep.subr.bf16.mxu0 %v2954
        %3622 = vmatpush2.bf16.msra.mxu0 %v2953
        %3623 = vmatprep.subr.bf16.mxu0 %v2946
        %3624 = vmatpush2.bf16.msra.mxu0 %v2945
        %3625 = vmatprep.subr.bf16.mxu0 %v2938
        %3626 = vmatpush2.bf16.msra.mxu0 %v2937
        %3627 = vmatprep.subr.bf16.mxu0 %v2930
        %3628 = vmatpush2.bf16.msra.mxu0 %v2929
        %3629 = vmatprep.subr.bf16.mxu0 %v2922
        %3630 = vmatpush2.bf16.msra.mxu0 %v2921
        %3631 = vmatprep.subr.bf16.mxu0 %v2914
        %3632 = vmatpush2.bf16.msra.mxu0 %v2913
        %3633 = vmatprep.mubr.bf16.mxu0 %v1510
        %3634 = vmatmul.mubr.bf16.gmra.mxu0 %v1509
        %v3635 = vpop.f32.mrf.mxu0
        %v3636 = vadd.f32 %v2069, %v3635
        %v3637 = vpop.f32.mrf.mxu0
        %v3638 = vadd.f32 %v2071, %v3637
        %v3639 = vpop.f32.mrf.mxu0
        %v3640 = vpop.f32.mrf.mxu0
        %3641 = vdwg.mxu0
        %3642 = vmatprep.subr.bf16.mxu0 %v3034
        %3643 = vmatpush1.bf16.msra.mxu0 %v3033
        %3644 = vmatprep.subr.bf16.mxu0 %v3026
        %3645 = vmatpush1.bf16.msra.mxu0 %v3025
        %3646 = vmatprep.subr.bf16.mxu0 %v3018
        %3647 = vmatpush1.bf16.msra.mxu0 %v3017
        %3648 = vmatprep.subr.bf16.mxu0 %v3010
        %3649 = vmatpush1.bf16.msra.mxu0 %v3009
        %3650 = vmatprep.subr.bf16.mxu0 %v3002
        %3651 = vmatpush1.bf16.msra.mxu0 %v3001
        %3652 = vmatprep.subr.bf16.mxu0 %v2994
        %3653 = vmatpush1.bf16.msra.mxu0 %v2993
        %3654 = vmatprep.subr.bf16.mxu0 %v2986
        %3655 = vmatpush1.bf16.msra.mxu0 %v2985
        %3656 = vmatprep.subr.bf16.mxu0 %v2978
        %3657 = vmatpush1.bf16.msra.mxu0 %v2977
        %3658 = vmatprep.subr.bf16.mxu0 %v3098
        %3659 = vmatpush2.bf16.msra.mxu0 %v3097
        %3660 = vmatprep.subr.bf16.mxu0 %v3090
        %3661 = vmatpush2.bf16.msra.mxu0 %v3089
        %3662 = vmatprep.subr.bf16.mxu0 %v3082
        %3663 = vmatpush2.bf16.msra.mxu0 %v3081
        %3664 = vmatprep.subr.bf16.mxu0 %v3074
        %3665 = vmatpush2.bf16.msra.mxu0 %v3073
        %3666 = vmatprep.subr.bf16.mxu0 %v3066
        %3667 = vmatpush2.bf16.msra.mxu0 %v3065
        %3668 = vmatprep.subr.bf16.mxu0 %v3058
        %3669 = vmatpush2.bf16.msra.mxu0 %v3057
        %3670 = vmatprep.subr.bf16.mxu0 %v3050
        %3671 = vmatpush2.bf16.msra.mxu0 %v3049
        %3672 = vmatprep.subr.bf16.mxu0 %v3042
        %3673 = vmatpush2.bf16.msra.mxu0 %v3041
        %3674 = vmatprep.mubr.bf16.mxu0 %v1512
        %3675 = vmatmul.mubr.bf16.gmra.mxu0 %v1511
        %v3676 = vpop.f32.mrf.mxu0
        %v3677 = vadd.f32 %v3636, %v3676
        %v3678 = vpop.f32.mrf.mxu0
        %v3679 = vadd.f32 %v3638, %v3678
        %v3680 = vpop.f32.mrf.mxu0
        %v3681 = vpop.f32.mrf.mxu0
        %3682 = vdwg.mxu0
        %v3683 = vld [vmem:[%s12] sm:$0xff]
        %v3685 = vlaneseq
        %v3686 = vshrl.u32 %v3685, 7
        %v3687 = vsub.s32 0, %v3686
        %v3688 = vrot.slane %v3683, %v3687
        %v3689 = vlaneseq
        %v3690 = vshrl.u32 %v3689, 7
        %v3691 = vsub.s32 1, %v3690
        %v3692 = vrot.slane %v3683, %v3691
        %v3693 = vlaneseq
        %v3694 = vshrl.u32 %v3693, 7
        %v3695 = vsub.s32 2, %v3694
        %v3696 = vrot.slane %v3683, %v3695
        %v3697 = vlaneseq
        %v3698 = vshrl.u32 %v3697, 7
        %v3699 = vsub.s32 3, %v3698
        %v3700 = vrot.slane %v3683, %v3699
        %v3701 = vlaneseq
        %v3702 = vshrl.u32 %v3701, 7
        %v3703 = vsub.s32 4, %v3702
        %v3704 = vrot.slane %v3683, %v3703
        %v3705 = vlaneseq
        %v3706 = vshrl.u32 %v3705, 7
        %v3707 = vsub.s32 5, %v3706
        %v3708 = vrot.slane %v3683, %v3707
        %v3709 = vlaneseq
        %v3710 = vshrl.u32 %v3709, 7
        %v3711 = vsub.s32 6, %v3710
        %v3712 = vrot.slane %v3683, %v3711
        %v3713 = vlaneseq
        %v3714 = vshrl.u32 %v3713, 7
        %v3715 = vsub.s32 7, %v3714
        %v3716 = vrot.slane %v3683, %v3715
        %v3725 = vadd.f32 %v3431, %v3688
        %v3726 = vadd.f32 %v3433, %v3692
        %v3727 = vadd.f32 %v3513, %v3696
        %v3728 = vadd.f32 %v3515, %v3700
        %v3729 = vadd.f32 %v3595, %v3704
        %v3730 = vadd.f32 %v3597, %v3708
        %v3731 = vadd.f32 %v3677, %v3712
        %v3732 = vadd.f32 %v3679, %v3716
        %v3733 = vmul.f32 %v3725, 0.2
        %v3734 = vmul.f32 %v3726, 0.2
        %v3735 = vmul.f32 %v3727, 0.2
        %v3736 = vmul.f32 %v3728, 0.2
        %v3737 = vmul.f32 %v3729, 0.2
        %v3738 = vmul.f32 %v3730, 0.2
        %v3739 = vmul.f32 %v3731, 0.2
        %v3740 = vmul.f32 %v3732, 0.2
        %v3741 = vmax.f32 %v3725, %v3733
        %v3742 = vmax.f32 %v3726, %v3734
        %v3743 = vmax.f32 %v3727, %v3735
        %v3744 = vmax.f32 %v3728, %v3736
        %v3745 = vmax.f32 %v3729, %v3737
        %v3746 = vmax.f32 %v3730, %v3738
        %v3747 = vmax.f32 %v3731, %v3739
        %v3748 = vmax.f32 %v3732, %v3740
        %v3749 = vpack.c.bf16 %v3741, %v3741
        %v3750 = vpack.c.bf16 %v3742, %v3742
        %v3751 = vpack.c.bf16 %v3743, %v3743
        %v3752 = vpack.c.bf16 %v3744, %v3744
        %v3753 = vpack.c.bf16 %v3745, %v3745
        %v3754 = vpack.c.bf16 %v3746, %v3746
        %v3755 = vpack.c.bf16 %v3747, %v3747
        %v3756 = vpack.c.bf16 %v3748, %v3748
        %v3757 = vld [vmem:[#allocation8] sm:$0xff]
        %v3758 = vld [vmem:[#allocation8 + $0x8] sm:$0xff]
        %v3759 = vld [vmem:[#allocation8 + $0x10] sm:$0xff]
        %v3760 = vld [vmem:[#allocation8 + $0x18] sm:$0xff]
        %v3761 = vld [vmem:[#allocation8 + $0x20] sm:$0xff]
        %v3762 = vld [vmem:[#allocation8 + $0x28] sm:$0xff]
        %v3763 = vld [vmem:[#allocation8 + $0x30] sm:$0xff]
        %v3764 = vld [vmem:[#allocation8 + $0x38] sm:$0xff]
        %v3765 = vld [vmem:[#allocation8 + $0x40] sm:$0xff]
        %v3766 = vld [vmem:[#allocation8 + $0x48] sm:$0xff]
        %v3767 = vld [vmem:[#allocation8 + $0x50] sm:$0xff]
        %v3768 = vld [vmem:[#allocation8 + $0x58] sm:$0xff]
        %v3769 = vld [vmem:[#allocation8 + $0x60] sm:$0xff]
        %v3770 = vld [vmem:[#allocation8 + $0x68] sm:$0xff]
        %v3771 = vld [vmem:[#allocation8 + $0x70] sm:$0xff]
        %v3772 = vld [vmem:[#allocation8 + $0x78] sm:$0xff]
        %v3773 = vld [vmem:[#allocation8 + $0x80] sm:$0xff]
        %v3774 = vld [vmem:[#allocation8 + $0x88] sm:$0xff]
        %v3775 = vld [vmem:[#allocation8 + $0x90] sm:$0xff]
        %v3776 = vld [vmem:[#allocation8 + $0x98] sm:$0xff]
        %v3777 = vld [vmem:[#allocation8 + $0xa0] sm:$0xff]
        %v3778 = vld [vmem:[#allocation8 + $0xa8] sm:$0xff]
        %v3779 = vld [vmem:[#allocation8 + $0xb0] sm:$0xff]
        %v3780 = vld [vmem:[#allocation8 + $0xb8] sm:$0xff]
        %v3781 = vld [vmem:[#allocation8 + $0xc0] sm:$0xff]
        %v3782 = vld [vmem:[#allocation8 + $0xc8] sm:$0xff]
        %v3783 = vld [vmem:[#allocation8 + $0xd0] sm:$0xff]
        %v3784 = vld [vmem:[#allocation8 + $0xd8] sm:$0xff]
        %v3785 = vld [vmem:[#allocation8 + $0xe0] sm:$0xff]
        %v3786 = vld [vmem:[#allocation8 + $0xe8] sm:$0xff]
        %v3787 = vld [vmem:[#allocation8 + $0xf0] sm:$0xff]
        %v3788 = vld [vmem:[#allocation8 + $0xf8] sm:$0xff]
        %v3789 = vld [vmem:[#allocation8 + $0x100] sm:$0xff]
        %v3790 = vld [vmem:[#allocation8 + $0x108] sm:$0xff]
        %v3791 = vld [vmem:[#allocation8 + $0x110] sm:$0xff]
        %v3792 = vld [vmem:[#allocation8 + $0x118] sm:$0xff]
        %v3793 = vld [vmem:[#allocation8 + $0x120] sm:$0xff]
        %v3794 = vld [vmem:[#allocation8 + $0x128] sm:$0xff]
        %v3795 = vld [vmem:[#allocation8 + $0x130] sm:$0xff]
        %v3796 = vld [vmem:[#allocation8 + $0x138] sm:$0xff]
        %v3797 = vld [vmem:[#allocation8 + $0x140] sm:$0xff]
        %v3798 = vld [vmem:[#allocation8 + $0x148] sm:$0xff]
        %v3799 = vld [vmem:[#allocation8 + $0x150] sm:$0xff]
        %v3800 = vld [vmem:[#allocation8 + $0x158] sm:$0xff]
        %v3801 = vld [vmem:[#allocation8 + $0x160] sm:$0xff]
        %v3802 = vld [vmem:[#allocation8 + $0x168] sm:$0xff]
        %v3803 = vld [vmem:[#allocation8 + $0x170] sm:$0xff]
        %v3804 = vld [vmem:[#allocation8 + $0x178] sm:$0xff]
        %v3805 = vld [vmem:[#allocation8 + $0x180] sm:$0xff]
        %v3806 = vld [vmem:[#allocation8 + $0x188] sm:$0xff]
        %v3807 = vld [vmem:[#allocation8 + $0x190] sm:$0xff]
        %v3808 = vld [vmem:[#allocation8 + $0x198] sm:$0xff]
        %v3809 = vld [vmem:[#allocation8 + $0x1a0] sm:$0xff]
        %v3810 = vld [vmem:[#allocation8 + $0x1a8] sm:$0xff]
        %v3811 = vld [vmem:[#allocation8 + $0x1b0] sm:$0xff]
        %v3812 = vld [vmem:[#allocation8 + $0x1b8] sm:$0xff]
        %v3813 = vld [vmem:[#allocation8 + $0x1c0] sm:$0xff]
        %v3814 = vld [vmem:[#allocation8 + $0x1c8] sm:$0xff]
        %v3815 = vld [vmem:[#allocation8 + $0x1d0] sm:$0xff]
        %v3816 = vld [vmem:[#allocation8 + $0x1d8] sm:$0xff]
        %v3817 = vld [vmem:[#allocation8 + $0x1e0] sm:$0xff]
        %v3818 = vld [vmem:[#allocation8 + $0x1e8] sm:$0xff]
        %v3819 = vld [vmem:[#allocation8 + $0x1f0] sm:$0xff]
        %v3820 = vld [vmem:[#allocation8 + $0x1f8] sm:$0xff]
        %v3821 = vld [vmem:[#allocation8 + $0x200] sm:$0xff]
        %v3822 = vld [vmem:[#allocation8 + $0x208] sm:$0xff]
        %v3823 = vld [vmem:[#allocation8 + $0x210] sm:$0xff]
        %v3824 = vld [vmem:[#allocation8 + $0x218] sm:$0xff]
        %v3825 = vld [vmem:[#allocation8 + $0x220] sm:$0xff]
        %v3826 = vld [vmem:[#allocation8 + $0x228] sm:$0xff]
        %v3827 = vld [vmem:[#allocation8 + $0x230] sm:$0xff]
        %v3828 = vld [vmem:[#allocation8 + $0x238] sm:$0xff]
        %v3829 = vld [vmem:[#allocation8 + $0x240] sm:$0xff]
        %v3830 = vld [vmem:[#allocation8 + $0x248] sm:$0xff]
        %v3831 = vld [vmem:[#allocation8 + $0x250] sm:$0xff]
        %v3832 = vld [vmem:[#allocation8 + $0x258] sm:$0xff]
        %v3833 = vld [vmem:[#allocation8 + $0x260] sm:$0xff]
        %v3834 = vld [vmem:[#allocation8 + $0x268] sm:$0xff]
        %v3835 = vld [vmem:[#allocation8 + $0x270] sm:$0xff]
        %v3836 = vld [vmem:[#allocation8 + $0x278] sm:$0xff]
        %v3837 = vld [vmem:[#allocation8 + $0x280] sm:$0xff]
        %v3838 = vld [vmem:[#allocation8 + $0x288] sm:$0xff]
        %v3839 = vld [vmem:[#allocation8 + $0x290] sm:$0xff]
        %v3840 = vld [vmem:[#allocation8 + $0x298] sm:$0xff]
        %v3841 = vld [vmem:[#allocation8 + $0x2a0] sm:$0xff]
        %v3842 = vld [vmem:[#allocation8 + $0x2a8] sm:$0xff]
        %v3843 = vld [vmem:[#allocation8 + $0x2b0] sm:$0xff]
        %v3844 = vld [vmem:[#allocation8 + $0x2b8] sm:$0xff]
        %v3845 = vld [vmem:[#allocation8 + $0x2c0] sm:$0xff]
        %v3846 = vld [vmem:[#allocation8 + $0x2c8] sm:$0xff]
        %v3847 = vld [vmem:[#allocation8 + $0x2d0] sm:$0xff]
        %v3848 = vld [vmem:[#allocation8 + $0x2d8] sm:$0xff]
        %v3849 = vld [vmem:[#allocation8 + $0x2e0] sm:$0xff]
        %v3850 = vld [vmem:[#allocation8 + $0x2e8] sm:$0xff]
        %v3851 = vld [vmem:[#allocation8 + $0x2f0] sm:$0xff]
        %v3852 = vld [vmem:[#allocation8 + $0x2f8] sm:$0xff]
        %v3853 = vld [vmem:[#allocation8 + $0x300] sm:$0xff]
        %v3854 = vld [vmem:[#allocation8 + $0x308] sm:$0xff]
        %v3855 = vld [vmem:[#allocation8 + $0x310] sm:$0xff]
        %v3856 = vld [vmem:[#allocation8 + $0x318] sm:$0xff]
        %v3857 = vld [vmem:[#allocation8 + $0x320] sm:$0xff]
        %v3858 = vld [vmem:[#allocation8 + $0x328] sm:$0xff]
        %v3859 = vld [vmem:[#allocation8 + $0x330] sm:$0xff]
        %v3860 = vld [vmem:[#allocation8 + $0x338] sm:$0xff]
        %v3861 = vld [vmem:[#allocation8 + $0x340] sm:$0xff]
        %v3862 = vld [vmem:[#allocation8 + $0x348] sm:$0xff]
        %v3863 = vld [vmem:[#allocation8 + $0x350] sm:$0xff]
        %v3864 = vld [vmem:[#allocation8 + $0x358] sm:$0xff]
        %v3865 = vld [vmem:[#allocation8 + $0x360] sm:$0xff]
        %v3866 = vld [vmem:[#allocation8 + $0x368] sm:$0xff]
        %v3867 = vld [vmem:[#allocation8 + $0x370] sm:$0xff]
        %v3868 = vld [vmem:[#allocation8 + $0x378] sm:$0xff]
        %v3869 = vld [vmem:[#allocation8 + $0x380] sm:$0xff]
        %v3870 = vld [vmem:[#allocation8 + $0x388] sm:$0xff]
        %v3871 = vld [vmem:[#allocation8 + $0x390] sm:$0xff]
        %v3872 = vld [vmem:[#allocation8 + $0x398] sm:$0xff]
        %v3873 = vld [vmem:[#allocation8 + $0x3a0] sm:$0xff]
        %v3874 = vld [vmem:[#allocation8 + $0x3a8] sm:$0xff]
        %v3875 = vld [vmem:[#allocation8 + $0x3b0] sm:$0xff]
        %v3876 = vld [vmem:[#allocation8 + $0x3b8] sm:$0xff]
        %v3877 = vld [vmem:[#allocation8 + $0x3c0] sm:$0xff]
        %v3878 = vld [vmem:[#allocation8 + $0x3c8] sm:$0xff]
        %v3879 = vld [vmem:[#allocation8 + $0x3d0] sm:$0xff]
        %v3880 = vld [vmem:[#allocation8 + $0x3d8] sm:$0xff]
        %v3881 = vld [vmem:[#allocation8 + $0x3e0] sm:$0xff]
        %v3882 = vld [vmem:[#allocation8 + $0x3e8] sm:$0xff]
        %v3883 = vld [vmem:[#allocation8 + $0x3f0] sm:$0xff]
        %v3884 = vld [vmem:[#allocation8 + $0x3f8] sm:$0xff]
        %v3885 = vld [vmem:[%s14] sm:$0x3]
        %v3887 = vlaneseq
        %v3888 = vshrl.u32 %v3887, 7
        %v3889 = vsub.s32 0, %v3888
        %v3890 = vrot.slane %v3885, %v3889
        %v3891 = vlaneseq
        %v3892 = vshrl.u32 %v3891, 7
        %v3893 = vsub.s32 1, %v3892
        %v3894 = vrot.slane %v3885, %v3893
        %v4025 = vunpack.c.l.b16 %v3757
        %v4026 = vunpack.c.h.b16 %v3757
        %v4027 = vunpack.c.l.b16 %v3758
        %v4028 = vunpack.c.h.b16 %v3758
        %v4029 = vunpack.c.l.b16 %v3759
        %v4030 = vunpack.c.h.b16 %v3759
        %v4031 = vunpack.c.l.b16 %v3760
        %v4032 = vunpack.c.h.b16 %v3760
        %v4033 = vunpack.c.l.b16 %v3761
        %v4034 = vunpack.c.h.b16 %v3761
        %v4035 = vunpack.c.l.b16 %v3762
        %v4036 = vunpack.c.h.b16 %v3762
        %v4037 = vunpack.c.l.b16 %v3763
        %v4038 = vunpack.c.h.b16 %v3763
        %v4039 = vunpack.c.l.b16 %v3764
        %v4040 = vunpack.c.h.b16 %v3764
        %v4041 = vunpack.c.l.b16 %v3765
        %v4042 = vunpack.c.h.b16 %v3765
        %v4043 = vunpack.c.l.b16 %v3766
        %v4044 = vunpack.c.h.b16 %v3766
        %v4045 = vunpack.c.l.b16 %v3767
        %v4046 = vunpack.c.h.b16 %v3767
        %v4047 = vunpack.c.l.b16 %v3768
        %v4048 = vunpack.c.h.b16 %v3768
        %v4049 = vunpack.c.l.b16 %v3769
        %v4050 = vunpack.c.h.b16 %v3769
        %v4051 = vunpack.c.l.b16 %v3770
        %v4052 = vunpack.c.h.b16 %v3770
        %v4053 = vunpack.c.l.b16 %v3771
        %v4054 = vunpack.c.h.b16 %v3771
        %v4055 = vunpack.c.l.b16 %v3772
        %v4056 = vunpack.c.h.b16 %v3772
        %v4057 = vunpack.c.l.b16 %v3773
        %v4058 = vunpack.c.h.b16 %v3773
        %v4059 = vunpack.c.l.b16 %v3774
        %v4060 = vunpack.c.h.b16 %v3774
        %v4061 = vunpack.c.l.b16 %v3775
        %v4062 = vunpack.c.h.b16 %v3775
        %v4063 = vunpack.c.l.b16 %v3776
        %v4064 = vunpack.c.h.b16 %v3776
        %v4065 = vunpack.c.l.b16 %v3777
        %v4066 = vunpack.c.h.b16 %v3777
        %v4067 = vunpack.c.l.b16 %v3778
        %v4068 = vunpack.c.h.b16 %v3778
        %v4069 = vunpack.c.l.b16 %v3779
        %v4070 = vunpack.c.h.b16 %v3779
        %v4071 = vunpack.c.l.b16 %v3780
        %v4072 = vunpack.c.h.b16 %v3780
        %v4073 = vunpack.c.l.b16 %v3781
        %v4074 = vunpack.c.h.b16 %v3781
        %v4075 = vunpack.c.l.b16 %v3782
        %v4076 = vunpack.c.h.b16 %v3782
        %v4077 = vunpack.c.l.b16 %v3783
        %v4078 = vunpack.c.h.b16 %v3783
        %v4079 = vunpack.c.l.b16 %v3784
        %v4080 = vunpack.c.h.b16 %v3784
        %v4081 = vunpack.c.l.b16 %v3785
        %v4082 = vunpack.c.h.b16 %v3785
        %v4083 = vunpack.c.l.b16 %v3786
        %v4084 = vunpack.c.h.b16 %v3786
        %v4085 = vunpack.c.l.b16 %v3787
        %v4086 = vunpack.c.h.b16 %v3787
        %v4087 = vunpack.c.l.b16 %v3788
        %v4088 = vunpack.c.h.b16 %v3788
        %v4089 = vunpack.c.l.b16 %v3789
        %v4090 = vunpack.c.h.b16 %v3789
        %v4091 = vunpack.c.l.b16 %v3790
        %v4092 = vunpack.c.h.b16 %v3790
        %v4093 = vunpack.c.l.b16 %v3791
        %v4094 = vunpack.c.h.b16 %v3791
        %v4095 = vunpack.c.l.b16 %v3792
        %v4096 = vunpack.c.h.b16 %v3792
        %v4097 = vunpack.c.l.b16 %v3793
        %v4098 = vunpack.c.h.b16 %v3793
        %v4099 = vunpack.c.l.b16 %v3794
        %v4100 = vunpack.c.h.b16 %v3794
        %v4101 = vunpack.c.l.b16 %v3795
        %v4102 = vunpack.c.h.b16 %v3795
        %v4103 = vunpack.c.l.b16 %v3796
        %v4104 = vunpack.c.h.b16 %v3796
        %v4105 = vunpack.c.l.b16 %v3797
        %v4106 = vunpack.c.h.b16 %v3797
        %v4107 = vunpack.c.l.b16 %v3798
        %v4108 = vunpack.c.h.b16 %v3798
        %v4109 = vunpack.c.l.b16 %v3799
        %v4110 = vunpack.c.h.b16 %v3799
        %v4111 = vunpack.c.l.b16 %v3800
        %v4112 = vunpack.c.h.b16 %v3800
        %v4113 = vunpack.c.l.b16 %v3801
        %v4114 = vunpack.c.h.b16 %v3801
        %v4115 = vunpack.c.l.b16 %v3802
        %v4116 = vunpack.c.h.b16 %v3802
        %v4117 = vunpack.c.l.b16 %v3803
        %v4118 = vunpack.c.h.b16 %v3803
        %v4119 = vunpack.c.l.b16 %v3804
        %v4120 = vunpack.c.h.b16 %v3804
        %v4121 = vunpack.c.l.b16 %v3805
        %v4122 = vunpack.c.h.b16 %v3805
        %v4123 = vunpack.c.l.b16 %v3806
        %v4124 = vunpack.c.h.b16 %v3806
        %v4125 = vunpack.c.l.b16 %v3807
        %v4126 = vunpack.c.h.b16 %v3807
        %v4127 = vunpack.c.l.b16 %v3808
        %v4128 = vunpack.c.h.b16 %v3808
        %v4129 = vunpack.c.l.b16 %v3809
        %v4130 = vunpack.c.h.b16 %v3809
        %v4131 = vunpack.c.l.b16 %v3810
        %v4132 = vunpack.c.h.b16 %v3810
        %v4133 = vunpack.c.l.b16 %v3811
        %v4134 = vunpack.c.h.b16 %v3811
        %v4135 = vunpack.c.l.b16 %v3812
        %v4136 = vunpack.c.h.b16 %v3812
        %v4137 = vunpack.c.l.b16 %v3813
        %v4138 = vunpack.c.h.b16 %v3813
        %v4139 = vunpack.c.l.b16 %v3814
        %v4140 = vunpack.c.h.b16 %v3814
        %v4141 = vunpack.c.l.b16 %v3815
        %v4142 = vunpack.c.h.b16 %v3815
        %v4143 = vunpack.c.l.b16 %v3816
        %v4144 = vunpack.c.h.b16 %v3816
        %v4145 = vunpack.c.l.b16 %v3817
        %v4146 = vunpack.c.h.b16 %v3817
        %v4147 = vunpack.c.l.b16 %v3818
        %v4148 = vunpack.c.h.b16 %v3818
        %v4149 = vunpack.c.l.b16 %v3819
        %v4150 = vunpack.c.h.b16 %v3819
        %v4151 = vunpack.c.l.b16 %v3820
        %v4152 = vunpack.c.h.b16 %v3820
        %v4153 = vunpack.c.l.b16 %v3821
        %v4154 = vunpack.c.h.b16 %v3821
        %v4155 = vunpack.c.l.b16 %v3822
        %v4156 = vunpack.c.h.b16 %v3822
        %v4157 = vunpack.c.l.b16 %v3823
        %v4158 = vunpack.c.h.b16 %v3823
        %v4159 = vunpack.c.l.b16 %v3824
        %v4160 = vunpack.c.h.b16 %v3824
        %v4161 = vunpack.c.l.b16 %v3825
        %v4162 = vunpack.c.h.b16 %v3825
        %v4163 = vunpack.c.l.b16 %v3826
        %v4164 = vunpack.c.h.b16 %v3826
        %v4165 = vunpack.c.l.b16 %v3827
        %v4166 = vunpack.c.h.b16 %v3827
        %v4167 = vunpack.c.l.b16 %v3828
        %v4168 = vunpack.c.h.b16 %v3828
        %v4169 = vunpack.c.l.b16 %v3829
        %v4170 = vunpack.c.h.b16 %v3829
        %v4171 = vunpack.c.l.b16 %v3830
        %v4172 = vunpack.c.h.b16 %v3830
        %v4173 = vunpack.c.l.b16 %v3831
        %v4174 = vunpack.c.h.b16 %v3831
        %v4175 = vunpack.c.l.b16 %v3832
        %v4176 = vunpack.c.h.b16 %v3832
        %v4177 = vunpack.c.l.b16 %v3833
        %v4178 = vunpack.c.h.b16 %v3833
        %v4179 = vunpack.c.l.b16 %v3834
        %v4180 = vunpack.c.h.b16 %v3834
        %v4181 = vunpack.c.l.b16 %v3835
        %v4182 = vunpack.c.h.b16 %v3835
        %v4183 = vunpack.c.l.b16 %v3836
        %v4184 = vunpack.c.h.b16 %v3836
        %v4185 = vunpack.c.l.b16 %v3837
        %v4186 = vunpack.c.h.b16 %v3837
        %v4187 = vunpack.c.l.b16 %v3838
        %v4188 = vunpack.c.h.b16 %v3838
        %v4189 = vunpack.c.l.b16 %v3839
        %v4190 = vunpack.c.h.b16 %v3839
        %v4191 = vunpack.c.l.b16 %v3840
        %v4192 = vunpack.c.h.b16 %v3840
        %v4193 = vunpack.c.l.b16 %v3841
        %v4194 = vunpack.c.h.b16 %v3841
        %v4195 = vunpack.c.l.b16 %v3842
        %v4196 = vunpack.c.h.b16 %v3842
        %v4197 = vunpack.c.l.b16 %v3843
        %v4198 = vunpack.c.h.b16 %v3843
        %v4199 = vunpack.c.l.b16 %v3844
        %v4200 = vunpack.c.h.b16 %v3844
        %v4201 = vunpack.c.l.b16 %v3845
        %v4202 = vunpack.c.h.b16 %v3845
        %v4203 = vunpack.c.l.b16 %v3846
        %v4204 = vunpack.c.h.b16 %v3846
        %v4205 = vunpack.c.l.b16 %v3847
        %v4206 = vunpack.c.h.b16 %v3847
        %v4207 = vunpack.c.l.b16 %v3848
        %v4208 = vunpack.c.h.b16 %v3848
        %v4209 = vunpack.c.l.b16 %v3849
        %v4210 = vunpack.c.h.b16 %v3849
        %v4211 = vunpack.c.l.b16 %v3850
        %v4212 = vunpack.c.h.b16 %v3850
        %v4213 = vunpack.c.l.b16 %v3851
        %v4214 = vunpack.c.h.b16 %v3851
        %v4215 = vunpack.c.l.b16 %v3852
        %v4216 = vunpack.c.h.b16 %v3852
        %v4217 = vunpack.c.l.b16 %v3853
        %v4218 = vunpack.c.h.b16 %v3853
        %v4219 = vunpack.c.l.b16 %v3854
        %v4220 = vunpack.c.h.b16 %v3854
        %v4221 = vunpack.c.l.b16 %v3855
        %v4222 = vunpack.c.h.b16 %v3855
        %v4223 = vunpack.c.l.b16 %v3856
        %v4224 = vunpack.c.h.b16 %v3856
        %v4225 = vunpack.c.l.b16 %v3857
        %v4226 = vunpack.c.h.b16 %v3857
        %v4227 = vunpack.c.l.b16 %v3858
        %v4228 = vunpack.c.h.b16 %v3858
        %v4229 = vunpack.c.l.b16 %v3859
        %v4230 = vunpack.c.h.b16 %v3859
        %v4231 = vunpack.c.l.b16 %v3860
        %v4232 = vunpack.c.h.b16 %v3860
        %v4233 = vunpack.c.l.b16 %v3861
        %v4234 = vunpack.c.h.b16 %v3861
        %v4235 = vunpack.c.l.b16 %v3862
        %v4236 = vunpack.c.h.b16 %v3862
        %v4237 = vunpack.c.l.b16 %v3863
        %v4238 = vunpack.c.h.b16 %v3863
        %v4239 = vunpack.c.l.b16 %v3864
        %v4240 = vunpack.c.h.b16 %v3864
        %v4241 = vunpack.c.l.b16 %v3865
        %v4242 = vunpack.c.h.b16 %v3865
        %v4243 = vunpack.c.l.b16 %v3866
        %v4244 = vunpack.c.h.b16 %v3866
        %v4245 = vunpack.c.l.b16 %v3867
        %v4246 = vunpack.c.h.b16 %v3867
        %v4247 = vunpack.c.l.b16 %v3868
        %v4248 = vunpack.c.h.b16 %v3868
        %v4249 = vunpack.c.l.b16 %v3869
        %v4250 = vunpack.c.h.b16 %v3869
        %v4251 = vunpack.c.l.b16 %v3870
        %v4252 = vunpack.c.h.b16 %v3870
        %v4253 = vunpack.c.l.b16 %v3871
        %v4254 = vunpack.c.h.b16 %v3871
        %v4255 = vunpack.c.l.b16 %v3872
        %v4256 = vunpack.c.h.b16 %v3872
        %v4257 = vunpack.c.l.b16 %v3873
        %v4258 = vunpack.c.h.b16 %v3873
        %v4259 = vunpack.c.l.b16 %v3874
        %v4260 = vunpack.c.h.b16 %v3874
        %v4261 = vunpack.c.l.b16 %v3875
        %v4262 = vunpack.c.h.b16 %v3875
        %v4263 = vunpack.c.l.b16 %v3876
        %v4264 = vunpack.c.h.b16 %v3876
        %v4265 = vunpack.c.l.b16 %v3877
        %v4266 = vunpack.c.h.b16 %v3877
        %v4267 = vunpack.c.l.b16 %v3878
        %v4268 = vunpack.c.h.b16 %v3878
        %v4269 = vunpack.c.l.b16 %v3879
        %v4270 = vunpack.c.h.b16 %v3879
        %v4271 = vunpack.c.l.b16 %v3880
        %v4272 = vunpack.c.h.b16 %v3880
        %v4273 = vunpack.c.l.b16 %v3881
        %v4274 = vunpack.c.h.b16 %v3881
        %v4275 = vunpack.c.l.b16 %v3882
        %v4276 = vunpack.c.h.b16 %v3882
        %v4277 = vunpack.c.l.b16 %v3883
        %v4278 = vunpack.c.h.b16 %v3883
        %v4279 = vunpack.c.l.b16 %v3884
        %v4280 = vunpack.c.h.b16 %v3884
        %v4281 = vpack.c.b16 %v4027, %v4025
        %v4282 = vpack.c.b16 %v4028, %v4026
        %v4283 = vpack.c.b16 %v4031, %v4029
        %v4284 = vpack.c.b16 %v4032, %v4030
        %v4285 = vpack.c.b16 %v4035, %v4033
        %v4286 = vpack.c.b16 %v4036, %v4034
        %v4287 = vpack.c.b16 %v4039, %v4037
        %v4288 = vpack.c.b16 %v4040, %v4038
        %v4289 = vpack.c.b16 %v4043, %v4041
        %v4290 = vpack.c.b16 %v4044, %v4042
        %v4291 = vpack.c.b16 %v4047, %v4045
        %v4292 = vpack.c.b16 %v4048, %v4046
        %v4293 = vpack.c.b16 %v4051, %v4049
        %v4294 = vpack.c.b16 %v4052, %v4050
        %v4295 = vpack.c.b16 %v4055, %v4053
        %v4296 = vpack.c.b16 %v4056, %v4054
        %v4297 = vpack.c.b16 %v4059, %v4057
        %v4298 = vpack.c.b16 %v4060, %v4058
        %v4299 = vpack.c.b16 %v4063, %v4061
        %v4300 = vpack.c.b16 %v4064, %v4062
        %v4301 = vpack.c.b16 %v4067, %v4065
        %v4302 = vpack.c.b16 %v4068, %v4066
        %v4303 = vpack.c.b16 %v4071, %v4069
        %v4304 = vpack.c.b16 %v4072, %v4070
        %v4305 = vpack.c.b16 %v4075, %v4073
        %v4306 = vpack.c.b16 %v4076, %v4074
        %v4307 = vpack.c.b16 %v4079, %v4077
        %v4308 = vpack.c.b16 %v4080, %v4078
        %v4309 = vpack.c.b16 %v4083, %v4081
        %v4310 = vpack.c.b16 %v4084, %v4082
        %v4311 = vpack.c.b16 %v4087, %v4085
        %v4312 = vpack.c.b16 %v4088, %v4086
        %v4313 = vpack.c.b16 %v4091, %v4089
        %v4314 = vpack.c.b16 %v4092, %v4090
        %v4315 = vpack.c.b16 %v4095, %v4093
        %v4316 = vpack.c.b16 %v4096, %v4094
        %v4317 = vpack.c.b16 %v4099, %v4097
        %v4318 = vpack.c.b16 %v4100, %v4098
        %v4319 = vpack.c.b16 %v4103, %v4101
        %v4320 = vpack.c.b16 %v4104, %v4102
        %v4321 = vpack.c.b16 %v4107, %v4105
        %v4322 = vpack.c.b16 %v4108, %v4106
        %v4323 = vpack.c.b16 %v4111, %v4109
        %v4324 = vpack.c.b16 %v4112, %v4110
        %v4325 = vpack.c.b16 %v4115, %v4113
        %v4326 = vpack.c.b16 %v4116, %v4114
        %v4327 = vpack.c.b16 %v4119, %v4117
        %v4328 = vpack.c.b16 %v4120, %v4118
        %v4329 = vpack.c.b16 %v4123, %v4121
        %v4330 = vpack.c.b16 %v4124, %v4122
        %v4331 = vpack.c.b16 %v4127, %v4125
        %v4332 = vpack.c.b16 %v4128, %v4126
        %v4333 = vpack.c.b16 %v4131, %v4129
        %v4334 = vpack.c.b16 %v4132, %v4130
        %v4335 = vpack.c.b16 %v4135, %v4133
        %v4336 = vpack.c.b16 %v4136, %v4134
        %v4337 = vpack.c.b16 %v4139, %v4137
        %v4338 = vpack.c.b16 %v4140, %v4138
        %v4339 = vpack.c.b16 %v4143, %v4141
        %v4340 = vpack.c.b16 %v4144, %v4142
        %v4341 = vpack.c.b16 %v4147, %v4145
        %v4342 = vpack.c.b16 %v4148, %v4146
        %v4343 = vpack.c.b16 %v4151, %v4149
        %v4344 = vpack.c.b16 %v4152, %v4150
        %v4345 = vpack.c.b16 %v4155, %v4153
        %v4346 = vpack.c.b16 %v4156, %v4154
        %v4347 = vpack.c.b16 %v4159, %v4157
        %v4348 = vpack.c.b16 %v4160, %v4158
        %v4349 = vpack.c.b16 %v4163, %v4161
        %v4350 = vpack.c.b16 %v4164, %v4162
        %v4351 = vpack.c.b16 %v4167, %v4165
        %v4352 = vpack.c.b16 %v4168, %v4166
        %v4353 = vpack.c.b16 %v4171, %v4169
        %v4354 = vpack.c.b16 %v4172, %v4170
        %v4355 = vpack.c.b16 %v4175, %v4173
        %v4356 = vpack.c.b16 %v4176, %v4174
        %v4357 = vpack.c.b16 %v4179, %v4177
        %v4358 = vpack.c.b16 %v4180, %v4178
        %v4359 = vpack.c.b16 %v4183, %v4181
        %v4360 = vpack.c.b16 %v4184, %v4182
        %v4361 = vpack.c.b16 %v4187, %v4185
        %v4362 = vpack.c.b16 %v4188, %v4186
        %v4363 = vpack.c.b16 %v4191, %v4189
        %v4364 = vpack.c.b16 %v4192, %v4190
        %v4365 = vpack.c.b16 %v4195, %v4193
        %v4366 = vpack.c.b16 %v4196, %v4194
        %v4367 = vpack.c.b16 %v4199, %v4197
        %v4368 = vpack.c.b16 %v4200, %v4198
        %v4369 = vpack.c.b16 %v4203, %v4201
        %v4370 = vpack.c.b16 %v4204, %v4202
        %v4371 = vpack.c.b16 %v4207, %v4205
        %v4372 = vpack.c.b16 %v4208, %v4206
        %v4373 = vpack.c.b16 %v4211, %v4209
        %v4374 = vpack.c.b16 %v4212, %v4210
        %v4375 = vpack.c.b16 %v4215, %v4213
        %v4376 = vpack.c.b16 %v4216, %v4214
        %v4377 = vpack.c.b16 %v4219, %v4217
        %v4378 = vpack.c.b16 %v4220, %v4218
        %v4379 = vpack.c.b16 %v4223, %v4221
        %v4380 = vpack.c.b16 %v4224, %v4222
        %v4381 = vpack.c.b16 %v4227, %v4225
        %v4382 = vpack.c.b16 %v4228, %v4226
        %v4383 = vpack.c.b16 %v4231, %v4229
        %v4384 = vpack.c.b16 %v4232, %v4230
        %v4385 = vpack.c.b16 %v4235, %v4233
        %v4386 = vpack.c.b16 %v4236, %v4234
        %v4387 = vpack.c.b16 %v4239, %v4237
        %v4388 = vpack.c.b16 %v4240, %v4238
        %v4389 = vpack.c.b16 %v4243, %v4241
        %v4390 = vpack.c.b16 %v4244, %v4242
        %v4391 = vpack.c.b16 %v4247, %v4245
        %v4392 = vpack.c.b16 %v4248, %v4246
        %v4393 = vpack.c.b16 %v4251, %v4249
        %v4394 = vpack.c.b16 %v4252, %v4250
        %v4395 = vpack.c.b16 %v4255, %v4253
        %v4396 = vpack.c.b16 %v4256, %v4254
        %v4397 = vpack.c.b16 %v4259, %v4257
        %v4398 = vpack.c.b16 %v4260, %v4258
        %v4399 = vpack.c.b16 %v4263, %v4261
        %v4400 = vpack.c.b16 %v4264, %v4262
        %v4401 = vpack.c.b16 %v4267, %v4265
        %v4402 = vpack.c.b16 %v4268, %v4266
        %v4403 = vpack.c.b16 %v4271, %v4269
        %v4404 = vpack.c.b16 %v4272, %v4270
        %v4405 = vpack.c.b16 %v4275, %v4273
        %v4406 = vpack.c.b16 %v4276, %v4274
        %v4407 = vpack.c.b16 %v4279, %v4277
        %v4408 = vpack.c.b16 %v4280, %v4278
        %4537 = vmatprep.subr.bf16.mxu0 %v4296
        %4538 = vmatpush1.bf16.msra.mxu0 %v4295
        %4539 = vmatprep.subr.bf16.mxu0 %v4294
        %4540 = vmatpush1.bf16.msra.mxu0 %v4293
        %4541 = vmatprep.subr.bf16.mxu0 %v4292
        %4542 = vmatpush1.bf16.msra.mxu0 %v4291
        %4543 = vmatprep.subr.bf16.mxu0 %v4290
        %4544 = vmatpush1.bf16.msra.mxu0 %v4289
        %4545 = vmatprep.subr.bf16.mxu0 %v4288
        %4546 = vmatpush1.bf16.msra.mxu0 %v4287
        %4547 = vmatprep.subr.bf16.mxu0 %v4286
        %4548 = vmatpush1.bf16.msra.mxu0 %v4285
        %4549 = vmatprep.subr.bf16.mxu0 %v4284
        %4550 = vmatpush1.bf16.msra.mxu0 %v4283
        %4551 = vmatprep.subr.bf16.mxu0 %v4282
        %4552 = vmatpush1.bf16.msra.mxu0 %v4281
        %4553 = vmatprep.subr.bf16.mxu0 %v4312
        %4554 = vmatpush2.bf16.msra.mxu0 %v4311
        %4555 = vmatprep.subr.bf16.mxu0 %v4310
        %4556 = vmatpush2.bf16.msra.mxu0 %v4309
        %4557 = vmatprep.subr.bf16.mxu0 %v4308
        %4558 = vmatpush2.bf16.msra.mxu0 %v4307
        %4559 = vmatprep.subr.bf16.mxu0 %v4306
        %4560 = vmatpush2.bf16.msra.mxu0 %v4305
        %4561 = vmatprep.subr.bf16.mxu0 %v4304
        %4562 = vmatpush2.bf16.msra.mxu0 %v4303
        %4563 = vmatprep.subr.bf16.mxu0 %v4302
        %4564 = vmatpush2.bf16.msra.mxu0 %v4301
        %4565 = vmatprep.subr.bf16.mxu0 %v4300
        %4566 = vmatpush2.bf16.msra.mxu0 %v4299
        %4567 = vmatprep.subr.bf16.mxu0 %v4298
        %4568 = vmatpush2.bf16.msra.mxu0 %v4297
        %4569 = vmatprep.mubr.bf16.mxu0 %v3750
        %4570 = vmatmul.mubr.bf16.gmra.mxu0 %v3749
        %v4571 = vpop.f32.mrf.mxu0
        %v4572 = vadd.f32 %v3890, %v4571
        %v4573 = vpop.f32.mrf.mxu0
        %v4574 = vadd.f32 %v3894, %v4573
        %v4575 = vpop.f32.mrf.mxu0
        %v4576 = vpop.f32.mrf.mxu0
        %4577 = vdwg.mxu0
        %4578 = vmatprep.subr.bf16.mxu0 %v4328
        %4579 = vmatpush1.bf16.msra.mxu0 %v4327
        %4580 = vmatprep.subr.bf16.mxu0 %v4326
        %4581 = vmatpush1.bf16.msra.mxu0 %v4325
        %4582 = vmatprep.subr.bf16.mxu0 %v4324
        %4583 = vmatpush1.bf16.msra.mxu0 %v4323
        %4584 = vmatprep.subr.bf16.mxu0 %v4322
        %4585 = vmatpush1.bf16.msra.mxu0 %v4321
        %4586 = vmatprep.subr.bf16.mxu0 %v4320
        %4587 = vmatpush1.bf16.msra.mxu0 %v4319
        %4588 = vmatprep.subr.bf16.mxu0 %v4318
        %4589 = vmatpush1.bf16.msra.mxu0 %v4317
        %4590 = vmatprep.subr.bf16.mxu0 %v4316
        %4591 = vmatpush1.bf16.msra.mxu0 %v4315
        %4592 = vmatprep.subr.bf16.mxu0 %v4314
        %4593 = vmatpush1.bf16.msra.mxu0 %v4313
        %4594 = vmatprep.subr.bf16.mxu0 %v4344
        %4595 = vmatpush2.bf16.msra.mxu0 %v4343
        %4596 = vmatprep.subr.bf16.mxu0 %v4342
        %4597 = vmatpush2.bf16.msra.mxu0 %v4341
        %4598 = vmatprep.subr.bf16.mxu0 %v4340
        %4599 = vmatpush2.bf16.msra.mxu0 %v4339
        %4600 = vmatprep.subr.bf16.mxu0 %v4338
        %4601 = vmatpush2.bf16.msra.mxu0 %v4337
        %4602 = vmatprep.subr.bf16.mxu0 %v4336
        %4603 = vmatpush2.bf16.msra.mxu0 %v4335
        %4604 = vmatprep.subr.bf16.mxu0 %v4334
        %4605 = vmatpush2.bf16.msra.mxu0 %v4333
        %4606 = vmatprep.subr.bf16.mxu0 %v4332
        %4607 = vmatpush2.bf16.msra.mxu0 %v4331
        %4608 = vmatprep.subr.bf16.mxu0 %v4330
        %4609 = vmatpush2.bf16.msra.mxu0 %v4329
        %4610 = vmatprep.mubr.bf16.mxu0 %v3752
        %4611 = vmatmul.mubr.bf16.gmra.mxu0 %v3751
        %v4612 = vpop.f32.mrf.mxu0
        %v4613 = vadd.f32 %v4572, %v4612
        %v4614 = vpop.f32.mrf.mxu0
        %v4615 = vadd.f32 %v4574, %v4614
        %v4616 = vpop.f32.mrf.mxu0
        %v4617 = vpop.f32.mrf.mxu0
        %4618 = vdwg.mxu0
        %4619 = vmatprep.subr.bf16.mxu0 %v4360
        %4620 = vmatpush1.bf16.msra.mxu0 %v4359
        %4621 = vmatprep.subr.bf16.mxu0 %v4358
        %4622 = vmatpush1.bf16.msra.mxu0 %v4357
        %4623 = vmatprep.subr.bf16.mxu0 %v4356
        %4624 = vmatpush1.bf16.msra.mxu0 %v4355
        %4625 = vmatprep.subr.bf16.mxu0 %v4354
        %4626 = vmatpush1.bf16.msra.mxu0 %v4353
        %4627 = vmatprep.subr.bf16.mxu0 %v4352
        %4628 = vmatpush1.bf16.msra.mxu0 %v4351
        %4629 = vmatprep.subr.bf16.mxu0 %v4350
        %4630 = vmatpush1.bf16.msra.mxu0 %v4349
        %4631 = vmatprep.subr.bf16.mxu0 %v4348
        %4632 = vmatpush1.bf16.msra.mxu0 %v4347
        %4633 = vmatprep.subr.bf16.mxu0 %v4346
        %4634 = vmatpush1.bf16.msra.mxu0 %v4345
        %4635 = vmatprep.subr.bf16.mxu0 %v4376
        %4636 = vmatpush2.bf16.msra.mxu0 %v4375
        %4637 = vmatprep.subr.bf16.mxu0 %v4374
        %4638 = vmatpush2.bf16.msra.mxu0 %v4373
        %4639 = vmatprep.subr.bf16.mxu0 %v4372
        %4640 = vmatpush2.bf16.msra.mxu0 %v4371
        %4641 = vmatprep.subr.bf16.mxu0 %v4370
        %4642 = vmatpush2.bf16.msra.mxu0 %v4369
        %4643 = vmatprep.subr.bf16.mxu0 %v4368
        %4644 = vmatpush2.bf16.msra.mxu0 %v4367
        %4645 = vmatprep.subr.bf16.mxu0 %v4366
        %4646 = vmatpush2.bf16.msra.mxu0 %v4365
        %4647 = vmatprep.subr.bf16.mxu0 %v4364
        %4648 = vmatpush2.bf16.msra.mxu0 %v4363
        %4649 = vmatprep.subr.bf16.mxu0 %v4362
        %4650 = vmatpush2.bf16.msra.mxu0 %v4361
        %4651 = vmatprep.mubr.bf16.mxu0 %v3754
        %4652 = vmatmul.mubr.bf16.gmra.mxu0 %v3753
        %v4653 = vpop.f32.mrf.mxu0
        %v4654 = vadd.f32 %v4613, %v4653
        %v4655 = vpop.f32.mrf.mxu0
        %v4656 = vadd.f32 %v4615, %v4655
        %v4657 = vpop.f32.mrf.mxu0
        %v4658 = vpop.f32.mrf.mxu0
        %4659 = vdwg.mxu0
        %4660 = vmatprep.subr.bf16.mxu0 %v4392
        %4661 = vmatpush1.bf16.msra.mxu0 %v4391
        %4662 = vmatprep.subr.bf16.mxu0 %v4390
        %4663 = vmatpush1.bf16.msra.mxu0 %v4389
        %4664 = vmatprep.subr.bf16.mxu0 %v4388
        %4665 = vmatpush1.bf16.msra.mxu0 %v4387
        %4666 = vmatprep.subr.bf16.mxu0 %v4386
        %4667 = vmatpush1.bf16.msra.mxu0 %v4385
        %4668 = vmatprep.subr.bf16.mxu0 %v4384
        %4669 = vmatpush1.bf16.msra.mxu0 %v4383
        %4670 = vmatprep.subr.bf16.mxu0 %v4382
        %4671 = vmatpush1.bf16.msra.mxu0 %v4381
        %4672 = vmatprep.subr.bf16.mxu0 %v4380
        %4673 = vmatpush1.bf16.msra.mxu0 %v4379
        %4674 = vmatprep.subr.bf16.mxu0 %v4378
        %4675 = vmatpush1.bf16.msra.mxu0 %v4377
        %4676 = vmatprep.subr.bf16.mxu0 %v4408
        %4677 = vmatpush2.bf16.msra.mxu0 %v4407
        %4678 = vmatprep.subr.bf16.mxu0 %v4406
        %4679 = vmatpush2.bf16.msra.mxu0 %v4405
        %4680 = vmatprep.subr.bf16.mxu0 %v4404
        %4681 = vmatpush2.bf16.msra.mxu0 %v4403
        %4682 = vmatprep.subr.bf16.mxu0 %v4402
        %4683 = vmatpush2.bf16.msra.mxu0 %v4401
        %4684 = vmatprep.subr.bf16.mxu0 %v4400
        %4685 = vmatpush2.bf16.msra.mxu0 %v4399
        %4686 = vmatprep.subr.bf16.mxu0 %v4398
        %4687 = vmatpush2.bf16.msra.mxu0 %v4397
        %4688 = vmatprep.subr.bf16.mxu0 %v4396
        %4689 = vmatpush2.bf16.msra.mxu0 %v4395
        %4690 = vmatprep.subr.bf16.mxu0 %v4394
        %4691 = vmatpush2.bf16.msra.mxu0 %v4393
        %4692 = vmatprep.mubr.bf16.mxu0 %v3756
        %4693 = vmatmul.mubr.bf16.gmra.mxu0 %v3755
        %v4694 = vpop.f32.mrf.mxu0
        %v4695 = vadd.f32 %v4654, %v4694
        %v4696 = vpop.f32.mrf.mxu0
        %v4697 = vadd.f32 %v4656, %v4696
        %v4698 = vpop.f32.mrf.mxu0
        %v4699 = vpop.f32.mrf.mxu0
        %4700 = vdwg.mxu0
        %v4701 = vmul.f32 %v4695, 0.2
        %v4702 = vmul.f32 %v4697, 0.2
        %v4703 = vmax.f32 %v4695, %v4701
        %v4704 = vmax.f32 %v4697, %v4702
        %4705 = vst [vmem:[%s659] sm:$0xff] %v4703
        %4706 = vst [vmem:[%s659 + $0x8] sm:$0xff] %v4704
        %v4707 = vpack.c.bf16 %v4703, %v4703
        %v4708 = vpack.c.bf16 %v4704, %v4704
        %v4709 = vld [vmem:[#allocation10] sm:$0xf]
        %v4710 = vld [vmem:[#allocation10 + $0x4] sm:$0xf]
        %v4711 = vld [vmem:[#allocation10 + $0x8] sm:$0xf]
        %v4712 = vld [vmem:[#allocation10 + $0xc] sm:$0xf]
        %v4713 = vld [vmem:[#allocation10 + $0x10] sm:$0xf]
        %v4714 = vld [vmem:[#allocation10 + $0x14] sm:$0xf]
        %v4715 = vld [vmem:[#allocation10 + $0x18] sm:$0xf]
        %v4716 = vld [vmem:[#allocation10 + $0x1c] sm:$0xf]
        %v4717 = vld [vmem:[#allocation10 + $0x20] sm:$0xf]
        %v4718 = vld [vmem:[#allocation10 + $0x24] sm:$0xf]
        %v4719 = vld [vmem:[#allocation10 + $0x28] sm:$0xf]
        %v4720 = vld [vmem:[#allocation10 + $0x2c] sm:$0xf]
        %v4721 = vld [vmem:[#allocation10 + $0x30] sm:$0xf]
        %v4722 = vld [vmem:[#allocation10 + $0x34] sm:$0xf]
        %v4723 = vld [vmem:[#allocation10 + $0x38] sm:$0xf]
        %v4724 = vld [vmem:[#allocation10 + $0x3c] sm:$0xf]
        %v4725 = vld [vmem:[#allocation10 + $0x40] sm:$0xf]
        %v4726 = vld [vmem:[#allocation10 + $0x44] sm:$0xf]
        %v4727 = vld [vmem:[#allocation10 + $0x48] sm:$0xf]
        %v4728 = vld [vmem:[#allocation10 + $0x4c] sm:$0xf]
        %v4729 = vld [vmem:[#allocation10 + $0x50] sm:$0xf]
        %v4730 = vld [vmem:[#allocation10 + $0x54] sm:$0xf]
        %v4731 = vld [vmem:[#allocation10 + $0x58] sm:$0xf]
        %v4732 = vld [vmem:[#allocation10 + $0x5c] sm:$0xf]
        %v4733 = vld [vmem:[#allocation10 + $0x60] sm:$0xf]
        %v4734 = vld [vmem:[#allocation10 + $0x64] sm:$0xf]
        %v4735 = vld [vmem:[#allocation10 + $0x68] sm:$0xf]
        %v4736 = vld [vmem:[#allocation10 + $0x6c] sm:$0xf]
        %v4737 = vld [vmem:[#allocation10 + $0x70] sm:$0xf]
        %v4738 = vld [vmem:[#allocation10 + $0x74] sm:$0xf]
        %v4739 = vld [vmem:[#allocation10 + $0x78] sm:$0xf]
        %v4740 = vld [vmem:[#allocation10 + $0x7c] sm:$0xf]
        %v4741 = vld [vmem:[%s16] sm:$0x1]
        %v4743 = vlaneseq
        %v4744 = vshrl.u32 %v4743, 7
        %v4745 = vsub.s32 0, %v4744
        %v4746 = vrot.slane %v4741, %v4745
        %v4780 = vunpack.c.l.b16 %v4709
        %v4781 = vunpack.c.l.b16 %v4710
        %v4782 = vunpack.c.l.b16 %v4711
        %v4783 = vunpack.c.l.b16 %v4712
        %v4784 = vunpack.c.l.b16 %v4713
        %v4785 = vunpack.c.l.b16 %v4714
        %v4786 = vunpack.c.l.b16 %v4715
        %v4787 = vunpack.c.l.b16 %v4716
        %v4788 = vunpack.c.l.b16 %v4717
        %v4789 = vunpack.c.l.b16 %v4718
        %v4790 = vunpack.c.l.b16 %v4719
        %v4791 = vunpack.c.l.b16 %v4720
        %v4792 = vunpack.c.l.b16 %v4721
        %v4793 = vunpack.c.l.b16 %v4722
        %v4794 = vunpack.c.l.b16 %v4723
        %v4795 = vunpack.c.l.b16 %v4724
        %v4796 = vunpack.c.l.b16 %v4725
        %v4797 = vunpack.c.l.b16 %v4726
        %v4798 = vunpack.c.l.b16 %v4727
        %v4799 = vunpack.c.l.b16 %v4728
        %v4800 = vunpack.c.l.b16 %v4729
        %v4801 = vunpack.c.l.b16 %v4730
        %v4802 = vunpack.c.l.b16 %v4731
        %v4803 = vunpack.c.l.b16 %v4732
        %v4804 = vunpack.c.l.b16 %v4733
        %v4805 = vunpack.c.l.b16 %v4734
        %v4806 = vunpack.c.l.b16 %v4735
        %v4807 = vunpack.c.l.b16 %v4736
        %v4808 = vunpack.c.l.b16 %v4737
        %v4809 = vunpack.c.l.b16 %v4738
        %v4810 = vunpack.c.l.b16 %v4739
        %v4811 = vunpack.c.l.b16 %v4740
        %v4812 = vpack.c.b16 %v4781, %v4780
        %v4813 = vpack.c.b16 %v4783, %v4782
        %v4814 = vpack.c.b16 %v4785, %v4784
        %v4815 = vpack.c.b16 %v4787, %v4786
        %v4816 = vpack.c.b16 %v4789, %v4788
        %v4817 = vpack.c.b16 %v4791, %v4790
        %v4818 = vpack.c.b16 %v4793, %v4792
        %v4819 = vpack.c.b16 %v4795, %v4794
        %v4820 = vpack.c.b16 %v4797, %v4796
        %v4821 = vpack.c.b16 %v4799, %v4798
        %v4822 = vpack.c.b16 %v4801, %v4800
        %v4823 = vpack.c.b16 %v4803, %v4802
        %v4824 = vpack.c.b16 %v4805, %v4804
        %v4825 = vpack.c.b16 %v4807, %v4806
        %v4826 = vpack.c.b16 %v4809, %v4808
        %v4827 = vpack.c.b16 %v4811, %v4810
        %4844 = vmatprep.subr.bf16.mxu0 0
        %4845 = vmatpush1.bf16.msra.mxu0 %v4819
        %4846 = vmatprep.subr.bf16.mxu0 0
        %4847 = vmatpush1.bf16.msra.mxu0 %v4818
        %4848 = vmatprep.subr.bf16.mxu0 0
        %4849 = vmatpush1.bf16.msra.mxu0 %v4817
        %4850 = vmatprep.subr.bf16.mxu0 0
        %4851 = vmatpush1.bf16.msra.mxu0 %v4816
        %4852 = vmatprep.subr.bf16.mxu0 0
        %4853 = vmatpush1.bf16.msra.mxu0 %v4815
        %4854 = vmatprep.subr.bf16.mxu0 0
        %4855 = vmatpush1.bf16.msra.mxu0 %v4814
        %4856 = vmatprep.subr.bf16.mxu0 0
        %4857 = vmatpush1.bf16.msra.mxu0 %v4813
        %4858 = vmatprep.subr.bf16.mxu0 0
        %4859 = vmatpush1.bf16.msra.mxu0 %v4812
        %4860 = vmatprep.subr.bf16.mxu0 0
        %4861 = vmatpush2.bf16.msra.mxu0 %v4827
        %4862 = vmatprep.subr.bf16.mxu0 0
        %4863 = vmatpush2.bf16.msra.mxu0 %v4826
        %4864 = vmatprep.subr.bf16.mxu0 0
        %4865 = vmatpush2.bf16.msra.mxu0 %v4825
        %4866 = vmatprep.subr.bf16.mxu0 0
        %4867 = vmatpush2.bf16.msra.mxu0 %v4824
        %4868 = vmatprep.subr.bf16.mxu0 0
        %4869 = vmatpush2.bf16.msra.mxu0 %v4823
        %4870 = vmatprep.subr.bf16.mxu0 0
        %4871 = vmatpush2.bf16.msra.mxu0 %v4822
        %4872 = vmatprep.subr.bf16.mxu0 0
        %4873 = vmatpush2.bf16.msra.mxu0 %v4821
        %4874 = vmatprep.subr.bf16.mxu0 0
        %4875 = vmatpush2.bf16.msra.mxu0 %v4820
        %4876 = vmatprep.mubr.bf16.mxu0 %v4708
        %4877 = vmatmul.mubr.bf16.gmra.mxu0 %v4707
        %v4878 = vpop.f32.mrf.mxu0
        %v4879 = vadd.f32 %v4746, %v4878
        %v4880 = vpop.f32.mrf.mxu0
        %v4881 = vpop.f32.mrf.mxu0
        %v4882 = vpop.f32.mrf.mxu0
        %4883 = vdwg.mxu0
        %4884 = vst [vmem:[%s666] sm:$0xff] %v4879
        %s4885 = sand.u32 %s414, 1
        %s4886 = scalar_lea.sflag [#allocation4], %s4885
        %s4887 = sand.u32 %s414, 1
        %s4888 = smul.addr %s4887, 16
        %s4889 = scalar_lea.vmem [#allocation11], %s4888
        %s4890 = sand.u32 %s440, 1
        %s4891 = scalar_lea.sflag [#allocation13], %s4890
        %s4892 = sand.u32 %s440, 1
        %s4893 = smul.addr %s4892, 8
        %s4894 = scalar_lea.vmem [#allocation12], %s4893
        // Predicated region
        $region109: #{tpu_custom_call.1} parent=87 // pred_check
          %p4895 = pneg %p424
        $region110: #{tpu_custom_call.1} parent=87 // pred_check_branch
          %4897 = sbr.rel (%p4895) target = $region112
        $region111: #{tpu_custom_call.1} parent=87 // pred_region
          %s4899 = ssub.s32 256, 256
          %4900 = vsyncadd %s4886, %s4899
          %s4901 = smul.addr %s39, 2
          %s4902 = smul.addr %s4901, 128
          %s4903 = scalar_lea.hbm %s17, %s4902
          %s4905 = sshll.u32 %s4889, 4
          %s4906 = int_to_ptr.vmem [resolvable:$true] %s4905
          %4908 = dma.vmem_to_hbm [thread:$0]  %s4906, 256, %s4903, %s4886
        $region112: #{tpu_custom_call.1} parent=87 // pred_fallthru
          _
        // Predicated region
        $region113: #{tpu_custom_call.1} parent=87 // pred_check
          %p4909 = pneg %p450
        $region114: #{tpu_custom_call.1} parent=87 // pred_check_branch
          %4911 = sbr.rel (%p4909) target = $region116
        $region115: #{tpu_custom_call.1} parent=87 // pred_region
          %s4913 = ssub.s32 128, 128
          %4914 = vsyncadd %s4891, %s4913
          %s4915 = smul.addr %s39, 128
          %s4916 = scalar_lea.hbm %s18, %s4915
          %s4918 = sshll.u32 %s4894, 4
          %s4919 = int_to_ptr.vmem [resolvable:$true] %s4918
          %4921 = dma.vmem_to_hbm [thread:$0]  %s4919, 128, %s4916, %s4891
        $region116: #{tpu_custom_call.1} parent=87 // pred_fallthru
          _
      $region88: #{tpu_custom_call.1} parent=5 // pred_fallthru
        _
      %p4922 = scmp.le.s32.totalorder 2, %s34
      // Predicated region
      $region117: #{tpu_custom_call.1} parent=5 // pred_check
        %p4923 = pneg %p4922
      $region118: #{tpu_custom_call.1} parent=5 // pred_check_branch
        %4925 = sbr.rel (%p4923) target = $region120
      $region119: #{tpu_custom_call.1} parent=5 // pred_region
        %s4926 = ssub.s32 %s34, 2
        // Predicated region
        $region121: #{tpu_custom_call.1} parent=119 // pred_check
          %p4927 = pneg %p430
        $region122: #{tpu_custom_call.1} parent=119 // pred_check_branch
          %4929 = sbr.rel (%p4927) target = $region124
        $region123: #{tpu_custom_call.1} parent=119 // pred_region
          %s4930 = sand.u32 %s415, 1
          %s4931 = scalar_lea.sflag [#allocation4], %s4930
          %s4932 = sand.u32 %s415, 1
          %s4933 = smul.addr %s4932, 16
          %s4934 = scalar_lea.vmem [#allocation11], %s4933
          %4935 = dma.done %s4931, 256
        $region124: #{tpu_custom_call.1} parent=119 // pred_fallthru
          _
        // Predicated region
        $region125: #{tpu_custom_call.1} parent=119 // pred_check
          %p4936 = pneg %p456
        $region126: #{tpu_custom_call.1} parent=119 // pred_check_branch
          %4938 = sbr.rel (%p4936) target = $region128
        $region127: #{tpu_custom_call.1} parent=119 // pred_region
          %s4939 = sand.u32 %s441, 1
          %s4940 = scalar_lea.sflag [#allocation13], %s4939
          %s4941 = sand.u32 %s441, 1
          %s4942 = smul.addr %s4941, 8
          %s4943 = scalar_lea.vmem [#allocation12], %s4942
          %4944 = dma.done %s4940, 128
        $region128: #{tpu_custom_call.1} parent=119 // pred_fallthru
          _
      $region120: #{tpu_custom_call.1} parent=5 // pred_fallthru
        _
    $region6: #{tpu_custom_call.1} parent=1 // loop_footer
      %s38 = sadd.s32 1, %s34
    $region7: #{tpu_custom_call.1} parent=1 // loop_footer_branch
      %33 = sbr.rel target = $region3
    $region8: #{tpu_custom_call.1} parent=1 // loop_exit
      _
    %4945 = vsyncpa [#allocation3], 1
    %s4946 = scalar_lea.sflag [#allocation3], 1
    %4947 = vsyncpa %s4946, 1
    %4948 = vsyncpa [#allocation6], 1
    %4949 = vsyncpa [#allocation9], 1
    %4950 = vsyncpa [#allocation4], 1
    %s4951 = scalar_lea.sflag [#allocation4], 1
    %4952 = vsyncpa %s4951, 1
    %4953 = vsyncpa [#allocation13], 1
    %s4954 = scalar_lea.sflag [#allocation13], 1
    %4955 = vsyncpa %s4954, 1

</llo_original>
